<compile_context>
chip_gen: v6e
topology: v6e:2x2x1
jax: 0.10.0
libtpu: 0.0.40
codegen_flags: <defaults>
</compile_context>

<pallas_src>
import functools

import jax
import jax.numpy as jnp
import numpy as np
from jax.experimental import pallas as pl
from jax.experimental.pallas import tpu as pltpu

_BN_EPS = 1e-5            # nn.BatchNorm2d default eps
_LANE = 128               # TPU lane width


def _tpu_budgets():
    """Per-generation (scoped VMEM limit bytes, target rows per conv tile)."""
    vmem_cap = None
    try:
        vmem_cap = getattr(pltpu.get_tpu_info(), "vmem_capacity_bytes", None)
    except Exception:
        vmem_cap = None
    if vmem_cap is not None and vmem_cap >= 96 * 1024 * 1024:
        # v5e / v6e: 128 MiB physical VMEM per core -> larger tiles, bigger cap.
        return 64 * 1024 * 1024, 2048
    # v7x (64 MiB per core) or unknown: stay conservative.
    return 32 * 1024 * 1024, 1024


_VMEM_LIMIT, _TARGET_ROWS = _tpu_budgets()


# ----------------------------------------------------------------------------
# small helpers
# ----------------------------------------------------------------------------
def _round_up(n, m):
    return ((n + m - 1) // m) * m


def _pad_vec(v, cpad):
    return jnp.pad(v.astype(jnp.float32), (0, cpad - v.shape[0]))


def _pad_channels(x, cpad):
    c = x.shape[-1]
    if c == cpad:
        return x
    return jnp.pad(x, ((0, 0),) * (x.ndim - 1) + ((0, cpad - c),))


def _choose_row_tile(ho, wo, target_rows):
    """Largest TH | Ho with (TH*Wo) a multiple of 16 and TH*Wo <= target."""
    divs = [d for d in range(1, ho + 1) if ho % d == 0]
    good = [d for d in divs if (d * wo) % 16 == 0]
    if not good:
        return ho                       # tiny / ragged fallback
    under = [d for d in good if d * wo <= target_rows]
    return max(under) if under else min(good)


def _largest_divisor_tile(m, max_rows):
    """Largest divisor of m <= max_rows, preferring multiples of 8."""
    best8, best = 0, 1
    i = 1
    while i * i <= m:
        if m % i == 0:
            for d in (i, m // i):
                if d <= max_rows:
                    if d % 8 == 0 and d > best8:
                        best8 = d
                    if d > best:
                        best = d
        i += 1
    return best8 if best8 else best


def _prep_weight(w_torch, cin_pad, cout_pad):
    """(Cout, Cin, KH, KW) torch layout -> (KH*KW*Cin_pad, Cout_pad) bf16."""
    cout, cin, kh, kw = w_torch.shape
    wk = jnp.transpose(w_torch, (2, 3, 1, 0)).reshape(kh * kw, cin, cout)
    wk = jnp.pad(wk, ((0, 0), (0, cin_pad - cin), (0, cout_pad - cout)))
    # Flattening (tap, cin) must match the kernel's kh-major / kw-minor /
    # channel-last concatenation order.
    return wk.reshape(kh * kw * cin_pad, cout_pad).astype(jnp.bfloat16)


def _build_phases(x_nhwc, ksize, stride, padding, cpad):
    """Split the padded NHWC input into stride*stride phases (bf16, lane-padded).

    Tap (kh, kw) of the conv reads a *contiguous* (Ho, Wo) window of phase
    (kh % stride, kw % stride) at offset (kh // stride, kw // stride), so the
    kernel never needs strided loads and no 9x im2col copy ever hits HBM.
    """
    N, H, W, C = x_nhwc.shape
    Ho = (H + 2 * padding - ksize) // stride + 1
    Wo = (W + 2 * padding - ksize) // stride + 1
    hph = Ho + (ksize - 1) // stride
    wph = Wo + (ksize - 1) // stride
    xp = jnp.pad(x_nhwc, ((0, 0), (padding, padding), (padding, padding), (0, 0)))
    phases = []
    for a in range(stride):
        for b in range(stride):
            ph = xp[:, a::stride, b::stride, :][:, :hph, :wph, :]
            ph = jnp.pad(ph, ((0, 0), (0, hph - ph.shape[1]),
                              (0, wph - ph.shape[2]), (0, cpad - C)))
            phases.append(ph.astype(jnp.bfloat16))
    return phases, Ho, Wo, hph, wph


# ----------------------------------------------------------------------------
# Kernel A: conv as ONE big-K matmul (taps merged along the contraction dim)
#           + per-tile mean-centred BN partial statistics
# ----------------------------------------------------------------------------
def _conv_stats_kernel(*refs, ks, stride, th, wo, rows):
    p_count = stride * stride
    phase_refs = refs[:p_count]
    w_ref, y_ref, st_ref = refs[p_count], refs[p_count + 1], refs[p_count + 2]

    t = pl.program_id(1)                       # row-tile index within the image

    # Gather the K*K shifted windows and merge them along channels so the MXU
    # sees a single K = ks*ks*cin_pad contraction (no VALU accumulate adds).
    taps = []
    for kh in range(ks):
        for kw in range(ks):
            ph = phase_refs[(kh % stride) * stride + (kw % stride)]
            win = ph[pl.ds(t * th + kh // stride, th),
                     pl.ds(kw // stride, wo), :]
            taps.append(win.reshape(rows, win.shape[-1]))
    lhs = taps[0] if len(taps) == 1 else jnp.concatenate(taps, axis=-1)

    acc = jnp.dot(lhs, w_ref[...], preferred_element_type=jnp.float32)

    # Pre-BN activations stored in bf16 (halves HBM traffic); statistics are
    # taken from the f32 accumulator so they stay exact.
    y_ref[...] = acc.astype(y_ref.dtype)

    s1 = jnp.sum(acc, axis=0, keepdims=True)                      # per-tile sum
    m2 = jnp.sum(jnp.square(acc - s1 * (1.0 / rows)),             # centred SSQ
                 axis=0, keepdims=True)
    st_ref[0:1, :] = s1
    st_ref[1:2, :] = m2


def _conv2d_stats(x_nhwc, w_torch, ksize, stride, padding, cin_pad, cout_pad):
    """Conv2d (bias-free) -> pre-BN output (M, Cout_pad) bf16 + partial stats."""
    N = x_nhwc.shape[0]
    phases, Ho, Wo, hph, wph = _build_phases(x_nhwc, ksize, stride, padding,
                                             cin_pad)
    wk = _prep_weight(w_torch, cin_pad, cout_pad)

    TH = _choose_row_tile(Ho, Wo, _TARGET_ROWS)
    T = Ho // TH
    rows = TH * Wo
    M = N * Ho * Wo

    kernel = functools.partial(_conv_stats_kernel, ks=ksize, stride=stride,
                               th=TH, wo=Wo, rows=rows)

    phase_spec = pl.BlockSpec((None, hph, wph, cin_pad),
                              lambda n, t: (n, 0, 0, 0))
    # Weight block is constant across the grid -> single buffer saves VMEM.
    w_spec = pl.BlockSpec((ksize * ksize * cin_pad, cout_pad),
                          lambda n, t: (0, 0),
                          pipeline_mode=pl.Buffered(1))
    y_spec = pl.BlockSpec((rows, cout_pad), lambda n, t, T=T: (n * T + t, 0))
    st_spec = pl.BlockSpec((None, None, 2, cout_pad), lambda n, t: (n, t, 0, 0))

    y, stats = pl.pallas_call(
        kernel,
        out_shape=(jax.ShapeDtypeStruct((M, cout_pad), jnp.bfloat16),
                   jax.ShapeDtypeStruct((N, T, 2, cout_pad), jnp.float32)),
        grid=(N, T),
        in_specs=[phase_spec] * len(phases) + [w_spec],
        out_specs=(y_spec, st_spec),
        compiler_params=pltpu.CompilerParams(
            # Both axes independent -> megacore can shard the tile axis (v7x).
            dimension_semantics=("parallel", "parallel"),
            vmem_limit_bytes=_VMEM_LIMIT),
    )(*phases, wk)
    return y, stats, (Ho, Wo, rows)


def _bn_scale_shift(stats, rows_per_tile, m, gamma_pad, beta_pad):
    """Merge per-tile partials (Chan formula) -> per-channel scale/shift."""
    s1 = stats[:, :, 0, :]                       # (N, T, C) per-tile sums
    m2 = stats[:, :, 1, :]                       # (N, T, C) centred SSQ
    mean = jnp.sum(s1, axis=(0, 1)) / m
    tile_mean = s1 / rows_per_tile
    between = rows_per_tile * jnp.sum(jnp.square(tile_mean - mean), axis=(0, 1))
    var = jnp.maximum((jnp.sum(m2, axis=(0, 1)) + between) / m, 0.0)
    scale = gamma_pad * jax.lax.rsqrt(var + _BN_EPS)
    shift = beta_pad - mean * scale
    return scale.reshape(1, -1), shift.reshape(1, -1)


# ----------------------------------------------------------------------------
# Kernel B: y*scale + shift  [+ residual (optionally affine)]  [+ ReLU]
# ----------------------------------------------------------------------------
def _bn_act_kernel(*refs, relu, res_mode):
    if res_mode == "affine":
        y_ref, s_ref, b_ref, r_ref, rs_ref, rb_ref, o_ref = refs
    elif res_mode == "plain":
        y_ref, s_ref, b_ref, r_ref, o_ref = refs
    else:
        y_ref, s_ref, b_ref, o_ref = refs

    out = y_ref[...].astype(jnp.float32) * s_ref[...] + b_ref[...]
    if res_mode == "affine":                            # fused shortcut BN
        out = out + r_ref[...].astype(jnp.float32) * rs_ref[...] + rb_ref[...]
    elif res_mode == "plain":                           # identity shortcut
        out = out + r_ref[...].astype(jnp.float32)
    if relu:
        out = jnp.maximum(out, 0.0)
    o_ref[...] = out.astype(o_ref.dtype)


def _bn_apply(y, scale, shift, *, relu, out_dtype,
              res=None, res_mode=None, res_scale=None, res_shift=None):
    M, C = y.shape
    # Pick the tile from the VMEM budget (pure mem-bound pass); never the
    # whole tensor.  Blocks are double-buffered by the pipeline.
    per_row = C * 2 * (y.dtype.itemsize
                       + (res.dtype.itemsize if res is not None else 0)
                       + jnp.dtype(out_dtype).itemsize)
    max_rows = max(8, (_VMEM_LIMIT // 2) // per_row)
    TM = _largest_divisor_tile(M, max_rows)

    kernel = functools.partial(_bn_act_kernel, relu=relu, res_mode=res_mode)

    row_spec = pl.BlockSpec((TM, C), lambda i: (i, 0))
    vec_spec = pl.BlockSpec((1, C), lambda i: (0, 0))
    inputs = [y, scale, shift]
    in_specs = [row_spec, vec_spec, vec_spec]
    if res is not None:
        inputs.append(res)
        in_specs.append(row_spec)
        if res_mode == "affine":
            inputs += [res_scale, res_shift]
            in_specs += [vec_spec, vec_spec]

    return pl.pallas_call(
        kernel,
        out_shape=jax.ShapeDtypeStruct((M, C), out_dtype),
        grid=(M // TM,),
        in_specs=in_specs,
        out_specs=row_spec,
        compiler_params=pltpu.CompilerParams(
            dimension_semantics=("parallel",),
            vmem_limit_bytes=_VMEM_LIMIT),
    )(*inputs)


# ----------------------------------------------------------------------------
# Full ResidualBlock forward (Pallas path)
# ----------------------------------------------------------------------------
def _residual_block_forward_nhwc(x, params, stride):
    """NHWC in -> NHWC out (no layout passes; preferred entry point)."""
    x = x.astype(jnp.float32)
    N, H, W, Cin = x.shape
    Cout = params["bn1_gamma"].shape[0]
    cin_p = _round_up(Cin, _LANE)
    cout_p = _round_up(Cout, _LANE)

    # conv1 (3x3, stride, pad 1) -> bn1 -> relu
    y1, st1, (Ho, Wo, rows1) = _conv2d_stats(x, params["conv1_w"], 3, stride, 1,
                                             cin_p, cout_p)
    M = N * Ho * Wo
    s1, b1 = _bn_scale_shift(st1, rows1, M, _pad_vec(params["bn1_gamma"], cout_p),
                             _pad_vec(params["bn1_beta"], cout_p))
    a1 = _bn_apply(y1, s1, b1, relu=True, out_dtype=jnp.bfloat16)   # feeds conv2

    # shortcut branch
    if "sc_w" in params:
        xs = x[:, ::stride, ::stride, :]     # 1x1/stride conv == subsample + matmul
        ysc, stsc, (_, _, rows_sc) = _conv2d_stats(xs, params["sc_w"], 1, 1, 0,
                                                   cin_p, cout_p)
        ssc, bsc = _bn_scale_shift(stsc, rows_sc, M,
                                   _pad_vec(params["sc_gamma"], cout_p),
                                   _pad_vec(params["sc_beta"], cout_p))
        res, res_mode, res_s, res_b = ysc, "affine", ssc, bsc   # BN folded later
    else:
        res = _pad_channels(x, cout_p).astype(jnp.bfloat16).reshape(M, cout_p)
        res_mode, res_s, res_b = "plain", None, None

    # conv2 (3x3, stride 1, pad 1) -> bn2 -> (+ shortcut) -> relu (fused epilogue)
    a1_nhwc = a1.reshape(N, Ho, Wo, cout_p)
    y2, st2, (_, _, rows2) = _conv2d_stats(a1_nhwc, params["conv2_w"], 3, 1, 1,
                                           cout_p, cout_p)
    s2, b2 = _bn_scale_shift(st2, rows2, M, _pad_vec(params["bn2_gamma"], cout_p),
                             _pad_vec(params["bn2_beta"], cout_p))
    out = _bn_apply(y2, s2, b2, relu=True, out_dtype=jnp.float32,
                    res=res, res_mode=res_mode, res_scale=res_s, res_shift=res_b)

    return out.reshape(N, Ho, Wo, cout_p)[:, :, :, :Cout]


def _residual_block_forward(x_nchw, params, stride):
    # PyTorch-interface wrapper: the NCHW<->NHWC transposes below are pure
    # layout overhead; NHWC callers should use _residual_block_forward_nhwc.
    x = jnp.transpose(x_nchw, (0, 2, 3, 1))
    out = _residual_block_forward_nhwc(x, params, stride)
    return jnp.transpose(out, (0, 3, 1, 2))


residual_block_forward = jax.jit(_residual_block_forward, static_argnums=2)


# ----------------------------------------------------------------------------
# Plain-JAX reference mirroring the module (bf16 conv inputs, f32 accumulation,
# training-mode batch-stat BatchNorm) — used for verification only.
# ----------------------------------------------------------------------------
def residual_block_reference(x_nchw, params, stride):
    x = jnp.transpose(x_nchw, (0, 2, 3, 1)).astype(jnp.float32)

    def conv(inp, w, s, p):
        return jax.lax.conv_general_dilated(
            inp.astype(jnp.bfloat16),
            jnp.transpose(w, (2, 3, 1, 0)).astype(jnp.bfloat16),
            window_strides=(s, s), padding=[(p, p), (p, p)],
            dimension_numbers=("NHWC", "HWIO", "NHWC"),
            preferred_element_type=jnp.float32)

    def bn(y, g, b):
        mean = jnp.mean(y, axis=(0, 1, 2), keepdims=True)
        var = jnp.mean(jnp.square(y - mean), axis=(0, 1, 2), keepdims=True)
        return (y - mean) * jax.lax.rsqrt(var + _BN_EPS) * g + b

    out = jnp.maximum(bn(conv(x, params["conv1_w"], stride, 1),
                         params["bn1_gamma"], params["bn1_beta"]), 0.0)
    out = bn(conv(out, params["conv2_w"], 1, 1),
             params["bn2_gamma"], params["bn2_beta"])
    if "sc_w" in params:
        res = bn(conv(x, params["sc_w"], stride, 0),
                 params["sc_gamma"], params["sc_beta"])
    else:
        res = x
    out = jnp.maximum(out + res, 0.0)
    return jnp.transpose(out, (0, 3, 1, 2))


# ----------------------------------------------------------------------------
# Parameter init (torch conv layout, BatchNorm default gamma=1 / beta=0)
# ----------------------------------------------------------------------------
def init_residual_block_params(key, in_channels, out_channels, stride):
    k1, k2, k3 = jax.random.split(key, 3)
    params = {
        "conv1_w": 0.1 * jax.random.normal(
            k1, (out_channels, in_channels, 3, 3), jnp.float32),
        "conv2_w": 0.1 * jax.random.normal(
            k2, (out_channels, out_channels, 3, 3), jnp.float32),
        "bn1_gamma": jnp.ones((out_channels,), jnp.float32),
        "bn1_beta": jnp.zeros((out_channels,), jnp.float32),
        "bn2_gamma": jnp.ones((out_channels,), jnp.float32),
        "bn2_beta": jnp.zeros((out_channels,), jnp.float32),
    }
    if stride != 1 or in_channels != out_channels:
        params["sc_w"] = 0.1 * jax.random.normal(
            k3, (out_channels, in_channels, 1, 1), jnp.float32)
        params["sc_gamma"] = jnp.ones((out_channels,), jnp.float32)
        params["sc_beta"] = jnp.zeros((out_channels,), jnp.float32)
    return params


if __name__ == "__main__":
    key = jax.random.PRNGKey(0)
    kx, kp1, kp2 = jax.random.split(key, 3)
    x = jax.random.normal(kx, (2, 4, 16, 16), jnp.float32)   # NCHW, like PyTorch

    # Case 1: identity shortcut (stride=1, in_channels == out_channels)
    params_id = init_residual_block_params(kp1, 4, 4, 1)
    out_id = jax.block_until_ready(residual_block_forward(x, params_id, 1))
    ref_id = residual_block_reference(x, params_id, 1)
    assert out_id.shape == (2, 4, 16, 16)
    # Both paths use bf16 matmul inputs with f32 accumulation; kernel path
    # additionally stores pre-BN activations / residual in bf16, so the
    # tolerance covers bf16 rounding + reduction-order differences.
    np.testing.assert_allclose(np.asarray(out_id), np.asarray(ref_id),
                               rtol=2.5e-2, atol=2.5e-2)

    # Case 2: projection shortcut (stride=2, 4 -> 8 channels)
    params_pr = init_residual_block_params(kp2, 4, 8, 2)
    out_pr = jax.block_until_ready(residual_block_forward(x, params_pr, 2))
    ref_pr = residual_block_reference(x, params_pr, 2)
    assert out_pr.shape == (2, 8, 8, 8)
    np.testing.assert_allclose(np.asarray(out_pr), np.asarray(ref_pr),
                               rtol=2.5e-2, atol=2.5e-2)

    print("KERNEL_OK")
</pallas_src>

<mosaic_0001>
module attributes {stable_mosaic.version = 11 : i64} {
  func.func @_conv_stats_kernel(%arg0: i32, %arg1: i32, %arg2: memref<1x18x18x128xbf16, #tpu.memory_space<vmem>>, %arg3: memref<1152x128xbf16, #tpu.memory_space<vmem>>, %arg4: memref<256x128xbf16, #tpu.memory_space<vmem>>, %arg5: memref<1x1x2x128xf32, #tpu.memory_space<vmem>>) attributes {dimension_semantics = [#tpu.dimension_semantics<parallel>, #tpu.dimension_semantics<parallel>], iteration_bounds = array<i64: 2, 1>, scalar_prefetch = 0 : i64, scratch_operands = 0 : i64, tpu.core_type = #tpu.core_type<tc>, window_params = [{transform_indices = @transform_0, window_bounds = array<i64: 1, 18, 18, 128>}, {pipeline_mode = #tpu.pipeline_mode<synchronous>, transform_indices = @transform_1, window_bounds = array<i64: 1152, 128>}, {transform_indices = @transform_2, window_bounds = array<i64: 256, 128>}, {transform_indices = @transform_3, window_bounds = array<i64: 1, 1, 2, 128>}]} {
    %c16_i32 = arith.constant 16 : i32
    %0 = arith.muli %arg1, %c16_i32 : i32
    %c0_i32 = arith.constant 0 : i32
    %1 = arith.addi %0, %c0_i32 : i32
    %c0 = arith.constant 0 : index
    %2 = arith.index_cast %1 : i32 to index
    %c0_0 = arith.constant 0 : index
    %c0_1 = arith.constant 0 : index
    %3 = vector.load %arg2[%c0, %2, %c0_0, %c0_1] : memref<1x18x18x128xbf16, #tpu.memory_space<vmem>>, vector<1x16x16x128xbf16>
    %4 = vector.shape_cast %3 : vector<1x16x16x128xbf16> to vector<16x16x128xbf16>
    %5 = vector.shape_cast %4 : vector<16x16x128xbf16> to vector<256x128xbf16>
    %c16_i32_2 = arith.constant 16 : i32
    %6 = arith.muli %arg1, %c16_i32_2 : i32
    %c0_i32_3 = arith.constant 0 : i32
    %7 = arith.addi %6, %c0_i32_3 : i32
    %c0_4 = arith.constant 0 : index
    %8 = arith.index_cast %7 : i32 to index
    %c1 = arith.constant 1 : index
    %c0_5 = arith.constant 0 : index
    %9 = vector.load %arg2[%c0_4, %8, %c1, %c0_5] : memref<1x18x18x128xbf16, #tpu.memory_space<vmem>>, vector<1x16x16x128xbf16>
    %10 = vector.shape_cast %9 : vector<1x16x16x128xbf16> to vector<16x16x128xbf16>
    %11 = vector.shape_cast %10 : vector<16x16x128xbf16> to vector<256x128xbf16>
    %c16_i32_6 = arith.constant 16 : i32
    %12 = arith.muli %arg1, %c16_i32_6 : i32
    %c0_i32_7 = arith.constant 0 : i32
    %13 = arith.addi %12, %c0_i32_7 : i32
    %c0_8 = arith.constant 0 : index
    %14 = arith.index_cast %13 : i32 to index
    %c2 = arith.constant 2 : index
    %c0_9 = arith.constant 0 : index
    %15 = vector.load %arg2[%c0_8, %14, %c2, %c0_9] : memref<1x18x18x128xbf16, #tpu.memory_space<vmem>>, vector<1x16x16x128xbf16>
    %16 = vector.shape_cast %15 : vector<1x16x16x128xbf16> to vector<16x16x128xbf16>
    %17 = vector.shape_cast %16 : vector<16x16x128xbf16> to vector<256x128xbf16>
    %c16_i32_10 = arith.constant 16 : i32
    %18 = arith.muli %arg1, %c16_i32_10 : i32
    %c1_i32 = arith.constant 1 : i32
    %19 = arith.addi %18, %c1_i32 : i32
    %c0_11 = arith.constant 0 : index
    %20 = arith.index_cast %19 : i32 to index
    %c0_12 = arith.constant 0 : index
    %c0_13 = arith.constant 0 : index
    %21 = vector.load %arg2[%c0_11, %20, %c0_12, %c0_13] : memref<1x18x18x128xbf16, #tpu.memory_space<vmem>>, vector<1x16x16x128xbf16>
    %22 = vector.shape_cast %21 : vector<1x16x16x128xbf16> to vector<16x16x128xbf16>
    %23 = vector.shape_cast %22 : vector<16x16x128xbf16> to vector<256x128xbf16>
    %c16_i32_14 = arith.constant 16 : i32
    %24 = arith.muli %arg1, %c16_i32_14 : i32
    %c1_i32_15 = arith.constant 1 : i32
    %25 = arith.addi %24, %c1_i32_15 : i32
    %c0_16 = arith.constant 0 : index
    %26 = arith.index_cast %25 : i32 to index
    %c1_17 = arith.constant 1 : index
    %c0_18 = arith.constant 0 : index
    %27 = vector.load %arg2[%c0_16, %26, %c1_17, %c0_18] : memref<1x18x18x128xbf16, #tpu.memory_space<vmem>>, vector<1x16x16x128xbf16>
    %28 = vector.shape_cast %27 : vector<1x16x16x128xbf16> to vector<16x16x128xbf16>
    %29 = vector.shape_cast %28 : vector<16x16x128xbf16> to vector<256x128xbf16>
    %c16_i32_19 = arith.constant 16 : i32
    %30 = arith.muli %arg1, %c16_i32_19 : i32
    %c1_i32_20 = arith.constant 1 : i32
    %31 = arith.addi %30, %c1_i32_20 : i32
    %c0_21 = arith.constant 0 : index
    %32 = arith.index_cast %31 : i32 to index
    %c2_22 = arith.constant 2 : index
    %c0_23 = arith.constant 0 : index
    %33 = vector.load %arg2[%c0_21, %32, %c2_22, %c0_23] : memref<1x18x18x128xbf16, #tpu.memory_space<vmem>>, vector<1x16x16x128xbf16>
    %34 = vector.shape_cast %33 : vector<1x16x16x128xbf16> to vector<16x16x128xbf16>
    %35 = vector.shape_cast %34 : vector<16x16x128xbf16> to vector<256x128xbf16>
    %c16_i32_24 = arith.constant 16 : i32
    %36 = arith.muli %arg1, %c16_i32_24 : i32
    %c2_i32 = arith.constant 2 : i32
    %37 = arith.addi %36, %c2_i32 : i32
    %c0_25 = arith.constant 0 : index
    %38 = arith.index_cast %37 : i32 to index
    %c0_26 = arith.constant 0 : index
    %c0_27 = arith.constant 0 : index
    %39 = vector.load %arg2[%c0_25, %38, %c0_26, %c0_27] : memref<1x18x18x128xbf16, #tpu.memory_space<vmem>>, vector<1x16x16x128xbf16>
    %40 = vector.shape_cast %39 : vector<1x16x16x128xbf16> to vector<16x16x128xbf16>
    %41 = vector.shape_cast %40 : vector<16x16x128xbf16> to vector<256x128xbf16>
    %c16_i32_28 = arith.constant 16 : i32
    %42 = arith.muli %arg1, %c16_i32_28 : i32
    %c2_i32_29 = arith.constant 2 : i32
    %43 = arith.addi %42, %c2_i32_29 : i32
    %c0_30 = arith.constant 0 : index
    %44 = arith.index_cast %43 : i32 to index
    %c1_31 = arith.constant 1 : index
    %c0_32 = arith.constant 0 : index
    %45 = vector.load %arg2[%c0_30, %44, %c1_31, %c0_32] : memref<1x18x18x128xbf16, #tpu.memory_space<vmem>>, vector<1x16x16x128xbf16>
    %46 = vector.shape_cast %45 : vector<1x16x16x128xbf16> to vector<16x16x128xbf16>
    %47 = vector.shape_cast %46 : vector<16x16x128xbf16> to vector<256x128xbf16>
    %c16_i32_33 = arith.constant 16 : i32
    %48 = arith.muli %arg1, %c16_i32_33 : i32
    %c2_i32_34 = arith.constant 2 : i32
    %49 = arith.addi %48, %c2_i32_34 : i32
    %c0_35 = arith.constant 0 : index
    %50 = arith.index_cast %49 : i32 to index
    %c2_36 = arith.constant 2 : index
    %c0_37 = arith.constant 0 : index
    %51 = vector.load %arg2[%c0_35, %50, %c2_36, %c0_37] : memref<1x18x18x128xbf16, #tpu.memory_space<vmem>>, vector<1x16x16x128xbf16>
    %52 = vector.shape_cast %51 : vector<1x16x16x128xbf16> to vector<16x16x128xbf16>
    %53 = vector.shape_cast %52 : vector<16x16x128xbf16> to vector<256x128xbf16>
    %54 = tpu.concatenate %5, %11, %17, %23, %29, %35, %41, %47, %53 in 1 : vector<256x128xbf16>, vector<256x128xbf16>, vector<256x128xbf16>, vector<256x128xbf16>, vector<256x128xbf16>, vector<256x128xbf16>, vector<256x128xbf16>, vector<256x128xbf16>, vector<256x128xbf16> -> vector<256x1152xbf16>
    %c0_38 = arith.constant 0 : index
    %c0_39 = arith.constant 0 : index
    %55 = vector.load %arg3[%c0_38, %c0_39] : memref<1152x128xbf16, #tpu.memory_space<vmem>>, vector<1152x128xbf16>
    %cst = arith.constant dense<0.000000e+00> : vector<256x128xf32>
    %56 = tpu.matmul %54, %55, %cst {dimension_numbers = #tpu.dot_dimension_numbers<[1], [0], [0], [1], [0, 0, 1, 1], [], []>} : vector<256x1152xbf16>, vector<1152x128xbf16>, vector<256x128xf32> -> vector<256x128xf32>
    %57 = arith.truncf %56 : vector<256x128xf32> to vector<256x128xbf16>
    %c0_40 = arith.constant 0 : index
    %c0_41 = arith.constant 0 : index
    %58 = vector.load %arg4[%c0_40, %c0_41] : memref<256x128xbf16, #tpu.memory_space<vmem>>, vector<256x128xbf16>
    tpu.vector_store %arg4[%c0_40, %c0_41], %57 {strides = array<i32>} : memref<256x128xbf16, #tpu.memory_space<vmem>>, vector<256x128xbf16>,
    %cst_42 = arith.constant dense<0.000000e+00> : vector<128xf32>
    %59 = vector.multi_reduction <add>, %56, %cst_42 [0] : vector<256x128xf32> to vector<128xf32>
    %60 = vector.shape_cast %59 : vector<128xf32> to vector<1x128xf32>
    %cst_43 = arith.constant 3.906250e-03 : f32
    %61 = vector.broadcast %cst_43 : f32 to vector<1x128xf32>
    %62 = arith.mulf %60, %61 : vector<1x128xf32>
    %63 = vector.broadcast %62 : vector<1x128xf32> to vector<256x128xf32>
    %64 = arith.subf %56, %63 : vector<256x128xf32>
    %65 = arith.mulf %64, %64 : vector<256x128xf32>
    %cst_44 = arith.constant dense<0.000000e+00> : vector<128xf32>
    %66 = vector.multi_reduction <add>, %65, %cst_44 [0] : vector<256x128xf32> to vector<128xf32>
    %67 = vector.shape_cast %66 : vector<128xf32> to vector<1x128xf32>
    %c0_45 = arith.constant 0 : index
    %c0_46 = arith.constant 0 : index
    %c0_47 = arith.constant 0 : index
    %c0_48 = arith.constant 0 : index
    %68 = vector.load %arg5[%c0_45, %c0_46, %c0_47, %c0_48] : memref<1x1x2x128xf32, #tpu.memory_space<vmem>>, vector<1x1x1x128xf32>
    %69 = vector.shape_cast %68 : vector<1x1x1x128xf32> to vector<1x128xf32>
    %70 = vector.shape_cast %60 : vector<1x128xf32> to vector<1x1x1x128xf32>
    tpu.vector_store %arg5[%c0_45, %c0_46, %c0_47, %c0_48], %70 {strides = array<i32>} : memref<1x1x2x128xf32, #tpu.memory_space<vmem>>, vector<1x1x1x128xf32>,
    %c0_49 = arith.constant 0 : index
    %c0_50 = arith.constant 0 : index
    %c1_51 = arith.constant 1 : index
    %c0_52 = arith.constant 0 : index
    %71 = vector.load %arg5[%c0_49, %c0_50, %c1_51, %c0_52] : memref<1x1x2x128xf32, #tpu.memory_space<vmem>>, vector<1x1x1x128xf32>
    %72 = vector.shape_cast %71 : vector<1x1x1x128xf32> to vector<1x128xf32>
    %73 = vector.shape_cast %67 : vector<1x128xf32> to vector<1x1x1x128xf32>
    tpu.vector_store %arg5[%c0_49, %c0_50, %c1_51, %c0_52], %73 {strides = array<i32>} : memref<1x1x2x128xf32, #tpu.memory_space<vmem>>, vector<1x1x1x128xf32>,
    return
  }
  func.func @transform_0(%arg0: i32, %arg1: i32) -> (i32, i32, i32, i32) {
    %c0_i32 = arith.constant 0 : i32
    %c0_i32_0 = arith.constant 0 : i32
    %c0_i32_1 = arith.constant 0 : i32
    %c0_i32_2 = arith.constant 0 : i32
    return %arg0, %c0_i32, %c0_i32_0, %c0_i32_1 : i32, i32, i32, i32
  }
  func.func @transform_1(%arg0: i32, %arg1: i32) -> (i32, i32) {
    %c0_i32 = arith.constant 0 : i32
    %c0_i32_0 = arith.constant 0 : i32
    %c0_i32_1 = arith.constant 0 : i32
    return %c0_i32, %c0_i32_0 : i32, i32
  }
  func.func @transform_2(%arg0: i32, %arg1: i32) -> (i32, i32) {
    %c1_i32 = arith.constant 1 : i32
    %0 = arith.muli %arg0, %c1_i32 : i32
    %1 = arith.addi %0, %arg1 : i32
    %c0_i32 = arith.constant 0 : i32
    %c0_i32_0 = arith.constant 0 : i32
    return %1, %c0_i32 : i32, i32
  }
  func.func @transform_3(%arg0: i32, %arg1: i32) -> (i32, i32, i32, i32) {
    %c0_i32 = arith.constant 0 : i32
    %c0_i32_0 = arith.constant 0 : i32
    %c0_i32_1 = arith.constant 0 : i32
    return %arg0, %arg1, %c0_i32, %c0_i32_0 : i32, i32, i32, i32
  }
}

module attributes {stable_mosaic.version = 11 : i64} {
  func.func @_bn_act_kernel(%arg0: i32, %arg1: memref<512x128xbf16, #tpu.memory_space<vmem>>, %arg2: memref<1x128xf32, #tpu.memory_space<vmem>>, %arg3: memref<1x128xf32, #tpu.memory_space<vmem>>, %arg4: memref<512x128xbf16, #tpu.memory_space<vmem>>) attributes {dimension_semantics = [#tpu.dimension_semantics<parallel>], iteration_bounds = array<i64: 1>, scalar_prefetch = 0 : i64, scratch_operands = 0 : i64, tpu.core_type = #tpu.core_type<tc>, window_params = [{transform_indices = @transform_0, window_bounds = array<i64: 512, 128>}, {pipeline_mode = #tpu.pipeline_mode<synchronous>, transform_indices = @transform_1, window_bounds = array<i64: 1, 128>}, {pipeline_mode = #tpu.pipeline_mode<synchronous>, transform_indices = @transform_2, window_bounds = array<i64: 1, 128>}, {transform_indices = @transform_3, window_bounds = array<i64: 512, 128>}]} {
    %c0 = arith.constant 0 : index
    %c0_0 = arith.constant 0 : index
    %0 = vector.load %arg1[%c0, %c0_0] : memref<512x128xbf16, #tpu.memory_space<vmem>>, vector<512x128xbf16>
    %1 = arith.extf %0 : vector<512x128xbf16> to vector<512x128xf32>
    %c0_1 = arith.constant 0 : index
    %c0_2 = arith.constant 0 : index
    %2 = vector.load %arg2[%c0_1, %c0_2] : memref<1x128xf32, #tpu.memory_space<vmem>>, vector<1x128xf32>
    %3 = vector.broadcast %2 : vector<1x128xf32> to vector<512x128xf32>
    %4 = arith.mulf %1, %3 : vector<512x128xf32>
    %c0_3 = arith.constant 0 : index
    %c0_4 = arith.constant 0 : index
    %5 = vector.load %arg3[%c0_3, %c0_4] : memref<1x128xf32, #tpu.memory_space<vmem>>, vector<1x128xf32>
    %6 = vector.broadcast %5 : vector<1x128xf32> to vector<512x128xf32>
    %7 = arith.addf %4, %6 : vector<512x128xf32>
    %cst = arith.constant 0.000000e+00 : f32
    %8 = vector.broadcast %cst : f32 to vector<512x128xf32>
    %9 = arith.maximumf %7, %8 : vector<512x128xf32>
    %10 = arith.truncf %9 : vector<512x128xf32> to vector<512x128xbf16>
    %c0_5 = arith.constant 0 : index
    %c0_6 = arith.constant 0 : index
    %11 = vector.load %arg4[%c0_5, %c0_6] : memref<512x128xbf16, #tpu.memory_space<vmem>>, vector<512x128xbf16>
    tpu.vector_store %arg4[%c0_5, %c0_6], %10 {strides = array<i32>} : memref<512x128xbf16, #tpu.memory_space<vmem>>, vector<512x128xbf16>,
    return
  }
  func.func @transform_0(%arg0: i32) -> (i32, i32) {
    %c0_i32 = arith.constant 0 : i32
    %c0_i32_0 = arith.constant 0 : i32
    return %arg0, %c0_i32 : i32, i32
  }
  func.func @transform_1(%arg0: i32) -> (i32, i32) {
    %c0_i32 = arith.constant 0 : i32
    %c0_i32_0 = arith.constant 0 : i32
    %c0_i32_1 = arith.constant 0 : i32
    return %c0_i32, %c0_i32_0 : i32, i32
  }
  func.func @transform_2(%arg0: i32) -> (i32, i32) {
    %c0_i32 = arith.constant 0 : i32
    %c0_i32_0 = arith.constant 0 : i32
    %c0_i32_1 = arith.constant 0 : i32
    return %c0_i32, %c0_i32_0 : i32, i32
  }
  func.func @transform_3(%arg0: i32) -> (i32, i32) {
    %c0_i32 = arith.constant 0 : i32
    %c0_i32_0 = arith.constant 0 : i32
    return %arg0, %c0_i32 : i32, i32
  }
}

module attributes {stable_mosaic.version = 11 : i64} {
  func.func @_bn_act_kernel(%arg0: i32, %arg1: memref<512x128xbf16, #tpu.memory_space<vmem>>, %arg2: memref<1x128xf32, #tpu.memory_space<vmem>>, %arg3: memref<1x128xf32, #tpu.memory_space<vmem>>, %arg4: memref<512x128xbf16, #tpu.memory_space<vmem>>, %arg5: memref<512x128xf32, #tpu.memory_space<vmem>>) attributes {dimension_semantics = [#tpu.dimension_semantics<parallel>], iteration_bounds = array<i64: 1>, scalar_prefetch = 0 : i64, scratch_operands = 0 : i64, tpu.core_type = #tpu.core_type<tc>, window_params = [{transform_indices = @transform_0, window_bounds = array<i64: 512, 128>}, {pipeline_mode = #tpu.pipeline_mode<synchronous>, transform_indices = @transform_1, window_bounds = array<i64: 1, 128>}, {pipeline_mode = #tpu.pipeline_mode<synchronous>, transform_indices = @transform_2, window_bounds = array<i64: 1, 128>}, {transform_indices = @transform_3, window_bounds = array<i64: 512, 128>}, {transform_indices = @transform_4, window_bounds = array<i64: 512, 128>}]} {
    %c0 = arith.constant 0 : index
    %c0_0 = arith.constant 0 : index
    %0 = vector.load %arg1[%c0, %c0_0] : memref<512x128xbf16, #tpu.memory_space<vmem>>, vector<512x128xbf16>
    %1 = arith.extf %0 : vector<512x128xbf16> to vector<512x128xf32>
    %c0_1 = arith.constant 0 : index
    %c0_2 = arith.constant 0 : index
    %2 = vector.load %arg2[%c0_1, %c0_2] : memref<1x128xf32, #tpu.memory_space<vmem>>, vector<1x128xf32>
    %3 = vector.broadcast %2 : vector<1x128xf32> to vector<512x128xf32>
    %4 = arith.mulf %1, %3 : vector<512x128xf32>
    %c0_3 = arith.constant 0 : index
    %c0_4 = arith.constant 0 : index
    %5 = vector.load %arg3[%c0_3, %c0_4] : memref<1x128xf32, #tpu.memory_space<vmem>>, vector<1x128xf32>
    %6 = vector.broadcast %5 : vector<1x128xf32> to vector<512x128xf32>
    %7 = arith.addf %4, %6 : vector<512x128xf32>
    %c0_5 = arith.constant 0 : index
    %c0_6 = arith.constant 0 : index
    %8 = vector.load %arg4[%c0_5, %c0_6] : memref<512x128xbf16, #tpu.memory_space<vmem>>, vector<512x128xbf16>
    %9 = arith.extf %8 : vector<512x128xbf16> to vector<512x128xf32>
    %10 = arith.addf %7, %9 : vector<512x128xf32>
    %cst = arith.constant 0.000000e+00 : f32
    %11 = vector.broadcast %cst : f32 to vector<512x128xf32>
    %12 = arith.maximumf %10, %11 : vector<512x128xf32>
    %c0_7 = arith.constant 0 : index
    %c0_8 = arith.constant 0 : index
    %13 = vector.load %arg5[%c0_7, %c0_8] : memref<512x128xf32, #tpu.memory_space<vmem>>, vector<512x128xf32>
    tpu.vector_store %arg5[%c0_7, %c0_8], %12 {strides = array<i32>} : memref<512x128xf32, #tpu.memory_space<vmem>>, vector<512x128xf32>,
    return
  }
  func.func @transform_0(%arg0: i32) -> (i32, i32) {
    %c0_i32 = arith.constant 0 : i32
    %c0_i32_0 = arith.constant 0 : i32
    return %arg0, %c0_i32 : i32, i32
  }
  func.func @transform_1(%arg0: i32) -> (i32, i32) {
    %c0_i32 = arith.constant 0 : i32
    %c0_i32_0 = arith.constant 0 : i32
    %c0_i32_1 = arith.constant 0 : i32
    return %c0_i32, %c0_i32_0 : i32, i32
  }
  func.func @transform_2(%arg0: i32) -> (i32, i32) {
    %c0_i32 = arith.constant 0 : i32
    %c0_i32_0 = arith.constant 0 : i32
    %c0_i32_1 = arith.constant 0 : i32
    return %c0_i32, %c0_i32_0 : i32, i32
  }
  func.func @transform_3(%arg0: i32) -> (i32, i32) {
    %c0_i32 = arith.constant 0 : i32
    %c0_i32_0 = arith.constant 0 : i32
    return %arg0, %c0_i32 : i32, i32
  }
  func.func @transform_4(%arg0: i32) -> (i32, i32) {
    %c0_i32 = arith.constant 0 : i32
    %c0_i32_0 = arith.constant 0 : i32
    return %arg0, %c0_i32 : i32, i32
  }
}

</mosaic_0001>

<llo_original>
// kernel: _residual_block_forward.5
$region0: #{_residual_block_forward.5}
  #allocation0 [shape = 'u32[]', space=smem, size = 0x4, offset = 0x4, fixed_abs, tag = 'smem constant byte address 0x4 - core index']
  #allocation1 [shape = 'u32[144,128]{1,0:T(1,128)}', space=vmem, size = 0x12000, scoped, tag = 'internal scratch']
  %s0 = inlined_call_operand.vmem [shape: bf16[512,128], index: 0, kind: input, shape index: {}]
  %s1 = inlined_call_operand.vmem [shape: f32[1,128], index: 1, kind: input, shape index: {}]
  %s2 = inlined_call_operand.vmem [shape: f32[1,128], index: 2, kind: input, shape index: {}]
  %s3 = inlined_call_operand.vmem [shape: bf16[512,128], index: 3, kind: output, shape index: {}]
  %s4 = sld [smem:[#allocation0]]
  $region22: #{_residual_block_forward.5} parent=0
    _
  %s6 = ssub.s32 1, %s4
  %s7 = scalar_select 0, %s6, %s4
  // Predicated region
  $region2: #{_residual_block_forward.5} parent=0 // pred_check
    _
  $region3: #{_residual_block_forward.5} parent=0 // pred_check_branch
    %9 = sbr.rel (0) target = $region5
  $region4: #{_residual_block_forward.5} parent=0 // pred_region
    _
  $region5: #{_residual_block_forward.5} parent=0 // pred_fallthru
    _
  // Predicated region
  $region6: #{_residual_block_forward.5} parent=0 // pred_check
    _
  $region7: #{_residual_block_forward.5} parent=0 // pred_check_branch
    %11 = sbr.rel (0) target = $region9
  $region8: #{_residual_block_forward.5} parent=0 // pred_region
    _
  $region9: #{_residual_block_forward.5} parent=0 // pred_fallthru
    _
  // Predicated region
  $region10: #{_residual_block_forward.5} parent=0 // pred_check
    _
  $region11: #{_residual_block_forward.5} parent=0 // pred_check_branch
    %13 = sbr.rel (0) target = $region13
  $region12: #{_residual_block_forward.5} parent=0 // pred_region
    _
  $region13: #{_residual_block_forward.5} parent=0 // pred_fallthru
    _
  %v14 = vld [vmem:[%s0] sm:$0xf]
  %v15 = vld [vmem:[%s0 + $0x4] sm:$0xf]
  %v16 = vld [vmem:[%s0 + $0x8] sm:$0xf]
  %v17 = vld [vmem:[%s0 + $0xc] sm:$0xf]
  %v18 = vld [vmem:[%s0 + $0x10] sm:$0xf]
  %v19 = vld [vmem:[%s0 + $0x14] sm:$0xf]
  %v20 = vld [vmem:[%s0 + $0x18] sm:$0xf]
  %v21 = vld [vmem:[%s0 + $0x1c] sm:$0xf]
  %v22 = vld [vmem:[%s0 + $0x20] sm:$0xf]
  %v23 = vld [vmem:[%s0 + $0x24] sm:$0xf]
  %v24 = vld [vmem:[%s0 + $0x28] sm:$0xf]
  %v25 = vld [vmem:[%s0 + $0x2c] sm:$0xf]
  %v26 = vld [vmem:[%s0 + $0x30] sm:$0xf]
  %v27 = vld [vmem:[%s0 + $0x34] sm:$0xf]
  %v28 = vld [vmem:[%s0 + $0x38] sm:$0xf]
  %v29 = vld [vmem:[%s0 + $0x3c] sm:$0xf]
  %v30 = vld [vmem:[%s0 + $0x40] sm:$0xf]
  %v31 = vld [vmem:[%s0 + $0x44] sm:$0xf]
  %v32 = vld [vmem:[%s0 + $0x48] sm:$0xf]
  %v33 = vld [vmem:[%s0 + $0x4c] sm:$0xf]
  %v34 = vld [vmem:[%s0 + $0x50] sm:$0xf]
  %v35 = vld [vmem:[%s0 + $0x54] sm:$0xf]
  %v36 = vld [vmem:[%s0 + $0x58] sm:$0xf]
  %v37 = vld [vmem:[%s0 + $0x5c] sm:$0xf]
  %v38 = vld [vmem:[%s0 + $0x60] sm:$0xf]
  %v39 = vld [vmem:[%s0 + $0x64] sm:$0xf]
  %v40 = vld [vmem:[%s0 + $0x68] sm:$0xf]
  %v41 = vld [vmem:[%s0 + $0x6c] sm:$0xf]
  %v42 = vld [vmem:[%s0 + $0x70] sm:$0xf]
  %v43 = vld [vmem:[%s0 + $0x74] sm:$0xf]
  %v44 = vld [vmem:[%s0 + $0x78] sm:$0xf]
  %v45 = vld [vmem:[%s0 + $0x7c] sm:$0xf]
  %v46 = vld [vmem:[%s0 + $0x80] sm:$0xf]
  %v47 = vld [vmem:[%s0 + $0x84] sm:$0xf]
  %v48 = vld [vmem:[%s0 + $0x88] sm:$0xf]
  %v49 = vld [vmem:[%s0 + $0x8c] sm:$0xf]
  %v50 = vld [vmem:[%s0 + $0x90] sm:$0xf]
  %v51 = vld [vmem:[%s0 + $0x94] sm:$0xf]
  %v52 = vld [vmem:[%s0 + $0x98] sm:$0xf]
  %v53 = vld [vmem:[%s0 + $0x9c] sm:$0xf]
  %v54 = vld [vmem:[%s0 + $0xa0] sm:$0xf]
  %v55 = vld [vmem:[%s0 + $0xa4] sm:$0xf]
  %v56 = vld [vmem:[%s0 + $0xa8] sm:$0xf]
  %v57 = vld [vmem:[%s0 + $0xac] sm:$0xf]
  %v58 = vld [vmem:[%s0 + $0xb0] sm:$0xf]
  %v59 = vld [vmem:[%s0 + $0xb4] sm:$0xf]
  %v60 = vld [vmem:[%s0 + $0xb8] sm:$0xf]
  %v61 = vld [vmem:[%s0 + $0xbc] sm:$0xf]
  %v62 = vld [vmem:[%s0 + $0xc0] sm:$0xf]
  %v63 = vld [vmem:[%s0 + $0xc4] sm:$0xf]
  %v64 = vld [vmem:[%s0 + $0xc8] sm:$0xf]
  %v65 = vld [vmem:[%s0 + $0xcc] sm:$0xf]
  %v66 = vld [vmem:[%s0 + $0xd0] sm:$0xf]
  %v67 = vld [vmem:[%s0 + $0xd4] sm:$0xf]
  %v68 = vld [vmem:[%s0 + $0xd8] sm:$0xf]
  %v69 = vld [vmem:[%s0 + $0xdc] sm:$0xf]
  %v70 = vld [vmem:[%s0 + $0xe0] sm:$0xf]
  %v71 = vld [vmem:[%s0 + $0xe4] sm:$0xf]
  %v72 = vld [vmem:[%s0 + $0xe8] sm:$0xf]
  %v73 = vld [vmem:[%s0 + $0xec] sm:$0xf]
  %v74 = vld [vmem:[%s0 + $0xf0] sm:$0xf]
  %v75 = vld [vmem:[%s0 + $0xf4] sm:$0xf]
  %v76 = vld [vmem:[%s0 + $0xf8] sm:$0xf]
  %v77 = vld [vmem:[%s0 + $0xfc] sm:$0xf]
  %v78 = vunpack.c.l.bf16 %v14
  %v79 = vunpack.c.l.bf16 %v15
  %v80 = vunpack.c.l.bf16 %v16
  %v81 = vunpack.c.l.bf16 %v17
  %v82 = vunpack.c.l.bf16 %v18
  %v83 = vunpack.c.l.bf16 %v19
  %v84 = vunpack.c.l.bf16 %v20
  %v85 = vunpack.c.l.bf16 %v21
  %v86 = vunpack.c.l.bf16 %v22
  %v87 = vunpack.c.l.bf16 %v23
  %v88 = vunpack.c.l.bf16 %v24
  %v89 = vunpack.c.l.bf16 %v25
  %v90 = vunpack.c.l.bf16 %v26
  %v91 = vunpack.c.l.bf16 %v27
  %v92 = vunpack.c.l.bf16 %v28
  %v93 = vunpack.c.l.bf16 %v29
  %v94 = vunpack.c.l.bf16 %v30
  %v95 = vunpack.c.l.bf16 %v31
  %v96 = vunpack.c.l.bf16 %v32
  %v97 = vunpack.c.l.bf16 %v33
  %v98 = vunpack.c.l.bf16 %v34
  %v99 = vunpack.c.l.bf16 %v35
  %v100 = vunpack.c.l.bf16 %v36
  %v101 = vunpack.c.l.bf16 %v37
  %v102 = vunpack.c.l.bf16 %v38
  %v103 = vunpack.c.l.bf16 %v39
  %v104 = vunpack.c.l.bf16 %v40
  %v105 = vunpack.c.l.bf16 %v41
  %v106 = vunpack.c.l.bf16 %v42
  %v107 = vunpack.c.l.bf16 %v43
  %v108 = vunpack.c.l.bf16 %v44
  %v109 = vunpack.c.l.bf16 %v45
  %v110 = vunpack.c.l.bf16 %v46
  %v111 = vunpack.c.l.bf16 %v47
  %v112 = vunpack.c.l.bf16 %v48
  %v113 = vunpack.c.l.bf16 %v49
  %v114 = vunpack.c.l.bf16 %v50
  %v115 = vunpack.c.l.bf16 %v51
  %v116 = vunpack.c.l.bf16 %v52
  %v117 = vunpack.c.l.bf16 %v53
  %v118 = vunpack.c.l.bf16 %v54
  %v119 = vunpack.c.l.bf16 %v55
  %v120 = vunpack.c.l.bf16 %v56
  %v121 = vunpack.c.l.bf16 %v57
  %v122 = vunpack.c.l.bf16 %v58
  %v123 = vunpack.c.l.bf16 %v59
  %v124 = vunpack.c.l.bf16 %v60
  %v125 = vunpack.c.l.bf16 %v61
  %v126 = vunpack.c.l.bf16 %v62
  %v127 = vunpack.c.l.bf16 %v63
  %v128 = vunpack.c.l.bf16 %v64
  %v129 = vunpack.c.l.bf16 %v65
  %v130 = vunpack.c.l.bf16 %v66
  %v131 = vunpack.c.l.bf16 %v67
  %v132 = vunpack.c.l.bf16 %v68
  %v133 = vunpack.c.l.bf16 %v69
  %v134 = vunpack.c.l.bf16 %v70
  %v135 = vunpack.c.l.bf16 %v71
  %v136 = vunpack.c.l.bf16 %v72
  %v137 = vunpack.c.l.bf16 %v73
  %v138 = vunpack.c.l.bf16 %v74
  %v139 = vunpack.c.l.bf16 %v75
  %v140 = vunpack.c.l.bf16 %v76
  %v141 = vunpack.c.l.bf16 %v77
  %v142 = vld [vmem:[%s1] sm:$0x1]
  %v144 = vlaneseq
  %v145 = vshrl.u32 %v144, 7
  %v146 = vsub.s32 0, %v145
  %v147 = vrot.slane %v142, %v146
  %v149 = vmul.f32 %v78, %v147
  %v150 = vmul.f32 %v79, %v147
  %v151 = vmul.f32 %v80, %v147
  %v152 = vmul.f32 %v81, %v147
  %v153 = vmul.f32 %v82, %v147
  %v154 = vmul.f32 %v83, %v147
  %v155 = vmul.f32 %v84, %v147
  %v156 = vmul.f32 %v85, %v147
  %v157 = vmul.f32 %v86, %v147
  %v158 = vmul.f32 %v87, %v147
  %v159 = vmul.f32 %v88, %v147
  %v160 = vmul.f32 %v89, %v147
  %v161 = vmul.f32 %v90, %v147
  %v162 = vmul.f32 %v91, %v147
  %v163 = vmul.f32 %v92, %v147
  %v164 = vmul.f32 %v93, %v147
  %v165 = vmul.f32 %v94, %v147
  %v166 = vmul.f32 %v95, %v147
  %v167 = vmul.f32 %v96, %v147
  %v168 = vmul.f32 %v97, %v147
  %v169 = vmul.f32 %v98, %v147
  %v170 = vmul.f32 %v99, %v147
  %v171 = vmul.f32 %v100, %v147
  %v172 = vmul.f32 %v101, %v147
  %v173 = vmul.f32 %v102, %v147
  %v174 = vmul.f32 %v103, %v147
  %v175 = vmul.f32 %v104, %v147
  %v176 = vmul.f32 %v105, %v147
  %v177 = vmul.f32 %v106, %v147
  %v178 = vmul.f32 %v107, %v147
  %v179 = vmul.f32 %v108, %v147
  %v180 = vmul.f32 %v109, %v147
  %v181 = vmul.f32 %v110, %v147
  %v182 = vmul.f32 %v111, %v147
  %v183 = vmul.f32 %v112, %v147
  %v184 = vmul.f32 %v113, %v147
  %v185 = vmul.f32 %v114, %v147
  %v186 = vmul.f32 %v115, %v147
  %v187 = vmul.f32 %v116, %v147
  %v188 = vmul.f32 %v117, %v147
  %v189 = vmul.f32 %v118, %v147
  %v190 = vmul.f32 %v119, %v147
  %v191 = vmul.f32 %v120, %v147
  %v192 = vmul.f32 %v121, %v147
  %v193 = vmul.f32 %v122, %v147
  %v194 = vmul.f32 %v123, %v147
  %v195 = vmul.f32 %v124, %v147
  %v196 = vmul.f32 %v125, %v147
  %v197 = vmul.f32 %v126, %v147
  %v198 = vmul.f32 %v127, %v147
  %v199 = vmul.f32 %v128, %v147
  %v200 = vmul.f32 %v129, %v147
  %v201 = vmul.f32 %v130, %v147
  %v202 = vmul.f32 %v131, %v147
  %v203 = vmul.f32 %v132, %v147
  %v204 = vmul.f32 %v133, %v147
  %v205 = vmul.f32 %v134, %v147
  %v206 = vmul.f32 %v135, %v147
  %v207 = vmul.f32 %v136, %v147
  %v208 = vmul.f32 %v137, %v147
  %v209 = vmul.f32 %v138, %v147
  %v210 = vmul.f32 %v139, %v147
  %v211 = vmul.f32 %v140, %v147
  %v212 = vmul.f32 %v141, %v147
  %v213 = vld [vmem:[%s2] sm:$0x1]
  %v215 = vlaneseq
  %v216 = vshrl.u32 %v215, 7
  %v217 = vsub.s32 0, %v216
  %v218 = vrot.slane %v213, %v217
  %v220 = vadd.f32 %v149, %v218
  %v221 = vadd.f32 %v150, %v218
  %v222 = vadd.f32 %v151, %v218
  %v223 = vadd.f32 %v152, %v218
  %v224 = vadd.f32 %v153, %v218
  %v225 = vadd.f32 %v154, %v218
  %v226 = vadd.f32 %v155, %v218
  %v227 = vadd.f32 %v156, %v218
  %v228 = vadd.f32 %v157, %v218
  %v229 = vadd.f32 %v158, %v218
  %v230 = vadd.f32 %v159, %v218
  %v231 = vadd.f32 %v160, %v218
  %v232 = vadd.f32 %v161, %v218
  %v233 = vadd.f32 %v162, %v218
  %v234 = vadd.f32 %v163, %v218
  %v235 = vadd.f32 %v164, %v218
  %v236 = vadd.f32 %v165, %v218
  %v237 = vadd.f32 %v166, %v218
  %v238 = vadd.f32 %v167, %v218
  %v239 = vadd.f32 %v168, %v218
  %v240 = vadd.f32 %v169, %v218
  %v241 = vadd.f32 %v170, %v218
  %v242 = vadd.f32 %v171, %v218
  %v243 = vadd.f32 %v172, %v218
  %v244 = vadd.f32 %v173, %v218
  %v245 = vadd.f32 %v174, %v218
  %v246 = vadd.f32 %v175, %v218
  %v247 = vadd.f32 %v176, %v218
  %v248 = vadd.f32 %v177, %v218
  %v249 = vadd.f32 %v178, %v218
  %v250 = vadd.f32 %v179, %v218
  %v251 = vadd.f32 %v180, %v218
  %v252 = vadd.f32 %v181, %v218
  %v253 = vadd.f32 %v182, %v218
  %v254 = vadd.f32 %v183, %v218
  %v255 = vadd.f32 %v184, %v218
  %v256 = vadd.f32 %v185, %v218
  %v257 = vadd.f32 %v186, %v218
  %v258 = vadd.f32 %v187, %v218
  %v259 = vadd.f32 %v188, %v218
  %v260 = vadd.f32 %v189, %v218
  %v261 = vadd.f32 %v190, %v218
  %v262 = vadd.f32 %v191, %v218
  %v263 = vadd.f32 %v192, %v218
  %v264 = vadd.f32 %v193, %v218
  %v265 = vadd.f32 %v194, %v218
  %v266 = vadd.f32 %v195, %v218
  %v267 = vadd.f32 %v196, %v218
  %v268 = vadd.f32 %v197, %v218
  %v269 = vadd.f32 %v198, %v218
  %v270 = vadd.f32 %v199, %v218
  %v271 = vadd.f32 %v200, %v218
  %v272 = vadd.f32 %v201, %v218
  %v273 = vadd.f32 %v202, %v218
  %v274 = vadd.f32 %v203, %v218
  %v275 = vadd.f32 %v204, %v218
  %v276 = vadd.f32 %v205, %v218
  %v277 = vadd.f32 %v206, %v218
  %v278 = vadd.f32 %v207, %v218
  %v279 = vadd.f32 %v208, %v218
  %v280 = vadd.f32 %v209, %v218
  %v281 = vadd.f32 %v210, %v218
  %v282 = vadd.f32 %v211, %v218
  %v283 = vadd.f32 %v212, %v218
  %v284 = vmax.f32 %v220, 0.0
  %v285 = vmax.f32 %v221, 0.0
  %v286 = vmax.f32 %v222, 0.0
  %v287 = vmax.f32 %v223, 0.0
  %v288 = vmax.f32 %v224, 0.0
  %v289 = vmax.f32 %v225, 0.0
  %v290 = vmax.f32 %v226, 0.0
  %v291 = vmax.f32 %v227, 0.0
  %v292 = vmax.f32 %v228, 0.0
  %v293 = vmax.f32 %v229, 0.0
  %v294 = vmax.f32 %v230, 0.0
  %v295 = vmax.f32 %v231, 0.0
  %v296 = vmax.f32 %v232, 0.0
  %v297 = vmax.f32 %v233, 0.0
  %v298 = vmax.f32 %v234, 0.0
  %v299 = vmax.f32 %v235, 0.0
  %v300 = vmax.f32 %v236, 0.0
  %v301 = vmax.f32 %v237, 0.0
  %v302 = vmax.f32 %v238, 0.0
  %v303 = vmax.f32 %v239, 0.0
  %v304 = vmax.f32 %v240, 0.0
  %v305 = vmax.f32 %v241, 0.0
  %v306 = vmax.f32 %v242, 0.0
  %v307 = vmax.f32 %v243, 0.0
  %v308 = vmax.f32 %v244, 0.0
  %v309 = vmax.f32 %v245, 0.0
  %v310 = vmax.f32 %v246, 0.0
  %v311 = vmax.f32 %v247, 0.0
  %v312 = vmax.f32 %v248, 0.0
  %v313 = vmax.f32 %v249, 0.0
  %v314 = vmax.f32 %v250, 0.0
  %v315 = vmax.f32 %v251, 0.0
  %v316 = vmax.f32 %v252, 0.0
  %v317 = vmax.f32 %v253, 0.0
  %v318 = vmax.f32 %v254, 0.0
  %v319 = vmax.f32 %v255, 0.0
  %v320 = vmax.f32 %v256, 0.0
  %v321 = vmax.f32 %v257, 0.0
  %v322 = vmax.f32 %v258, 0.0
  %v323 = vmax.f32 %v259, 0.0
  %v324 = vmax.f32 %v260, 0.0
  %v325 = vmax.f32 %v261, 0.0
  %v326 = vmax.f32 %v262, 0.0
  %v327 = vmax.f32 %v263, 0.0
  %v328 = vmax.f32 %v264, 0.0
  %v329 = vmax.f32 %v265, 0.0
  %v330 = vmax.f32 %v266, 0.0
  %v331 = vmax.f32 %v267, 0.0
  %v332 = vmax.f32 %v268, 0.0
  %v333 = vmax.f32 %v269, 0.0
  %v334 = vmax.f32 %v270, 0.0
  %v335 = vmax.f32 %v271, 0.0
  %v336 = vmax.f32 %v272, 0.0
  %v337 = vmax.f32 %v273, 0.0
  %v338 = vmax.f32 %v274, 0.0
  %v339 = vmax.f32 %v275, 0.0
  %v340 = vmax.f32 %v276, 0.0
  %v341 = vmax.f32 %v277, 0.0
  %v342 = vmax.f32 %v278, 0.0
  %v343 = vmax.f32 %v279, 0.0
  %v344 = vmax.f32 %v280, 0.0
  %v345 = vmax.f32 %v281, 0.0
  %v346 = vmax.f32 %v282, 0.0
  %v347 = vmax.f32 %v283, 0.0
  %v348 = vpack.c.bf16 %v285, %v284
  %v349 = vpack.c.bf16 %v287, %v286
  %v350 = vpack.c.bf16 %v289, %v288
  %v351 = vpack.c.bf16 %v291, %v290
  %v352 = vpack.c.bf16 %v293, %v292
  %v353 = vpack.c.bf16 %v295, %v294
  %v354 = vpack.c.bf16 %v297, %v296
  %v355 = vpack.c.bf16 %v299, %v298
  %v356 = vpack.c.bf16 %v301, %v300
  %v357 = vpack.c.bf16 %v303, %v302
  %v358 = vpack.c.bf16 %v305, %v304
  %v359 = vpack.c.bf16 %v307, %v306
  %v360 = vpack.c.bf16 %v309, %v308
  %v361 = vpack.c.bf16 %v311, %v310
  %v362 = vpack.c.bf16 %v313, %v312
  %v363 = vpack.c.bf16 %v315, %v314
  %v364 = vpack.c.bf16 %v317, %v316
  %v365 = vpack.c.bf16 %v319, %v318
  %v366 = vpack.c.bf16 %v321, %v320
  %v367 = vpack.c.bf16 %v323, %v322
  %v368 = vpack.c.bf16 %v325, %v324
  %v369 = vpack.c.bf16 %v327, %v326
  %v370 = vpack.c.bf16 %v329, %v328
  %v371 = vpack.c.bf16 %v331, %v330
  %v372 = vpack.c.bf16 %v333, %v332
  %v373 = vpack.c.bf16 %v335, %v334
  %v374 = vpack.c.bf16 %v337, %v336
  %v375 = vpack.c.bf16 %v339, %v338
  %v376 = vpack.c.bf16 %v341, %v340
  %v377 = vpack.c.bf16 %v343, %v342
  %v378 = vpack.c.bf16 %v345, %v344
  %v379 = vpack.c.bf16 %v347, %v346
  %v412 = vunpack.c.l.b16 %v348
  %v413 = vunpack.c.h.b16 %v348
  %v414 = vunpack.c.l.b16 %v349
  %v415 = vunpack.c.h.b16 %v349
  %v416 = vunpack.c.l.b16 %v350
  %v417 = vunpack.c.h.b16 %v350
  %v418 = vunpack.c.l.b16 %v351
  %v419 = vunpack.c.h.b16 %v351
  %v420 = vunpack.c.l.b16 %v352
  %v421 = vunpack.c.h.b16 %v352
  %v422 = vunpack.c.l.b16 %v353
  %v423 = vunpack.c.h.b16 %v353
  %v424 = vunpack.c.l.b16 %v354
  %v425 = vunpack.c.h.b16 %v354
  %v426 = vunpack.c.l.b16 %v355
  %v427 = vunpack.c.h.b16 %v355
  %v428 = vunpack.c.l.b16 %v356
  %v429 = vunpack.c.h.b16 %v356
  %v430 = vunpack.c.l.b16 %v357
  %v431 = vunpack.c.h.b16 %v357
  %v432 = vunpack.c.l.b16 %v358
  %v433 = vunpack.c.h.b16 %v358
  %v434 = vunpack.c.l.b16 %v359
  %v435 = vunpack.c.h.b16 %v359
  %v436 = vunpack.c.l.b16 %v360
  %v437 = vunpack.c.h.b16 %v360
  %v438 = vunpack.c.l.b16 %v361
  %v439 = vunpack.c.h.b16 %v361
  %v440 = vunpack.c.l.b16 %v362
  %v441 = vunpack.c.h.b16 %v362
  %v442 = vunpack.c.l.b16 %v363
  %v443 = vunpack.c.h.b16 %v363
  %v444 = vunpack.c.l.b16 %v364
  %v445 = vunpack.c.h.b16 %v364
  %v446 = vunpack.c.l.b16 %v365
  %v447 = vunpack.c.h.b16 %v365
  %v448 = vunpack.c.l.b16 %v366
  %v449 = vunpack.c.h.b16 %v366
  %v450 = vunpack.c.l.b16 %v367
  %v451 = vunpack.c.h.b16 %v367
  %v452 = vunpack.c.l.b16 %v368
  %v453 = vunpack.c.h.b16 %v368
  %v454 = vunpack.c.l.b16 %v369
  %v455 = vunpack.c.h.b16 %v369
  %v456 = vunpack.c.l.b16 %v370
  %v457 = vunpack.c.h.b16 %v370
  %v458 = vunpack.c.l.b16 %v371
  %v459 = vunpack.c.h.b16 %v371
  %v460 = vunpack.c.l.b16 %v372
  %v461 = vunpack.c.h.b16 %v372
  %v462 = vunpack.c.l.b16 %v373
  %v463 = vunpack.c.h.b16 %v373
  %v464 = vunpack.c.l.b16 %v374
  %v465 = vunpack.c.h.b16 %v374
  %v466 = vunpack.c.l.b16 %v375
  %v467 = vunpack.c.h.b16 %v375
  %v468 = vunpack.c.l.b16 %v376
  %v469 = vunpack.c.h.b16 %v376
  %v470 = vunpack.c.l.b16 %v377
  %v471 = vunpack.c.h.b16 %v377
  %v472 = vunpack.c.l.b16 %v378
  %v473 = vunpack.c.h.b16 %v378
  %v474 = vunpack.c.l.b16 %v379
  %v475 = vunpack.c.h.b16 %v379
  %v476 = vpack.c.b16 %v412, %v412
  %v477 = vpack.c.b16 %v413, %v413
  %v478 = vpack.c.b16 %v414, %v414
  %v479 = vpack.c.b16 %v415, %v415
  %v480 = vpack.c.b16 %v416, %v416
  %v481 = vpack.c.b16 %v417, %v417
  %v482 = vpack.c.b16 %v418, %v418
  %v483 = vpack.c.b16 %v419, %v419
  %v484 = vpack.c.b16 %v420, %v420
  %v485 = vpack.c.b16 %v421, %v421
  %v486 = vpack.c.b16 %v422, %v422
  %v487 = vpack.c.b16 %v423, %v423
  %v488 = vpack.c.b16 %v424, %v424
  %v489 = vpack.c.b16 %v425, %v425
  %v490 = vpack.c.b16 %v426, %v426
  %v491 = vpack.c.b16 %v427, %v427
  %v492 = vpack.c.b16 %v428, %v428
  %v493 = vpack.c.b16 %v429, %v429
  %v494 = vpack.c.b16 %v430, %v430
  %v495 = vpack.c.b16 %v431, %v431
  %v496 = vpack.c.b16 %v432, %v432
  %v497 = vpack.c.b16 %v433, %v433
  %v498 = vpack.c.b16 %v434, %v434
  %v499 = vpack.c.b16 %v435, %v435
  %v500 = vpack.c.b16 %v436, %v436
  %v501 = vpack.c.b16 %v437, %v437
  %v502 = vpack.c.b16 %v438, %v438
  %v503 = vpack.c.b16 %v439, %v439
  %v504 = vpack.c.b16 %v440, %v440
  %v505 = vpack.c.b16 %v441, %v441
  %v506 = vpack.c.b16 %v442, %v442
  %v507 = vpack.c.b16 %v443, %v443
  %v508 = vpack.c.b16 %v444, %v444
  %v509 = vpack.c.b16 %v445, %v445
  %v510 = vpack.c.b16 %v446, %v446
  %v511 = vpack.c.b16 %v447, %v447
  %v512 = vpack.c.b16 %v448, %v448
  %v513 = vpack.c.b16 %v449, %v449
  %v514 = vpack.c.b16 %v450, %v450
  %v515 = vpack.c.b16 %v451, %v451
  %v516 = vpack.c.b16 %v452, %v452
  %v517 = vpack.c.b16 %v453, %v453
  %v518 = vpack.c.b16 %v454, %v454
  %v519 = vpack.c.b16 %v455, %v455
  %v520 = vpack.c.b16 %v456, %v456
  %v521 = vpack.c.b16 %v457, %v457
  %v522 = vpack.c.b16 %v458, %v458
  %v523 = vpack.c.b16 %v459, %v459
  %v524 = vpack.c.b16 %v460, %v460
  %v525 = vpack.c.b16 %v461, %v461
  %v526 = vpack.c.b16 %v462, %v462
  %v527 = vpack.c.b16 %v463, %v463
  %v528 = vpack.c.b16 %v464, %v464
  %v529 = vpack.c.b16 %v465, %v465
  %v530 = vpack.c.b16 %v466, %v466
  %v531 = vpack.c.b16 %v467, %v467
  %v532 = vpack.c.b16 %v468, %v468
  %v533 = vpack.c.b16 %v469, %v469
  %v534 = vpack.c.b16 %v470, %v470
  %v535 = vpack.c.b16 %v471, %v471
  %v536 = vpack.c.b16 %v472, %v472
  %v537 = vpack.c.b16 %v473, %v473
  %v538 = vpack.c.b16 %v474, %v474
  %v539 = vpack.c.b16 %v475, %v475
  %604 = vst [vmem:[%s3] sm:$0xf] %v476
  %605 = vst [vmem:[%s3 + $0x4] sm:$0xf] %v477
  %606 = vst [vmem:[%s3 + $0x8] sm:$0xf] %v478
  %607 = vst [vmem:[%s3 + $0xc] sm:$0xf] %v479
  %608 = vst [vmem:[%s3 + $0x10] sm:$0xf] %v480
  %609 = vst [vmem:[%s3 + $0x14] sm:$0xf] %v481
  %610 = vst [vmem:[%s3 + $0x18] sm:$0xf] %v482
  %611 = vst [vmem:[%s3 + $0x1c] sm:$0xf] %v483
  %612 = vst [vmem:[%s3 + $0x20] sm:$0xf] %v484
  %613 = vst [vmem:[%s3 + $0x24] sm:$0xf] %v485
  %614 = vst [vmem:[%s3 + $0x28] sm:$0xf] %v486
  %615 = vst [vmem:[%s3 + $0x2c] sm:$0xf] %v487
  %616 = vst [vmem:[%s3 + $0x30] sm:$0xf] %v488
  %617 = vst [vmem:[%s3 + $0x34] sm:$0xf] %v489
  %618 = vst [vmem:[%s3 + $0x38] sm:$0xf] %v490
  %619 = vst [vmem:[%s3 + $0x3c] sm:$0xf] %v491
  %620 = vst [vmem:[%s3 + $0x40] sm:$0xf] %v492
  %621 = vst [vmem:[%s3 + $0x44] sm:$0xf] %v493
  %622 = vst [vmem:[%s3 + $0x48] sm:$0xf] %v494
  %623 = vst [vmem:[%s3 + $0x4c] sm:$0xf] %v495
  %624 = vst [vmem:[%s3 + $0x50] sm:$0xf] %v496
  %625 = vst [vmem:[%s3 + $0x54] sm:$0xf] %v497
  %626 = vst [vmem:[%s3 + $0x58] sm:$0xf] %v498
  %627 = vst [vmem:[%s3 + $0x5c] sm:$0xf] %v499
  %628 = vst [vmem:[%s3 + $0x60] sm:$0xf] %v500
  %629 = vst [vmem:[%s3 + $0x64] sm:$0xf] %v501
  %630 = vst [vmem:[%s3 + $0x68] sm:$0xf] %v502
  %631 = vst [vmem:[%s3 + $0x6c] sm:$0xf] %v503
  %632 = vst [vmem:[%s3 + $0x70] sm:$0xf] %v504
  %633 = vst [vmem:[%s3 + $0x74] sm:$0xf] %v505
  %634 = vst [vmem:[%s3 + $0x78] sm:$0xf] %v506
  %635 = vst [vmem:[%s3 + $0x7c] sm:$0xf] %v507
  %636 = vst [vmem:[%s3 + $0x80] sm:$0xf] %v508
  %637 = vst [vmem:[%s3 + $0x84] sm:$0xf] %v509
  %638 = vst [vmem:[%s3 + $0x88] sm:$0xf] %v510
  %639 = vst [vmem:[%s3 + $0x8c] sm:$0xf] %v511
  %640 = vst [vmem:[%s3 + $0x90] sm:$0xf] %v512
  %641 = vst [vmem:[%s3 + $0x94] sm:$0xf] %v513
  %642 = vst [vmem:[%s3 + $0x98] sm:$0xf] %v514
  %643 = vst [vmem:[%s3 + $0x9c] sm:$0xf] %v515
  %644 = vst [vmem:[%s3 + $0xa0] sm:$0xf] %v516
  %645 = vst [vmem:[%s3 + $0xa4] sm:$0xf] %v517
  %646 = vst [vmem:[%s3 + $0xa8] sm:$0xf] %v518
  %647 = vst [vmem:[%s3 + $0xac] sm:$0xf] %v519
  %648 = vst [vmem:[%s3 + $0xb0] sm:$0xf] %v520
  %649 = vst [vmem:[%s3 + $0xb4] sm:$0xf] %v521
  %650 = vst [vmem:[%s3 + $0xb8] sm:$0xf] %v522
  %651 = vst [vmem:[%s3 + $0xbc] sm:$0xf] %v523
  %652 = vst [vmem:[%s3 + $0xc0] sm:$0xf] %v524
  %653 = vst [vmem:[%s3 + $0xc4] sm:$0xf] %v525
  %654 = vst [vmem:[%s3 + $0xc8] sm:$0xf] %v526
  %655 = vst [vmem:[%s3 + $0xcc] sm:$0xf] %v527
  %656 = vst [vmem:[%s3 + $0xd0] sm:$0xf] %v528
  %657 = vst [vmem:[%s3 + $0xd4] sm:$0xf] %v529
  %658 = vst [vmem:[%s3 + $0xd8] sm:$0xf] %v530
  %659 = vst [vmem:[%s3 + $0xdc] sm:$0xf] %v531
  %660 = vst [vmem:[%s3 + $0xe0] sm:$0xf] %v532
  %661 = vst [vmem:[%s3 + $0xe4] sm:$0xf] %v533
  %662 = vst [vmem:[%s3 + $0xe8] sm:$0xf] %v534
  %663 = vst [vmem:[%s3 + $0xec] sm:$0xf] %v535
  %664 = vst [vmem:[%s3 + $0xf0] sm:$0xf] %v536
  %665 = vst [vmem:[%s3 + $0xf4] sm:$0xf] %v537
  %666 = vst [vmem:[%s3 + $0xf8] sm:$0xf] %v538
  %667 = vst [vmem:[%s3 + $0xfc] sm:$0xf] %v539
  // Predicated region
  $region14: #{_residual_block_forward.5} parent=0 // pred_check
    _
  $region15: #{_residual_block_forward.5} parent=0 // pred_check_branch
    %669 = sbr.rel (0) target = $region17
  $region16: #{_residual_block_forward.5} parent=0 // pred_region
    _
  $region17: #{_residual_block_forward.5} parent=0 // pred_fallthru
    _
  // Predicated region
  $region18: #{_residual_block_forward.5} parent=0 // pred_check
    _
  $region19: #{_residual_block_forward.5} parent=0 // pred_check_branch
    %671 = sbr.rel (0) target = $region21
  $region20: #{_residual_block_forward.5} parent=0 // pred_region
    _
  $region21: #{_residual_block_forward.5} parent=0 // pred_fallthru
    _

// kernel: _residual_block_forward.7
$region0: #{_residual_block_forward.7}
  #allocation0 [shape = 'u32[]', space=smem, size = 0x4, offset = 0x4, fixed_abs, tag = 'smem constant byte address 0x4 - core index']
  #allocation1 [shape = 'u32[144,128]{1,0:T(1,128)}', space=vmem, size = 0x12000, scoped, tag = 'internal scratch']
  %s0 = inlined_call_operand.vmem [shape: bf16[512,128], index: 0, kind: input, shape index: {}]
  %s1 = inlined_call_operand.vmem [shape: f32[1,128], index: 1, kind: input, shape index: {}]
  %s2 = inlined_call_operand.vmem [shape: f32[1,128], index: 2, kind: input, shape index: {}]
  %s3 = inlined_call_operand.vmem [shape: bf16[512,128], index: 3, kind: input, shape index: {}]
  %s4 = inlined_call_operand.vmem [shape: f32[512,128], index: 4, kind: output, shape index: {}]
  %s5 = sld [smem:[#allocation0]]
  $region26: #{_residual_block_forward.7} parent=0
    _
  %s7 = ssub.s32 1, %s5
  %s8 = scalar_select 0, %s7, %s5
  // Predicated region
  $region2: #{_residual_block_forward.7} parent=0 // pred_check
    _
  $region3: #{_residual_block_forward.7} parent=0 // pred_check_branch
    %10 = sbr.rel (0) target = $region5
  $region4: #{_residual_block_forward.7} parent=0 // pred_region
    _
  $region5: #{_residual_block_forward.7} parent=0 // pred_fallthru
    _
  // Predicated region
  $region6: #{_residual_block_forward.7} parent=0 // pred_check
    _
  $region7: #{_residual_block_forward.7} parent=0 // pred_check_branch
    %12 = sbr.rel (0) target = $region9
  $region8: #{_residual_block_forward.7} parent=0 // pred_region
    _
  $region9: #{_residual_block_forward.7} parent=0 // pred_fallthru
    _
  // Predicated region
  $region10: #{_residual_block_forward.7} parent=0 // pred_check
    _
  $region11: #{_residual_block_forward.7} parent=0 // pred_check_branch
    %14 = sbr.rel (0) target = $region13
  $region12: #{_residual_block_forward.7} parent=0 // pred_region
    _
  $region13: #{_residual_block_forward.7} parent=0 // pred_fallthru
    _
  // Predicated region
  $region14: #{_residual_block_forward.7} parent=0 // pred_check
    _
  $region15: #{_residual_block_forward.7} parent=0 // pred_check_branch
    %16 = sbr.rel (0) target = $region17
  $region16: #{_residual_block_forward.7} parent=0 // pred_region
    _
  $region17: #{_residual_block_forward.7} parent=0 // pred_fallthru
    _
  %v17 = vld [vmem:[%s0] sm:$0xf]
  %v18 = vld [vmem:[%s0 + $0x4] sm:$0xf]
  %v19 = vld [vmem:[%s0 + $0x8] sm:$0xf]
  %v20 = vld [vmem:[%s0 + $0xc] sm:$0xf]
  %v21 = vld [vmem:[%s0 + $0x10] sm:$0xf]
  %v22 = vld [vmem:[%s0 + $0x14] sm:$0xf]
  %v23 = vld [vmem:[%s0 + $0x18] sm:$0xf]
  %v24 = vld [vmem:[%s0 + $0x1c] sm:$0xf]
  %v25 = vld [vmem:[%s0 + $0x20] sm:$0xf]
  %v26 = vld [vmem:[%s0 + $0x24] sm:$0xf]
  %v27 = vld [vmem:[%s0 + $0x28] sm:$0xf]
  %v28 = vld [vmem:[%s0 + $0x2c] sm:$0xf]
  %v29 = vld [vmem:[%s0 + $0x30] sm:$0xf]
  %v30 = vld [vmem:[%s0 + $0x34] sm:$0xf]
  %v31 = vld [vmem:[%s0 + $0x38] sm:$0xf]
  %v32 = vld [vmem:[%s0 + $0x3c] sm:$0xf]
  %v33 = vld [vmem:[%s0 + $0x40] sm:$0xf]
  %v34 = vld [vmem:[%s0 + $0x44] sm:$0xf]
  %v35 = vld [vmem:[%s0 + $0x48] sm:$0xf]
  %v36 = vld [vmem:[%s0 + $0x4c] sm:$0xf]
  %v37 = vld [vmem:[%s0 + $0x50] sm:$0xf]
  %v38 = vld [vmem:[%s0 + $0x54] sm:$0xf]
  %v39 = vld [vmem:[%s0 + $0x58] sm:$0xf]
  %v40 = vld [vmem:[%s0 + $0x5c] sm:$0xf]
  %v41 = vld [vmem:[%s0 + $0x60] sm:$0xf]
  %v42 = vld [vmem:[%s0 + $0x64] sm:$0xf]
  %v43 = vld [vmem:[%s0 + $0x68] sm:$0xf]
  %v44 = vld [vmem:[%s0 + $0x6c] sm:$0xf]
  %v45 = vld [vmem:[%s0 + $0x70] sm:$0xf]
  %v46 = vld [vmem:[%s0 + $0x74] sm:$0xf]
  %v47 = vld [vmem:[%s0 + $0x78] sm:$0xf]
  %v48 = vld [vmem:[%s0 + $0x7c] sm:$0xf]
  %v49 = vld [vmem:[%s0 + $0x80] sm:$0xf]
  %v50 = vld [vmem:[%s0 + $0x84] sm:$0xf]
  %v51 = vld [vmem:[%s0 + $0x88] sm:$0xf]
  %v52 = vld [vmem:[%s0 + $0x8c] sm:$0xf]
  %v53 = vld [vmem:[%s0 + $0x90] sm:$0xf]
  %v54 = vld [vmem:[%s0 + $0x94] sm:$0xf]
  %v55 = vld [vmem:[%s0 + $0x98] sm:$0xf]
  %v56 = vld [vmem:[%s0 + $0x9c] sm:$0xf]
  %v57 = vld [vmem:[%s0 + $0xa0] sm:$0xf]
  %v58 = vld [vmem:[%s0 + $0xa4] sm:$0xf]
  %v59 = vld [vmem:[%s0 + $0xa8] sm:$0xf]
  %v60 = vld [vmem:[%s0 + $0xac] sm:$0xf]
  %v61 = vld [vmem:[%s0 + $0xb0] sm:$0xf]
  %v62 = vld [vmem:[%s0 + $0xb4] sm:$0xf]
  %v63 = vld [vmem:[%s0 + $0xb8] sm:$0xf]
  %v64 = vld [vmem:[%s0 + $0xbc] sm:$0xf]
  %v65 = vld [vmem:[%s0 + $0xc0] sm:$0xf]
  %v66 = vld [vmem:[%s0 + $0xc4] sm:$0xf]
  %v67 = vld [vmem:[%s0 + $0xc8] sm:$0xf]
  %v68 = vld [vmem:[%s0 + $0xcc] sm:$0xf]
  %v69 = vld [vmem:[%s0 + $0xd0] sm:$0xf]
  %v70 = vld [vmem:[%s0 + $0xd4] sm:$0xf]
  %v71 = vld [vmem:[%s0 + $0xd8] sm:$0xf]
  %v72 = vld [vmem:[%s0 + $0xdc] sm:$0xf]
  %v73 = vld [vmem:[%s0 + $0xe0] sm:$0xf]
  %v74 = vld [vmem:[%s0 + $0xe4] sm:$0xf]
  %v75 = vld [vmem:[%s0 + $0xe8] sm:$0xf]
  %v76 = vld [vmem:[%s0 + $0xec] sm:$0xf]
  %v77 = vld [vmem:[%s0 + $0xf0] sm:$0xf]
  %v78 = vld [vmem:[%s0 + $0xf4] sm:$0xf]
  %v79 = vld [vmem:[%s0 + $0xf8] sm:$0xf]
  %v80 = vld [vmem:[%s0 + $0xfc] sm:$0xf]
  %v81 = vunpack.c.l.bf16 %v17
  %v82 = vunpack.c.l.bf16 %v18
  %v83 = vunpack.c.l.bf16 %v19
  %v84 = vunpack.c.l.bf16 %v20
  %v85 = vunpack.c.l.bf16 %v21
  %v86 = vunpack.c.l.bf16 %v22
  %v87 = vunpack.c.l.bf16 %v23
  %v88 = vunpack.c.l.bf16 %v24
  %v89 = vunpack.c.l.bf16 %v25
  %v90 = vunpack.c.l.bf16 %v26
  %v91 = vunpack.c.l.bf16 %v27
  %v92 = vunpack.c.l.bf16 %v28
  %v93 = vunpack.c.l.bf16 %v29
  %v94 = vunpack.c.l.bf16 %v30
  %v95 = vunpack.c.l.bf16 %v31
  %v96 = vunpack.c.l.bf16 %v32
  %v97 = vunpack.c.l.bf16 %v33
  %v98 = vunpack.c.l.bf16 %v34
  %v99 = vunpack.c.l.bf16 %v35
  %v100 = vunpack.c.l.bf16 %v36
  %v101 = vunpack.c.l.bf16 %v37
  %v102 = vunpack.c.l.bf16 %v38
  %v103 = vunpack.c.l.bf16 %v39
  %v104 = vunpack.c.l.bf16 %v40
  %v105 = vunpack.c.l.bf16 %v41
  %v106 = vunpack.c.l.bf16 %v42
  %v107 = vunpack.c.l.bf16 %v43
  %v108 = vunpack.c.l.bf16 %v44
  %v109 = vunpack.c.l.bf16 %v45
  %v110 = vunpack.c.l.bf16 %v46
  %v111 = vunpack.c.l.bf16 %v47
  %v112 = vunpack.c.l.bf16 %v48
  %v113 = vunpack.c.l.bf16 %v49
  %v114 = vunpack.c.l.bf16 %v50
  %v115 = vunpack.c.l.bf16 %v51
  %v116 = vunpack.c.l.bf16 %v52
  %v117 = vunpack.c.l.bf16 %v53
  %v118 = vunpack.c.l.bf16 %v54
  %v119 = vunpack.c.l.bf16 %v55
  %v120 = vunpack.c.l.bf16 %v56
  %v121 = vunpack.c.l.bf16 %v57
  %v122 = vunpack.c.l.bf16 %v58
  %v123 = vunpack.c.l.bf16 %v59
  %v124 = vunpack.c.l.bf16 %v60
  %v125 = vunpack.c.l.bf16 %v61
  %v126 = vunpack.c.l.bf16 %v62
  %v127 = vunpack.c.l.bf16 %v63
  %v128 = vunpack.c.l.bf16 %v64
  %v129 = vunpack.c.l.bf16 %v65
  %v130 = vunpack.c.l.bf16 %v66
  %v131 = vunpack.c.l.bf16 %v67
  %v132 = vunpack.c.l.bf16 %v68
  %v133 = vunpack.c.l.bf16 %v69
  %v134 = vunpack.c.l.bf16 %v70
  %v135 = vunpack.c.l.bf16 %v71
  %v136 = vunpack.c.l.bf16 %v72
  %v137 = vunpack.c.l.bf16 %v73
  %v138 = vunpack.c.l.bf16 %v74
  %v139 = vunpack.c.l.bf16 %v75
  %v140 = vunpack.c.l.bf16 %v76
  %v141 = vunpack.c.l.bf16 %v77
  %v142 = vunpack.c.l.bf16 %v78
  %v143 = vunpack.c.l.bf16 %v79
  %v144 = vunpack.c.l.bf16 %v80
  %v145 = vld [vmem:[%s1] sm:$0x1]
  %v147 = vlaneseq
  %v148 = vshrl.u32 %v147, 7
  %v149 = vsub.s32 0, %v148
  %v150 = vrot.slane %v145, %v149
  %v152 = vmul.f32 %v81, %v150
  %v153 = vmul.f32 %v82, %v150
  %v154 = vmul.f32 %v83, %v150
  %v155 = vmul.f32 %v84, %v150
  %v156 = vmul.f32 %v85, %v150
  %v157 = vmul.f32 %v86, %v150
  %v158 = vmul.f32 %v87, %v150
  %v159 = vmul.f32 %v88, %v150
  %v160 = vmul.f32 %v89, %v150
  %v161 = vmul.f32 %v90, %v150
  %v162 = vmul.f32 %v91, %v150
  %v163 = vmul.f32 %v92, %v150
  %v164 = vmul.f32 %v93, %v150
  %v165 = vmul.f32 %v94, %v150
  %v166 = vmul.f32 %v95, %v150
  %v167 = vmul.f32 %v96, %v150
  %v168 = vmul.f32 %v97, %v150
  %v169 = vmul.f32 %v98, %v150
  %v170 = vmul.f32 %v99, %v150
  %v171 = vmul.f32 %v100, %v150
  %v172 = vmul.f32 %v101, %v150
  %v173 = vmul.f32 %v102, %v150
  %v174 = vmul.f32 %v103, %v150
  %v175 = vmul.f32 %v104, %v150
  %v176 = vmul.f32 %v105, %v150
  %v177 = vmul.f32 %v106, %v150
  %v178 = vmul.f32 %v107, %v150
  %v179 = vmul.f32 %v108, %v150
  %v180 = vmul.f32 %v109, %v150
  %v181 = vmul.f32 %v110, %v150
  %v182 = vmul.f32 %v111, %v150
  %v183 = vmul.f32 %v112, %v150
  %v184 = vmul.f32 %v113, %v150
  %v185 = vmul.f32 %v114, %v150
  %v186 = vmul.f32 %v115, %v150
  %v187 = vmul.f32 %v116, %v150
  %v188 = vmul.f32 %v117, %v150
  %v189 = vmul.f32 %v118, %v150
  %v190 = vmul.f32 %v119, %v150
  %v191 = vmul.f32 %v120, %v150
  %v192 = vmul.f32 %v121, %v150
  %v193 = vmul.f32 %v122, %v150
  %v194 = vmul.f32 %v123, %v150
  %v195 = vmul.f32 %v124, %v150
  %v196 = vmul.f32 %v125, %v150
  %v197 = vmul.f32 %v126, %v150
  %v198 = vmul.f32 %v127, %v150
  %v199 = vmul.f32 %v128, %v150
  %v200 = vmul.f32 %v129, %v150
  %v201 = vmul.f32 %v130, %v150
  %v202 = vmul.f32 %v131, %v150
  %v203 = vmul.f32 %v132, %v150
  %v204 = vmul.f32 %v133, %v150
  %v205 = vmul.f32 %v134, %v150
  %v206 = vmul.f32 %v135, %v150
  %v207 = vmul.f32 %v136, %v150
  %v208 = vmul.f32 %v137, %v150
  %v209 = vmul.f32 %v138, %v150
  %v210 = vmul.f32 %v139, %v150
  %v211 = vmul.f32 %v140, %v150
  %v212 = vmul.f32 %v141, %v150
  %v213 = vmul.f32 %v142, %v150
  %v214 = vmul.f32 %v143, %v150
  %v215 = vmul.f32 %v144, %v150
  %v216 = vld [vmem:[%s2] sm:$0x1]
  %v218 = vlaneseq
  %v219 = vshrl.u32 %v218, 7
  %v220 = vsub.s32 0, %v219
  %v221 = vrot.slane %v216, %v220
  %v223 = vadd.f32 %v152, %v221
  %v224 = vadd.f32 %v153, %v221
  %v225 = vadd.f32 %v154, %v221
  %v226 = vadd.f32 %v155, %v221
  %v227 = vadd.f32 %v156, %v221
  %v228 = vadd.f32 %v157, %v221
  %v229 = vadd.f32 %v158, %v221
  %v230 = vadd.f32 %v159, %v221
  %v231 = vadd.f32 %v160, %v221
  %v232 = vadd.f32 %v161, %v221
  %v233 = vadd.f32 %v162, %v221
  %v234 = vadd.f32 %v163, %v221
  %v235 = vadd.f32 %v164, %v221
  %v236 = vadd.f32 %v165, %v221
  %v237 = vadd.f32 %v166, %v221
  %v238 = vadd.f32 %v167, %v221
  %v239 = vadd.f32 %v168, %v221
  %v240 = vadd.f32 %v169, %v221
  %v241 = vadd.f32 %v170, %v221
  %v242 = vadd.f32 %v171, %v221
  %v243 = vadd.f32 %v172, %v221
  %v244 = vadd.f32 %v173, %v221
  %v245 = vadd.f32 %v174, %v221
  %v246 = vadd.f32 %v175, %v221
  %v247 = vadd.f32 %v176, %v221
  %v248 = vadd.f32 %v177, %v221
  %v249 = vadd.f32 %v178, %v221
  %v250 = vadd.f32 %v179, %v221
  %v251 = vadd.f32 %v180, %v221
  %v252 = vadd.f32 %v181, %v221
  %v253 = vadd.f32 %v182, %v221
  %v254 = vadd.f32 %v183, %v221
  %v255 = vadd.f32 %v184, %v221
  %v256 = vadd.f32 %v185, %v221
  %v257 = vadd.f32 %v186, %v221
  %v258 = vadd.f32 %v187, %v221
  %v259 = vadd.f32 %v188, %v221
  %v260 = vadd.f32 %v189, %v221
  %v261 = vadd.f32 %v190, %v221
  %v262 = vadd.f32 %v191, %v221
  %v263 = vadd.f32 %v192, %v221
  %v264 = vadd.f32 %v193, %v221
  %v265 = vadd.f32 %v194, %v221
  %v266 = vadd.f32 %v195, %v221
  %v267 = vadd.f32 %v196, %v221
  %v268 = vadd.f32 %v197, %v221
  %v269 = vadd.f32 %v198, %v221
  %v270 = vadd.f32 %v199, %v221
  %v271 = vadd.f32 %v200, %v221
  %v272 = vadd.f32 %v201, %v221
  %v273 = vadd.f32 %v202, %v221
  %v274 = vadd.f32 %v203, %v221
  %v275 = vadd.f32 %v204, %v221
  %v276 = vadd.f32 %v205, %v221
  %v277 = vadd.f32 %v206, %v221
  %v278 = vadd.f32 %v207, %v221
  %v279 = vadd.f32 %v208, %v221
  %v280 = vadd.f32 %v209, %v221
  %v281 = vadd.f32 %v210, %v221
  %v282 = vadd.f32 %v211, %v221
  %v283 = vadd.f32 %v212, %v221
  %v284 = vadd.f32 %v213, %v221
  %v285 = vadd.f32 %v214, %v221
  %v286 = vadd.f32 %v215, %v221
  %v287 = vld [vmem:[%s3] sm:$0xf]
  %v288 = vld [vmem:[%s3 + $0x4] sm:$0xf]
  %v289 = vld [vmem:[%s3 + $0x8] sm:$0xf]
  %v290 = vld [vmem:[%s3 + $0xc] sm:$0xf]
  %v291 = vld [vmem:[%s3 + $0x10] sm:$0xf]
  %v292 = vld [vmem:[%s3 + $0x14] sm:$0xf]
  %v293 = vld [vmem:[%s3 + $0x18] sm:$0xf]
  %v294 = vld [vmem:[%s3 + $0x1c] sm:$0xf]
  %v295 = vld [vmem:[%s3 + $0x20] sm:$0xf]
  %v296 = vld [vmem:[%s3 + $0x24] sm:$0xf]
  %v297 = vld [vmem:[%s3 + $0x28] sm:$0xf]
  %v298 = vld [vmem:[%s3 + $0x2c] sm:$0xf]
  %v299 = vld [vmem:[%s3 + $0x30] sm:$0xf]
  %v300 = vld [vmem:[%s3 + $0x34] sm:$0xf]
  %v301 = vld [vmem:[%s3 + $0x38] sm:$0xf]
  %v302 = vld [vmem:[%s3 + $0x3c] sm:$0xf]
  %v303 = vld [vmem:[%s3 + $0x40] sm:$0xf]
  %v304 = vld [vmem:[%s3 + $0x44] sm:$0xf]
  %v305 = vld [vmem:[%s3 + $0x48] sm:$0xf]
  %v306 = vld [vmem:[%s3 + $0x4c] sm:$0xf]
  %v307 = vld [vmem:[%s3 + $0x50] sm:$0xf]
  %v308 = vld [vmem:[%s3 + $0x54] sm:$0xf]
  %v309 = vld [vmem:[%s3 + $0x58] sm:$0xf]
  %v310 = vld [vmem:[%s3 + $0x5c] sm:$0xf]
  %v311 = vld [vmem:[%s3 + $0x60] sm:$0xf]
  %v312 = vld [vmem:[%s3 + $0x64] sm:$0xf]
  %v313 = vld [vmem:[%s3 + $0x68] sm:$0xf]
  %v314 = vld [vmem:[%s3 + $0x6c] sm:$0xf]
  %v315 = vld [vmem:[%s3 + $0x70] sm:$0xf]
  %v316 = vld [vmem:[%s3 + $0x74] sm:$0xf]
  %v317 = vld [vmem:[%s3 + $0x78] sm:$0xf]
  %v318 = vld [vmem:[%s3 + $0x7c] sm:$0xf]
  %v319 = vld [vmem:[%s3 + $0x80] sm:$0xf]
  %v320 = vld [vmem:[%s3 + $0x84] sm:$0xf]
  %v321 = vld [vmem:[%s3 + $0x88] sm:$0xf]
  %v322 = vld [vmem:[%s3 + $0x8c] sm:$0xf]
  %v323 = vld [vmem:[%s3 + $0x90] sm:$0xf]
  %v324 = vld [vmem:[%s3 + $0x94] sm:$0xf]
  %v325 = vld [vmem:[%s3 + $0x98] sm:$0xf]
  %v326 = vld [vmem:[%s3 + $0x9c] sm:$0xf]
  %v327 = vld [vmem:[%s3 + $0xa0] sm:$0xf]
  %v328 = vld [vmem:[%s3 + $0xa4] sm:$0xf]
  %v329 = vld [vmem:[%s3 + $0xa8] sm:$0xf]
  %v330 = vld [vmem:[%s3 + $0xac] sm:$0xf]
  %v331 = vld [vmem:[%s3 + $0xb0] sm:$0xf]
  %v332 = vld [vmem:[%s3 + $0xb4] sm:$0xf]
  %v333 = vld [vmem:[%s3 + $0xb8] sm:$0xf]
  %v334 = vld [vmem:[%s3 + $0xbc] sm:$0xf]
  %v335 = vld [vmem:[%s3 + $0xc0] sm:$0xf]
  %v336 = vld [vmem:[%s3 + $0xc4] sm:$0xf]
  %v337 = vld [vmem:[%s3 + $0xc8] sm:$0xf]
  %v338 = vld [vmem:[%s3 + $0xcc] sm:$0xf]
  %v339 = vld [vmem:[%s3 + $0xd0] sm:$0xf]
  %v340 = vld [vmem:[%s3 + $0xd4] sm:$0xf]
  %v341 = vld [vmem:[%s3 + $0xd8] sm:$0xf]
  %v342 = vld [vmem:[%s3 + $0xdc] sm:$0xf]
  %v343 = vld [vmem:[%s3 + $0xe0] sm:$0xf]
  %v344 = vld [vmem:[%s3 + $0xe4] sm:$0xf]
  %v345 = vld [vmem:[%s3 + $0xe8] sm:$0xf]
  %v346 = vld [vmem:[%s3 + $0xec] sm:$0xf]
  %v347 = vld [vmem:[%s3 + $0xf0] sm:$0xf]
  %v348 = vld [vmem:[%s3 + $0xf4] sm:$0xf]
  %v349 = vld [vmem:[%s3 + $0xf8] sm:$0xf]
  %v350 = vld [vmem:[%s3 + $0xfc] sm:$0xf]
  %v351 = vunpack.c.l.bf16 %v287
  %v352 = vunpack.c.l.bf16 %v288
  %v353 = vunpack.c.l.bf16 %v289
  %v354 = vunpack.c.l.bf16 %v290
  %v355 = vunpack.c.l.bf16 %v291
  %v356 = vunpack.c.l.bf16 %v292
  %v357 = vunpack.c.l.bf16 %v293
  %v358 = vunpack.c.l.bf16 %v294
  %v359 = vunpack.c.l.bf16 %v295
  %v360 = vunpack.c.l.bf16 %v296
  %v361 = vunpack.c.l.bf16 %v297
  %v362 = vunpack.c.l.bf16 %v298
  %v363 = vunpack.c.l.bf16 %v299
  %v364 = vunpack.c.l.bf16 %v300
  %v365 = vunpack.c.l.bf16 %v301
  %v366 = vunpack.c.l.bf16 %v302
  %v367 = vunpack.c.l.bf16 %v303
  %v368 = vunpack.c.l.bf16 %v304
  %v369 = vunpack.c.l.bf16 %v305
  %v370 = vunpack.c.l.bf16 %v306
  %v371 = vunpack.c.l.bf16 %v307
  %v372 = vunpack.c.l.bf16 %v308
  %v373 = vunpack.c.l.bf16 %v309
  %v374 = vunpack.c.l.bf16 %v310
  %v375 = vunpack.c.l.bf16 %v311
  %v376 = vunpack.c.l.bf16 %v312
  %v377 = vunpack.c.l.bf16 %v313
  %v378 = vunpack.c.l.bf16 %v314
  %v379 = vunpack.c.l.bf16 %v315
  %v380 = vunpack.c.l.bf16 %v316
  %v381 = vunpack.c.l.bf16 %v317
  %v382 = vunpack.c.l.bf16 %v318
  %v383 = vunpack.c.l.bf16 %v319
  %v384 = vunpack.c.l.bf16 %v320
  %v385 = vunpack.c.l.bf16 %v321
  %v386 = vunpack.c.l.bf16 %v322
  %v387 = vunpack.c.l.bf16 %v323
  %v388 = vunpack.c.l.bf16 %v324
  %v389 = vunpack.c.l.bf16 %v325
  %v390 = vunpack.c.l.bf16 %v326
  %v391 = vunpack.c.l.bf16 %v327
  %v392 = vunpack.c.l.bf16 %v328
  %v393 = vunpack.c.l.bf16 %v329
  %v394 = vunpack.c.l.bf16 %v330
  %v395 = vunpack.c.l.bf16 %v331
  %v396 = vunpack.c.l.bf16 %v332
  %v397 = vunpack.c.l.bf16 %v333
  %v398 = vunpack.c.l.bf16 %v334
  %v399 = vunpack.c.l.bf16 %v335
  %v400 = vunpack.c.l.bf16 %v336
  %v401 = vunpack.c.l.bf16 %v337
  %v402 = vunpack.c.l.bf16 %v338
  %v403 = vunpack.c.l.bf16 %v339
  %v404 = vunpack.c.l.bf16 %v340
  %v405 = vunpack.c.l.bf16 %v341
  %v406 = vunpack.c.l.bf16 %v342
  %v407 = vunpack.c.l.bf16 %v343
  %v408 = vunpack.c.l.bf16 %v344
  %v409 = vunpack.c.l.bf16 %v345
  %v410 = vunpack.c.l.bf16 %v346
  %v411 = vunpack.c.l.bf16 %v347
  %v412 = vunpack.c.l.bf16 %v348
  %v413 = vunpack.c.l.bf16 %v349
  %v414 = vunpack.c.l.bf16 %v350
  %v415 = vadd.f32 %v223, %v351
  %v416 = vadd.f32 %v224, %v352
  %v417 = vadd.f32 %v225, %v353
  %v418 = vadd.f32 %v226, %v354
  %v419 = vadd.f32 %v227, %v355
  %v420 = vadd.f32 %v228, %v356
  %v421 = vadd.f32 %v229, %v357
  %v422 = vadd.f32 %v230, %v358
  %v423 = vadd.f32 %v231, %v359
  %v424 = vadd.f32 %v232, %v360
  %v425 = vadd.f32 %v233, %v361
  %v426 = vadd.f32 %v234, %v362
  %v427 = vadd.f32 %v235, %v363
  %v428 = vadd.f32 %v236, %v364
  %v429 = vadd.f32 %v237, %v365
  %v430 = vadd.f32 %v238, %v366
  %v431 = vadd.f32 %v239, %v367
  %v432 = vadd.f32 %v240, %v368
  %v433 = vadd.f32 %v241, %v369
  %v434 = vadd.f32 %v242, %v370
  %v435 = vadd.f32 %v243, %v371
  %v436 = vadd.f32 %v244, %v372
  %v437 = vadd.f32 %v245, %v373
  %v438 = vadd.f32 %v246, %v374
  %v439 = vadd.f32 %v247, %v375
  %v440 = vadd.f32 %v248, %v376
  %v441 = vadd.f32 %v249, %v377
  %v442 = vadd.f32 %v250, %v378
  %v443 = vadd.f32 %v251, %v379
  %v444 = vadd.f32 %v252, %v380
  %v445 = vadd.f32 %v253, %v381
  %v446 = vadd.f32 %v254, %v382
  %v447 = vadd.f32 %v255, %v383
  %v448 = vadd.f32 %v256, %v384
  %v449 = vadd.f32 %v257, %v385
  %v450 = vadd.f32 %v258, %v386
  %v451 = vadd.f32 %v259, %v387
  %v452 = vadd.f32 %v260, %v388
  %v453 = vadd.f32 %v261, %v389
  %v454 = vadd.f32 %v262, %v390
  %v455 = vadd.f32 %v263, %v391
  %v456 = vadd.f32 %v264, %v392
  %v457 = vadd.f32 %v265, %v393
  %v458 = vadd.f32 %v266, %v394
  %v459 = vadd.f32 %v267, %v395
  %v460 = vadd.f32 %v268, %v396
  %v461 = vadd.f32 %v269, %v397
  %v462 = vadd.f32 %v270, %v398
  %v463 = vadd.f32 %v271, %v399
  %v464 = vadd.f32 %v272, %v400
  %v465 = vadd.f32 %v273, %v401
  %v466 = vadd.f32 %v274, %v402
  %v467 = vadd.f32 %v275, %v403
  %v468 = vadd.f32 %v276, %v404
  %v469 = vadd.f32 %v277, %v405
  %v470 = vadd.f32 %v278, %v406
  %v471 = vadd.f32 %v279, %v407
  %v472 = vadd.f32 %v280, %v408
  %v473 = vadd.f32 %v281, %v409
  %v474 = vadd.f32 %v282, %v410
  %v475 = vadd.f32 %v283, %v411
  %v476 = vadd.f32 %v284, %v412
  %v477 = vadd.f32 %v285, %v413
  %v478 = vadd.f32 %v286, %v414
  %v479 = vmax.f32 %v415, 0.0
  %v480 = vmax.f32 %v416, 0.0
  %v481 = vmax.f32 %v417, 0.0
  %v482 = vmax.f32 %v418, 0.0
  %v483 = vmax.f32 %v419, 0.0
  %v484 = vmax.f32 %v420, 0.0
  %v485 = vmax.f32 %v421, 0.0
  %v486 = vmax.f32 %v422, 0.0
  %v487 = vmax.f32 %v423, 0.0
  %v488 = vmax.f32 %v424, 0.0
  %v489 = vmax.f32 %v425, 0.0
  %v490 = vmax.f32 %v426, 0.0
  %v491 = vmax.f32 %v427, 0.0
  %v492 = vmax.f32 %v428, 0.0
  %v493 = vmax.f32 %v429, 0.0
  %v494 = vmax.f32 %v430, 0.0
  %v495 = vmax.f32 %v431, 0.0
  %v496 = vmax.f32 %v432, 0.0
  %v497 = vmax.f32 %v433, 0.0
  %v498 = vmax.f32 %v434, 0.0
  %v499 = vmax.f32 %v435, 0.0
  %v500 = vmax.f32 %v436, 0.0
  %v501 = vmax.f32 %v437, 0.0
  %v502 = vmax.f32 %v438, 0.0
  %v503 = vmax.f32 %v439, 0.0
  %v504 = vmax.f32 %v440, 0.0
  %v505 = vmax.f32 %v441, 0.0
  %v506 = vmax.f32 %v442, 0.0
  %v507 = vmax.f32 %v443, 0.0
  %v508 = vmax.f32 %v444, 0.0
  %v509 = vmax.f32 %v445, 0.0
  %v510 = vmax.f32 %v446, 0.0
  %v511 = vmax.f32 %v447, 0.0
  %v512 = vmax.f32 %v448, 0.0
  %v513 = vmax.f32 %v449, 0.0
  %v514 = vmax.f32 %v450, 0.0
  %v515 = vmax.f32 %v451, 0.0
  %v516 = vmax.f32 %v452, 0.0
  %v517 = vmax.f32 %v453, 0.0
  %v518 = vmax.f32 %v454, 0.0
  %v519 = vmax.f32 %v455, 0.0
  %v520 = vmax.f32 %v456, 0.0
  %v521 = vmax.f32 %v457, 0.0
  %v522 = vmax.f32 %v458, 0.0
  %v523 = vmax.f32 %v459, 0.0
  %v524 = vmax.f32 %v460, 0.0
  %v525 = vmax.f32 %v461, 0.0
  %v526 = vmax.f32 %v462, 0.0
  %v527 = vmax.f32 %v463, 0.0
  %v528 = vmax.f32 %v464, 0.0
  %v529 = vmax.f32 %v465, 0.0
  %v530 = vmax.f32 %v466, 0.0
  %v531 = vmax.f32 %v467, 0.0
  %v532 = vmax.f32 %v468, 0.0
  %v533 = vmax.f32 %v469, 0.0
  %v534 = vmax.f32 %v470, 0.0
  %v535 = vmax.f32 %v471, 0.0
  %v536 = vmax.f32 %v472, 0.0
  %v537 = vmax.f32 %v473, 0.0
  %v538 = vmax.f32 %v474, 0.0
  %v539 = vmax.f32 %v475, 0.0
  %v540 = vmax.f32 %v476, 0.0
  %v541 = vmax.f32 %v477, 0.0
  %v542 = vmax.f32 %v478, 0.0
  %543 = vst [vmem:[%s4] sm:$0xff] %v479
  %544 = vst [vmem:[%s4 + $0x8] sm:$0xff] %v480
  %545 = vst [vmem:[%s4 + $0x10] sm:$0xff] %v481
  %546 = vst [vmem:[%s4 + $0x18] sm:$0xff] %v482
  %547 = vst [vmem:[%s4 + $0x20] sm:$0xff] %v483
  %548 = vst [vmem:[%s4 + $0x28] sm:$0xff] %v484
  %549 = vst [vmem:[%s4 + $0x30] sm:$0xff] %v485
  %550 = vst [vmem:[%s4 + $0x38] sm:$0xff] %v486
  %551 = vst [vmem:[%s4 + $0x40] sm:$0xff] %v487
  %552 = vst [vmem:[%s4 + $0x48] sm:$0xff] %v488
  %553 = vst [vmem:[%s4 + $0x50] sm:$0xff] %v489
  %554 = vst [vmem:[%s4 + $0x58] sm:$0xff] %v490
  %555 = vst [vmem:[%s4 + $0x60] sm:$0xff] %v491
  %556 = vst [vmem:[%s4 + $0x68] sm:$0xff] %v492
  %557 = vst [vmem:[%s4 + $0x70] sm:$0xff] %v493
  %558 = vst [vmem:[%s4 + $0x78] sm:$0xff] %v494
  %559 = vst [vmem:[%s4 + $0x80] sm:$0xff] %v495
  %560 = vst [vmem:[%s4 + $0x88] sm:$0xff] %v496
  %561 = vst [vmem:[%s4 + $0x90] sm:$0xff] %v497
  %562 = vst [vmem:[%s4 + $0x98] sm:$0xff] %v498
  %563 = vst [vmem:[%s4 + $0xa0] sm:$0xff] %v499
  %564 = vst [vmem:[%s4 + $0xa8] sm:$0xff] %v500
  %565 = vst [vmem:[%s4 + $0xb0] sm:$0xff] %v501
  %566 = vst [vmem:[%s4 + $0xb8] sm:$0xff] %v502
  %567 = vst [vmem:[%s4 + $0xc0] sm:$0xff] %v503
  %568 = vst [vmem:[%s4 + $0xc8] sm:$0xff] %v504
  %569 = vst [vmem:[%s4 + $0xd0] sm:$0xff] %v505
  %570 = vst [vmem:[%s4 + $0xd8] sm:$0xff] %v506
  %571 = vst [vmem:[%s4 + $0xe0] sm:$0xff] %v507
  %572 = vst [vmem:[%s4 + $0xe8] sm:$0xff] %v508
  %573 = vst [vmem:[%s4 + $0xf0] sm:$0xff] %v509
  %574 = vst [vmem:[%s4 + $0xf8] sm:$0xff] %v510
  %575 = vst [vmem:[%s4 + $0x100] sm:$0xff] %v511
  %576 = vst [vmem:[%s4 + $0x108] sm:$0xff] %v512
  %577 = vst [vmem:[%s4 + $0x110] sm:$0xff] %v513
  %578 = vst [vmem:[%s4 + $0x118] sm:$0xff] %v514
  %579 = vst [vmem:[%s4 + $0x120] sm:$0xff] %v515
  %580 = vst [vmem:[%s4 + $0x128] sm:$0xff] %v516
  %581 = vst [vmem:[%s4 + $0x130] sm:$0xff] %v517
  %582 = vst [vmem:[%s4 + $0x138] sm:$0xff] %v518
  %583 = vst [vmem:[%s4 + $0x140] sm:$0xff] %v519
  %584 = vst [vmem:[%s4 + $0x148] sm:$0xff] %v520
  %585 = vst [vmem:[%s4 + $0x150] sm:$0xff] %v521
  %586 = vst [vmem:[%s4 + $0x158] sm:$0xff] %v522
  %587 = vst [vmem:[%s4 + $0x160] sm:$0xff] %v523
  %588 = vst [vmem:[%s4 + $0x168] sm:$0xff] %v524
  %589 = vst [vmem:[%s4 + $0x170] sm:$0xff] %v525
  %590 = vst [vmem:[%s4 + $0x178] sm:$0xff] %v526
  %591 = vst [vmem:[%s4 + $0x180] sm:$0xff] %v527
  %592 = vst [vmem:[%s4 + $0x188] sm:$0xff] %v528
  %593 = vst [vmem:[%s4 + $0x190] sm:$0xff] %v529
  %594 = vst [vmem:[%s4 + $0x198] sm:$0xff] %v530
  %595 = vst [vmem:[%s4 + $0x1a0] sm:$0xff] %v531
  %596 = vst [vmem:[%s4 + $0x1a8] sm:$0xff] %v532
  %597 = vst [vmem:[%s4 + $0x1b0] sm:$0xff] %v533
  %598 = vst [vmem:[%s4 + $0x1b8] sm:$0xff] %v534
  %599 = vst [vmem:[%s4 + $0x1c0] sm:$0xff] %v535
  %600 = vst [vmem:[%s4 + $0x1c8] sm:$0xff] %v536
  %601 = vst [vmem:[%s4 + $0x1d0] sm:$0xff] %v537
  %602 = vst [vmem:[%s4 + $0x1d8] sm:$0xff] %v538
  %603 = vst [vmem:[%s4 + $0x1e0] sm:$0xff] %v539
  %604 = vst [vmem:[%s4 + $0x1e8] sm:$0xff] %v540
  %605 = vst [vmem:[%s4 + $0x1f0] sm:$0xff] %v541
  %606 = vst [vmem:[%s4 + $0x1f8] sm:$0xff] %v542
  // Predicated region
  $region18: #{_residual_block_forward.7} parent=0 // pred_check
    _
  $region19: #{_residual_block_forward.7} parent=0 // pred_check_branch
    %608 = sbr.rel (0) target = $region21
  $region20: #{_residual_block_forward.7} parent=0 // pred_region
    _
  $region21: #{_residual_block_forward.7} parent=0 // pred_fallthru
    _
  // Predicated region
  $region22: #{_residual_block_forward.7} parent=0 // pred_check
    _
  $region23: #{_residual_block_forward.7} parent=0 // pred_check_branch
    %610 = sbr.rel (0) target = $region25
  $region24: #{_residual_block_forward.7} parent=0 // pred_region
    _
  $region25: #{_residual_block_forward.7} parent=0 // pred_fallthru
    _

// kernel: _residual_block_forward.4
$region0: #{_residual_block_forward.4}
  #allocation0 [shape = 'u32[]', space=smem, size = 0x4, offset = 0x4, fixed_abs, tag = 'smem constant byte address 0x4 - core index']
  #allocation1 [shape = 'u32[144,128]{1,0:T(1,128)}', space=vmem, size = 0x12000, scoped, tag = 'internal scratch']
  %s0 = inlined_call_operand.vmem [shape: bf16[2,18,18,128], index: 0, kind: input, shape index: {}]
  %s1 = inlined_call_operand.vmem [shape: bf16[1152,128], index: 1, kind: input, shape index: {}]
  %s2 = inlined_call_operand.vmem [shape: bf16[512,128], index: 2, kind: output, shape index: {0}]
  %s3 = inlined_call_operand.vmem [shape: f32[2,1,2,128], index: 3, kind: output, shape index: {1}]
  %4 = xla_tuple %s2, %s3
  %s5 = sld [smem:[#allocation0]]
  $region49: #{_residual_block_forward.4} parent=0
    _
  %s7 = ssub.s32 1, %s5
  %s8 = scalar_select 0, %s7, %s5
  loop: start=0, step=1, limit=4
  $region2: #{_residual_block_forward.4} parent=0 // loop_pre_header
    _
  $region3: #{_residual_block_forward.4} parent=0 // loop_header
    %s10 = sphi 0, %s14
    %p11 = scmp.ge.s32.totalorder %s10, 4
    %s17 = sphi 0, %s29
    %s18 = sphi 0, %s25
    %s19 = sphi 0, %s17
    %s20 = sphi 0, %s18
    %s21 = sphi 0, %s19
    %s22 = sphi 0, %s20
    %s32 = sphi 0, %s34
    %s35 = sphi 0, %s32
    %s36 = sphi 0, %s35
    %s52 = sphi 0, %s36
    %s56 = sphi 0, %s56
    %s58 = sphi 0, %s56
    %s59 = sphi 0, %s58
    %s73 = sphi 0, %s59
    %s81 = sphi 0, %s83
    %s84 = sphi 0, %s81
    %s85 = sphi 0, %s84
    %s101 = sphi 0, %s85
    %s109 = sphi 0, %s111
    %s112 = sphi 0, %s109
    %s113 = sphi 0, %s112
    %s129 = sphi 0, %s113
  $region4: #{_residual_block_forward.4} parent=0 // loop_header_branch
    %13 = sbr.rel (%p11) target = $region8
  $region5: #{_residual_block_forward.4} parent=0 // loop_body
    %s15 = ssub.s32 %s10, 1
    %s16 = ssub.s32 %s10, 2
    %s23 = sadd.s32 1, %s18
    %p24 = scmp.ge.s32.totalorder %s23, 1
    %s25 = scalar_select %p24, 0, %s23
    %s26 = sadd.s32 1, %s17
    %s27 = scalar_select %p24, %s26, %s17
    %p28 = scmp.ge.s32.totalorder %s27, 2
    %s29 = scalar_select %p28, 0, %s27
    %s30 = ssub.s32 %s17, %s29
    %p31 = scmp.eq.s32.totalorder %s30, 0
    %s33 = sadd.s32 %s32, 1
    %s34 = scalar_select %p31, %s32, %s33
    %p37 = pneg %p31
    %p38 = scmp.eq.s32.totalorder %s10, 1
    %p39 = por %p37, %p38
    %p40 = scmp.ne.s32.totalorder %s32, %s35
    %p41 = scmp.eq.s32.totalorder %s10, 0
    %p42 = por %p40, %p41
    %p43 = scmp.ne.s32.totalorder %s32, %s35
    %p44 = scmp.eq.s32.totalorder %s15, 1
    %p45 = por %p43, %p44
    %p46 = scmp.ne.s32.totalorder %s35, %s36
    %p47 = scmp.eq.s32.totalorder %s15, 0
    %p48 = por %p46, %p47
    %p49 = scmp.ne.s32.totalorder %s35, %s36
    %p50 = scmp.eq.s32.totalorder %s16, 1
    %p51 = por %p49, %p50
    %p53 = scmp.ne.s32.totalorder %s36, %s52
    %p54 = scmp.eq.s32.totalorder %s16, 0
    %p55 = por %p53, %p54
    %s57 = sadd.s32 %s56, 1
    %p60 = scmp.eq.s32.totalorder %s10, 1
    %p61 = scmp.ne.s32.totalorder %s56, %s58
    %p62 = scmp.eq.s32.totalorder %s10, 0
    %p63 = por %p61, %p62
    %p64 = scmp.ne.s32.totalorder %s56, %s58
    %p65 = scmp.eq.s32.totalorder %s15, 1
    %p66 = por %p64, %p65
    %p67 = scmp.ne.s32.totalorder %s58, %s59
    %p68 = scmp.eq.s32.totalorder %s15, 0
    %p69 = por %p67, %p68
    %p70 = scmp.ne.s32.totalorder %s58, %s59
    %p71 = scmp.eq.s32.totalorder %s16, 1
    %p72 = por %p70, %p71
    %p74 = scmp.ne.s32.totalorder %s59, %s73
    %p75 = scmp.eq.s32.totalorder %s16, 0
    %p76 = por %p74, %p75
    %s77 = sadd.s32 %s17, %s18
    %s78 = sadd.s32 %s29, %s25
    %s79 = ssub.s32 %s77, %s78
    %p80 = scmp.eq.s32.totalorder %s79, 0
    %s82 = sadd.s32 %s81, 1
    %s83 = scalar_select %p80, %s81, %s82
    %p86 = pneg %p80
    %p87 = scmp.eq.s32.totalorder %s10, 1
    %p88 = por %p86, %p87
    %p89 = scmp.ne.s32.totalorder %s81, %s84
    %p90 = scmp.eq.s32.totalorder %s10, 0
    %p91 = por %p89, %p90
    %p92 = scmp.ne.s32.totalorder %s81, %s84
    %p93 = scmp.eq.s32.totalorder %s15, 1
    %p94 = por %p92, %p93
    %p95 = scmp.ne.s32.totalorder %s84, %s85
    %p96 = scmp.eq.s32.totalorder %s15, 0
    %p97 = por %p95, %p96
    %p98 = scmp.ne.s32.totalorder %s84, %s85
    %p99 = scmp.eq.s32.totalorder %s16, 1
    %p100 = por %p98, %p99
    %p102 = scmp.ne.s32.totalorder %s85, %s101
    %p103 = scmp.eq.s32.totalorder %s16, 0
    %p104 = por %p102, %p103
    %s105 = ssub.s32 %s17, %s29
    %s106 = ssub.s32 %s18, %s25
    %s107 = sor.u32 %s105, %s106
    %p108 = scmp.eq.s32.totalorder %s107, 0
    %s110 = sadd.s32 %s109, 1
    %s111 = scalar_select %p108, %s109, %s110
    %p114 = pneg %p108
    %p115 = scmp.eq.s32.totalorder %s10, 1
    %p116 = por %p114, %p115
    %p117 = scmp.ne.s32.totalorder %s109, %s112
    %p118 = scmp.eq.s32.totalorder %s10, 0
    %p119 = por %p117, %p118
    %p120 = scmp.ne.s32.totalorder %s109, %s112
    %p121 = scmp.eq.s32.totalorder %s15, 1
    %p122 = por %p120, %p121
    %p123 = scmp.ne.s32.totalorder %s112, %s113
    %p124 = scmp.eq.s32.totalorder %s15, 0
    %p125 = por %p123, %p124
    %p126 = scmp.ne.s32.totalorder %s112, %s113
    %p127 = scmp.eq.s32.totalorder %s16, 1
    %p128 = por %p126, %p127
    %p130 = scmp.ne.s32.totalorder %s113, %s129
    %p131 = scmp.eq.s32.totalorder %s16, 0
    %p132 = por %p130, %p131
    %p133 = scmp.le.s32.totalorder 1, %s10
    %p134 = scmp.lt.s32.totalorder %s10, 3
    %p135 = pnand %p133, %p134
    %p136 = pneg %p135
    // Predicated region
    $region9: #{_residual_block_forward.4} parent=5 // pred_check
      _
    $region10: #{_residual_block_forward.4} parent=5 // pred_check_branch
      %138 = sbr.rel (%p135) target = $region12
    $region11: #{_residual_block_forward.4} parent=5 // pred_region
      %s139 = ssub.s32 %s10, 1
      // Predicated region
      $region13: #{_residual_block_forward.4} parent=11 // pred_check
        %p140 = pneg %p69
      $region14: #{_residual_block_forward.4} parent=11 // pred_check_branch
        %142 = sbr.rel (%p140) target = $region16
      $region15: #{_residual_block_forward.4} parent=11 // pred_region
        _
      $region16: #{_residual_block_forward.4} parent=11 // pred_fallthru
        _
    $region12: #{_residual_block_forward.4} parent=5 // pred_fallthru
      _
    %p143 = scmp.lt.s32.totalorder %s10, 2
    // Predicated region
    $region17: #{_residual_block_forward.4} parent=5 // pred_check
      %p144 = pneg %p143
    $region18: #{_residual_block_forward.4} parent=5 // pred_check_branch
      %146 = sbr.rel (%p144) target = $region20
    $region19: #{_residual_block_forward.4} parent=5 // pred_region
      // Predicated region
      $region21: #{_residual_block_forward.4} parent=19 // pred_check
        %p147 = pneg %p42
      $region22: #{_residual_block_forward.4} parent=19 // pred_check_branch
        %149 = sbr.rel (%p147) target = $region24
      $region23: #{_residual_block_forward.4} parent=19 // pred_region
        %p150 = scmp.lt.s32.totalorder %s17, 1
        %s151 = scalar_select %p150, %s17, 1
        %s152 = smul.addr %s151, 54
        %s153 = smul.addr %s152, 4
        %s154 = scalar_lea.vmem %s0, %s153
      $region24: #{_residual_block_forward.4} parent=19 // pred_fallthru
        _
    $region20: #{_residual_block_forward.4} parent=5 // pred_fallthru
      _
    %p155 = scmp.le.s32.totalorder 1, %s10
    %p156 = scmp.lt.s32.totalorder %s10, 3
    %p157 = pnand %p155, %p156
    %p158 = pneg %p157
    // Predicated region
    $region25: #{_residual_block_forward.4} parent=5 // pred_check
      _
    $region26: #{_residual_block_forward.4} parent=5 // pred_check_branch
      %160 = sbr.rel (%p157) target = $region28
    $region27: #{_residual_block_forward.4} parent=5 // pred_region
      %s161 = ssub.s32 %s10, 1
      %p162 = scmp.lt.s32.totalorder %s19, 1
      %s163 = scalar_select %p162, %s19, 1
      %s164 = smul.addr %s163, 54
      %s165 = smul.addr %s164, 4
      %s166 = scalar_lea.vmem %s0, %s165
      %p167 = pneg %p48
      %p168 = pneg %p45
      %p169 = pneg %p69
      %p170 = pneg %p66
      %p171 = pneg %p97
      %p172 = pneg %p94
      %s173 = sadd.s32 %s19, %s20
      %s174 = smul.u32 32, %s173
      %p175 = scmp.lt.s32.totalorder %s174, 63
      %s176 = scalar_select %p175, %s174, 63
      %s177 = smul.addr %s176, 4
      %s178 = scalar_lea.vmem %s2, %s177
      %p179 = pneg %p125
      %p180 = pneg %p122
      %p181 = scmp.lt.s32.totalorder %s19, 1
      %s182 = scalar_select %p181, %s19, 1
      %p183 = scmp.lt.s32.totalorder %s20, 0
      %s184 = scalar_select %p183, %s20, 0
      %s185 = sadd.s32 %s184, %s182
      %s186 = smul.addr %s185, 2
      %s187 = scalar_lea.vmem %s3, %s186
      %p188 = scmp.lt.s32.totalorder %s19, 1
      %s189 = scalar_select %p188, %s19, 1
      %s190 = smul.addr %s189, 54
      %s191 = smul.addr %s190, 4
      %s192 = scalar_lea.vmem %s0, %s191
      %s193 = sadd.s32 %s19, %s20
      %s194 = smul.u32 32, %s193
      %p195 = scmp.lt.s32.totalorder %s194, 63
      %s196 = scalar_select %p195, %s194, 63
      %s197 = smul.addr %s196, 4
      %s198 = scalar_lea.vmem %s2, %s197
      %s199 = sadd.s32 %s19, %s20
      %s200 = smul.u32 32, %s199
      %p201 = scmp.lt.s32.totalorder %s19, 1
      %s202 = scalar_select %p201, %s19, 1
      %p203 = scmp.lt.s32.totalorder %s20, 0
      %s204 = scalar_select %p203, %s20, 0
      %s205 = sadd.s32 %s204, %s202
      %s206 = smul.addr %s205, 2
      %s207 = scalar_lea.vmem %s3, %s206
      %s209 = smul.u32 %s20, 16
      %s210 = smul.u32 %s209, 3
      %s211 = smul.addr %s210, 4
      %s212 = scalar_lea.vmem %s192, %s211
      %v213 = vld [vmem:[%s212] sm:$0xf]
      %v214 = vld [vmem:[%s212 + $0x4] sm:$0xf]
      %v215 = vld [vmem:[%s212 + $0xc] sm:$0xf]
      %v216 = vld [vmem:[%s212 + $0x10] sm:$0xf]
      %v217 = vld [vmem:[%s212 + $0x18] sm:$0xf]
      %v218 = vld [vmem:[%s212 + $0x1c] sm:$0xf]
      %v219 = vld [vmem:[%s212 + $0x24] sm:$0xf]
      %v220 = vld [vmem:[%s212 + $0x28] sm:$0xf]
      %v221 = vld [vmem:[%s212 + $0x30] sm:$0xf]
      %v222 = vld [vmem:[%s212 + $0x34] sm:$0xf]
      %v223 = vld [vmem:[%s212 + $0x3c] sm:$0xf]
      %v224 = vld [vmem:[%s212 + $0x40] sm:$0xf]
      %v225 = vld [vmem:[%s212 + $0x48] sm:$0xf]
      %v226 = vld [vmem:[%s212 + $0x4c] sm:$0xf]
      %v227 = vld [vmem:[%s212 + $0x54] sm:$0xf]
      %v228 = vld [vmem:[%s212 + $0x58] sm:$0xf]
      %v229 = vld [vmem:[%s212 + $0x60] sm:$0xf]
      %v230 = vld [vmem:[%s212 + $0x64] sm:$0xf]
      %v231 = vld [vmem:[%s212 + $0x6c] sm:$0xf]
      %v232 = vld [vmem:[%s212 + $0x70] sm:$0xf]
      %v233 = vld [vmem:[%s212 + $0x78] sm:$0xf]
      %v234 = vld [vmem:[%s212 + $0x7c] sm:$0xf]
      %v235 = vld [vmem:[%s212 + $0x84] sm:$0xf]
      %v236 = vld [vmem:[%s212 + $0x88] sm:$0xf]
      %v237 = vld [vmem:[%s212 + $0x90] sm:$0xf]
      %v238 = vld [vmem:[%s212 + $0x94] sm:$0xf]
      %v239 = vld [vmem:[%s212 + $0x9c] sm:$0xf]
      %v240 = vld [vmem:[%s212 + $0xa0] sm:$0xf]
      %v241 = vld [vmem:[%s212 + $0xa8] sm:$0xf]
      %v242 = vld [vmem:[%s212 + $0xac] sm:$0xf]
      %v243 = vld [vmem:[%s212 + $0xb4] sm:$0xf]
      %v244 = vld [vmem:[%s212 + $0xb8] sm:$0xf]
      %v245 = vld [vmem:[%s212 + $0x8] sm:$0x1]
      %v246 = vld [vmem:[%s212 + $0x14] sm:$0x1]
      %v247 = vld [vmem:[%s212 + $0x20] sm:$0x1]
      %v248 = vld [vmem:[%s212 + $0x2c] sm:$0x1]
      %v249 = vld [vmem:[%s212 + $0x38] sm:$0x1]
      %v250 = vld [vmem:[%s212 + $0x44] sm:$0x1]
      %v251 = vld [vmem:[%s212 + $0x50] sm:$0x1]
      %v252 = vld [vmem:[%s212 + $0x5c] sm:$0x1]
      %v253 = vld [vmem:[%s212 + $0x68] sm:$0x1]
      %v254 = vld [vmem:[%s212 + $0x74] sm:$0x1]
      %v255 = vld [vmem:[%s212 + $0x80] sm:$0x1]
      %v256 = vld [vmem:[%s212 + $0x8c] sm:$0x1]
      %v257 = vld [vmem:[%s212 + $0x98] sm:$0x1]
      %v258 = vld [vmem:[%s212 + $0xa4] sm:$0x1]
      %v259 = vld [vmem:[%s212 + $0xb0] sm:$0x1]
      %v260 = vld [vmem:[%s212 + $0xbc] sm:$0x1]
      %vm261 = vsmask.f32 3328
      %vm262 = vsmask.f32 7440
      %vm263 = vmor %vm261, %vm262
      %v265 = vshrl.u32 %v213, 16
      %v267 = vrot.slane %v265, 4
      %v268 = vshll.u32 %v213, 16
      %v270 = vrot.slane %v268, 5
      %v271 = vor.u32 %v267, %v270
      %v272 = vrot.slane %v271, 4
      %v274 = vshll.u32 %v214, 16
      %v276 = vrot.slane %v274, 5
      %v277 = vsel %vm263, %v272, %v276
      %v278 = vshrl.u32 %v214, 16
      %v280 = vrot.slane %v278, 4
      %v281 = vor.u32 %v280, %v276
      %v282 = vrot.slane %v281, 4
      %v284 = vshll.u32 %v245, 16
      %v286 = vrot.slane %v284, 5
      %v287 = vsel %vm263, %v282, %v286
      %v289 = vshrl.u32 %v215, 16
      %v291 = vrot.slane %v289, 4
      %v292 = vshll.u32 %v215, 16
      %v294 = vrot.slane %v292, 5
      %v295 = vor.u32 %v291, %v294
      %v296 = vrot.slane %v295, 4
      %v298 = vshll.u32 %v216, 16
      %v300 = vrot.slane %v298, 5
      %v301 = vsel %vm263, %v296, %v300
      %v302 = vshrl.u32 %v216, 16
      %v304 = vrot.slane %v302, 4
      %v305 = vor.u32 %v304, %v300
      %v306 = vrot.slane %v305, 4
      %v308 = vshll.u32 %v246, 16
      %v310 = vrot.slane %v308, 5
      %v311 = vsel %vm263, %v306, %v310
      %v313 = vshrl.u32 %v217, 16
      %v315 = vrot.slane %v313, 4
      %v316 = vshll.u32 %v217, 16
      %v318 = vrot.slane %v316, 5
      %v319 = vor.u32 %v315, %v318
      %v320 = vrot.slane %v319, 4
      %v322 = vshll.u32 %v218, 16
      %v324 = vrot.slane %v322, 5
      %v325 = vsel %vm263, %v320, %v324
      %v326 = vshrl.u32 %v218, 16
      %v328 = vrot.slane %v326, 4
      %v329 = vor.u32 %v328, %v324
      %v330 = vrot.slane %v329, 4
      %v332 = vshll.u32 %v247, 16
      %v334 = vrot.slane %v332, 5
      %v335 = vsel %vm263, %v330, %v334
      %v337 = vshrl.u32 %v219, 16
      %v339 = vrot.slane %v337, 4
      %v340 = vshll.u32 %v219, 16
      %v342 = vrot.slane %v340, 5
      %v343 = vor.u32 %v339, %v342
      %v344 = vrot.slane %v343, 4
      %v346 = vshll.u32 %v220, 16
      %v348 = vrot.slane %v346, 5
      %v349 = vsel %vm263, %v344, %v348
      %v350 = vshrl.u32 %v220, 16
      %v352 = vrot.slane %v350, 4
      %v353 = vor.u32 %v352, %v348
      %v354 = vrot.slane %v353, 4
      %v356 = vshll.u32 %v248, 16
      %v358 = vrot.slane %v356, 5
      %v359 = vsel %vm263, %v354, %v358
      %v361 = vshrl.u32 %v221, 16
      %v363 = vrot.slane %v361, 4
      %v364 = vshll.u32 %v221, 16
      %v366 = vrot.slane %v364, 5
      %v367 = vor.u32 %v363, %v366
      %v368 = vrot.slane %v367, 4
      %v370 = vshll.u32 %v222, 16
      %v372 = vrot.slane %v370, 5
      %v373 = vsel %vm263, %v368, %v372
      %v374 = vshrl.u32 %v222, 16
      %v376 = vrot.slane %v374, 4
      %v377 = vor.u32 %v376, %v372
      %v378 = vrot.slane %v377, 4
      %v380 = vshll.u32 %v249, 16
      %v382 = vrot.slane %v380, 5
      %v383 = vsel %vm263, %v378, %v382
      %v385 = vshrl.u32 %v223, 16
      %v387 = vrot.slane %v385, 4
      %v388 = vshll.u32 %v223, 16
      %v390 = vrot.slane %v388, 5
      %v391 = vor.u32 %v387, %v390
      %v392 = vrot.slane %v391, 4
      %v394 = vshll.u32 %v224, 16
      %v396 = vrot.slane %v394, 5
      %v397 = vsel %vm263, %v392, %v396
      %v398 = vshrl.u32 %v224, 16
      %v400 = vrot.slane %v398, 4
      %v401 = vor.u32 %v400, %v396
      %v402 = vrot.slane %v401, 4
      %v404 = vshll.u32 %v250, 16
      %v406 = vrot.slane %v404, 5
      %v407 = vsel %vm263, %v402, %v406
      %v409 = vshrl.u32 %v225, 16
      %v411 = vrot.slane %v409, 4
      %v412 = vshll.u32 %v225, 16
      %v414 = vrot.slane %v412, 5
      %v415 = vor.u32 %v411, %v414
      %v416 = vrot.slane %v415, 4
      %v418 = vshll.u32 %v226, 16
      %v420 = vrot.slane %v418, 5
      %v421 = vsel %vm263, %v416, %v420
      %v422 = vshrl.u32 %v226, 16
      %v424 = vrot.slane %v422, 4
      %v425 = vor.u32 %v424, %v420
      %v426 = vrot.slane %v425, 4
      %v428 = vshll.u32 %v251, 16
      %v430 = vrot.slane %v428, 5
      %v431 = vsel %vm263, %v426, %v430
      %v433 = vshrl.u32 %v227, 16
      %v435 = vrot.slane %v433, 4
      %v436 = vshll.u32 %v227, 16
      %v438 = vrot.slane %v436, 5
      %v439 = vor.u32 %v435, %v438
      %v440 = vrot.slane %v439, 4
      %v442 = vshll.u32 %v228, 16
      %v444 = vrot.slane %v442, 5
      %v445 = vsel %vm263, %v440, %v444
      %v446 = vshrl.u32 %v228, 16
      %v448 = vrot.slane %v446, 4
      %v449 = vor.u32 %v448, %v444
      %v450 = vrot.slane %v449, 4
      %v452 = vshll.u32 %v252, 16
      %v454 = vrot.slane %v452, 5
      %v455 = vsel %vm263, %v450, %v454
      %v457 = vshrl.u32 %v229, 16
      %v459 = vrot.slane %v457, 4
      %v460 = vshll.u32 %v229, 16
      %v462 = vrot.slane %v460, 5
      %v463 = vor.u32 %v459, %v462
      %v464 = vrot.slane %v463, 4
      %v466 = vshll.u32 %v230, 16
      %v468 = vrot.slane %v466, 5
      %v469 = vsel %vm263, %v464, %v468
      %v470 = vshrl.u32 %v230, 16
      %v472 = vrot.slane %v470, 4
      %v473 = vor.u32 %v472, %v468
      %v474 = vrot.slane %v473, 4
      %v476 = vshll.u32 %v253, 16
      %v478 = vrot.slane %v476, 5
      %v479 = vsel %vm263, %v474, %v478
      %v481 = vshrl.u32 %v231, 16
      %v483 = vrot.slane %v481, 4
      %v484 = vshll.u32 %v231, 16
      %v486 = vrot.slane %v484, 5
      %v487 = vor.u32 %v483, %v486
      %v488 = vrot.slane %v487, 4
      %v490 = vshll.u32 %v232, 16
      %v492 = vrot.slane %v490, 5
      %v493 = vsel %vm263, %v488, %v492
      %v494 = vshrl.u32 %v232, 16
      %v496 = vrot.slane %v494, 4
      %v497 = vor.u32 %v496, %v492
      %v498 = vrot.slane %v497, 4
      %v500 = vshll.u32 %v254, 16
      %v502 = vrot.slane %v500, 5
      %v503 = vsel %vm263, %v498, %v502
      %v505 = vshrl.u32 %v233, 16
      %v507 = vrot.slane %v505, 4
      %v508 = vshll.u32 %v233, 16
      %v510 = vrot.slane %v508, 5
      %v511 = vor.u32 %v507, %v510
      %v512 = vrot.slane %v511, 4
      %v514 = vshll.u32 %v234, 16
      %v516 = vrot.slane %v514, 5
      %v517 = vsel %vm263, %v512, %v516
      %v518 = vshrl.u32 %v234, 16
      %v520 = vrot.slane %v518, 4
      %v521 = vor.u32 %v520, %v516
      %v522 = vrot.slane %v521, 4
      %v524 = vshll.u32 %v255, 16
      %v526 = vrot.slane %v524, 5
      %v527 = vsel %vm263, %v522, %v526
      %v529 = vshrl.u32 %v235, 16
      %v531 = vrot.slane %v529, 4
      %v532 = vshll.u32 %v235, 16
      %v534 = vrot.slane %v532, 5
      %v535 = vor.u32 %v531, %v534
      %v536 = vrot.slane %v535, 4
      %v538 = vshll.u32 %v236, 16
      %v540 = vrot.slane %v538, 5
      %v541 = vsel %vm263, %v536, %v540
      %v542 = vshrl.u32 %v236, 16
      %v544 = vrot.slane %v542, 4
      %v545 = vor.u32 %v544, %v540
      %v546 = vrot.slane %v545, 4
      %v548 = vshll.u32 %v256, 16
      %v550 = vrot.slane %v548, 5
      %v551 = vsel %vm263, %v546, %v550
      %v553 = vshrl.u32 %v237, 16
      %v555 = vrot.slane %v553, 4
      %v556 = vshll.u32 %v237, 16
      %v558 = vrot.slane %v556, 5
      %v559 = vor.u32 %v555, %v558
      %v560 = vrot.slane %v559, 4
      %v562 = vshll.u32 %v238, 16
      %v564 = vrot.slane %v562, 5
      %v565 = vsel %vm263, %v560, %v564
      %v566 = vshrl.u32 %v238, 16
      %v568 = vrot.slane %v566, 4
      %v569 = vor.u32 %v568, %v564
      %v570 = vrot.slane %v569, 4
      %v572 = vshll.u32 %v257, 16
      %v574 = vrot.slane %v572, 5
      %v575 = vsel %vm263, %v570, %v574
      %v577 = vshrl.u32 %v239, 16
      %v579 = vrot.slane %v577, 4
      %v580 = vshll.u32 %v239, 16
      %v582 = vrot.slane %v580, 5
      %v583 = vor.u32 %v579, %v582
      %v584 = vrot.slane %v583, 4
      %v586 = vshll.u32 %v240, 16
      %v588 = vrot.slane %v586, 5
      %v589 = vsel %vm263, %v584, %v588
      %v590 = vshrl.u32 %v240, 16
      %v592 = vrot.slane %v590, 4
      %v593 = vor.u32 %v592, %v588
      %v594 = vrot.slane %v593, 4
      %v596 = vshll.u32 %v258, 16
      %v598 = vrot.slane %v596, 5
      %v599 = vsel %vm263, %v594, %v598
      %v601 = vshrl.u32 %v241, 16
      %v603 = vrot.slane %v601, 4
      %v604 = vshll.u32 %v241, 16
      %v606 = vrot.slane %v604, 5
      %v607 = vor.u32 %v603, %v606
      %v608 = vrot.slane %v607, 4
      %v610 = vshll.u32 %v242, 16
      %v612 = vrot.slane %v610, 5
      %v613 = vsel %vm263, %v608, %v612
      %v614 = vshrl.u32 %v242, 16
      %v616 = vrot.slane %v614, 4
      %v617 = vor.u32 %v616, %v612
      %v618 = vrot.slane %v617, 4
      %v620 = vshll.u32 %v259, 16
      %v622 = vrot.slane %v620, 5
      %v623 = vsel %vm263, %v618, %v622
      %v625 = vshrl.u32 %v243, 16
      %v627 = vrot.slane %v625, 4
      %v628 = vshll.u32 %v243, 16
      %v630 = vrot.slane %v628, 5
      %v631 = vor.u32 %v627, %v630
      %v632 = vrot.slane %v631, 4
      %v634 = vshll.u32 %v244, 16
      %v636 = vrot.slane %v634, 5
      %v637 = vsel %vm263, %v632, %v636
      %v638 = vshrl.u32 %v244, 16
      %v640 = vrot.slane %v638, 4
      %v641 = vor.u32 %v640, %v636
      %v642 = vrot.slane %v641, 4
      %v644 = vshll.u32 %v260, 16
      %v646 = vrot.slane %v644, 5
      %v647 = vsel %vm263, %v642, %v646
      %v648 = vld [vmem:[%s212] sm:$0xe]
      %v649 = vld [vmem:[%s212 + $0xc] sm:$0xe]
      %v650 = vld [vmem:[%s212 + $0x18] sm:$0xe]
      %v651 = vld [vmem:[%s212 + $0x24] sm:$0xe]
      %v652 = vld [vmem:[%s212 + $0x30] sm:$0xe]
      %v653 = vld [vmem:[%s212 + $0x3c] sm:$0xe]
      %v654 = vld [vmem:[%s212 + $0x48] sm:$0xe]
      %v655 = vld [vmem:[%s212 + $0x54] sm:$0xe]
      %v656 = vld [vmem:[%s212 + $0x60] sm:$0xe]
      %v657 = vld [vmem:[%s212 + $0x6c] sm:$0xe]
      %v658 = vld [vmem:[%s212 + $0x78] sm:$0xe]
      %v659 = vld [vmem:[%s212 + $0x84] sm:$0xe]
      %v660 = vld [vmem:[%s212 + $0x90] sm:$0xe]
      %v661 = vld [vmem:[%s212 + $0x9c] sm:$0xe]
      %v662 = vld [vmem:[%s212 + $0xa8] sm:$0xe]
      %v663 = vld [vmem:[%s212 + $0xb4] sm:$0xe]
      %vm712 = vcmask 1042432
      %vm713 = vcmask 1046532
      %vm714 = vmor %vm712, %vm713
      %v715 = vrot.slane %v648, 5
      %v716 = vrot.slane %v715, 4
      %v717 = vrot.slane %v214, 5
      %v718 = vsel %vm714, %v716, %v717
      %v719 = vrot.slane %v717, 4
      %v720 = vrot.slane %v245, 5
      %v721 = vsel %vm714, %v719, %v720
      %v722 = vrot.slane %v649, 5
      %v723 = vrot.slane %v722, 4
      %v724 = vrot.slane %v216, 5
      %v725 = vsel %vm714, %v723, %v724
      %v726 = vrot.slane %v724, 4
      %v727 = vrot.slane %v246, 5
      %v728 = vsel %vm714, %v726, %v727
      %v729 = vrot.slane %v650, 5
      %v730 = vrot.slane %v729, 4
      %v731 = vrot.slane %v218, 5
      %v732 = vsel %vm714, %v730, %v731
      %v733 = vrot.slane %v731, 4
      %v734 = vrot.slane %v247, 5
      %v735 = vsel %vm714, %v733, %v734
      %v736 = vrot.slane %v651, 5
      %v737 = vrot.slane %v736, 4
      %v738 = vrot.slane %v220, 5
      %v739 = vsel %vm714, %v737, %v738
      %v740 = vrot.slane %v738, 4
      %v741 = vrot.slane %v248, 5
      %v742 = vsel %vm714, %v740, %v741
      %v743 = vrot.slane %v652, 5
      %v744 = vrot.slane %v743, 4
      %v745 = vrot.slane %v222, 5
      %v746 = vsel %vm714, %v744, %v745
      %v747 = vrot.slane %v745, 4
      %v748 = vrot.slane %v249, 5
      %v749 = vsel %vm714, %v747, %v748
      %v750 = vrot.slane %v653, 5
      %v751 = vrot.slane %v750, 4
      %v752 = vrot.slane %v224, 5
      %v753 = vsel %vm714, %v751, %v752
      %v754 = vrot.slane %v752, 4
      %v755 = vrot.slane %v250, 5
      %v756 = vsel %vm714, %v754, %v755
      %v757 = vrot.slane %v654, 5
      %v758 = vrot.slane %v757, 4
      %v759 = vrot.slane %v226, 5
      %v760 = vsel %vm714, %v758, %v759
      %v761 = vrot.slane %v759, 4
      %v762 = vrot.slane %v251, 5
      %v763 = vsel %vm714, %v761, %v762
      %v764 = vrot.slane %v655, 5
      %v765 = vrot.slane %v764, 4
      %v766 = vrot.slane %v228, 5
      %v767 = vsel %vm714, %v765, %v766
      %v768 = vrot.slane %v766, 4
      %v769 = vrot.slane %v252, 5
      %v770 = vsel %vm714, %v768, %v769
      %v771 = vrot.slane %v656, 5
      %v772 = vrot.slane %v771, 4
      %v773 = vrot.slane %v230, 5
      %v774 = vsel %vm714, %v772, %v773
      %v775 = vrot.slane %v773, 4
      %v776 = vrot.slane %v253, 5
      %v777 = vsel %vm714, %v775, %v776
      %v778 = vrot.slane %v657, 5
      %v779 = vrot.slane %v778, 4
      %v780 = vrot.slane %v232, 5
      %v781 = vsel %vm714, %v779, %v780
      %v782 = vrot.slane %v780, 4
      %v783 = vrot.slane %v254, 5
      %v784 = vsel %vm714, %v782, %v783
      %v785 = vrot.slane %v658, 5
      %v786 = vrot.slane %v785, 4
      %v787 = vrot.slane %v234, 5
      %v788 = vsel %vm714, %v786, %v787
      %v789 = vrot.slane %v787, 4
      %v790 = vrot.slane %v255, 5
      %v791 = vsel %vm714, %v789, %v790
      %v792 = vrot.slane %v659, 5
      %v793 = vrot.slane %v792, 4
      %v794 = vrot.slane %v236, 5
      %v795 = vsel %vm714, %v793, %v794
      %v796 = vrot.slane %v794, 4
      %v797 = vrot.slane %v256, 5
      %v798 = vsel %vm714, %v796, %v797
      %v799 = vrot.slane %v660, 5
      %v800 = vrot.slane %v799, 4
      %v801 = vrot.slane %v238, 5
      %v802 = vsel %vm714, %v800, %v801
      %v803 = vrot.slane %v801, 4
      %v804 = vrot.slane %v257, 5
      %v805 = vsel %vm714, %v803, %v804
      %v806 = vrot.slane %v661, 5
      %v807 = vrot.slane %v806, 4
      %v808 = vrot.slane %v240, 5
      %v809 = vsel %vm714, %v807, %v808
      %v810 = vrot.slane %v808, 4
      %v811 = vrot.slane %v258, 5
      %v812 = vsel %vm714, %v810, %v811
      %v813 = vrot.slane %v662, 5
      %v814 = vrot.slane %v813, 4
      %v815 = vrot.slane %v242, 5
      %v816 = vsel %vm714, %v814, %v815
      %v817 = vrot.slane %v815, 4
      %v818 = vrot.slane %v259, 5
      %v819 = vsel %vm714, %v817, %v818
      %v820 = vrot.slane %v663, 5
      %v821 = vrot.slane %v820, 4
      %v822 = vrot.slane %v244, 5
      %v823 = vsel %vm714, %v821, %v822
      %v824 = vrot.slane %v822, 4
      %v825 = vrot.slane %v260, 5
      %v826 = vsel %vm714, %v824, %v825
      %s827 = sadd.s32 %s209, 1
      %s828 = smul.u32 %s827, 3
      %s829 = smul.addr %s828, 4
      %s830 = scalar_lea.vmem %s192, %s829
      %v831 = vld [vmem:[%s830] sm:$0xf]
      %v832 = vld [vmem:[%s830 + $0x4] sm:$0xf]
      %v833 = vld [vmem:[%s830 + $0xc] sm:$0xf]
      %v834 = vld [vmem:[%s830 + $0x10] sm:$0xf]
      %v835 = vld [vmem:[%s830 + $0x18] sm:$0xf]
      %v836 = vld [vmem:[%s830 + $0x1c] sm:$0xf]
      %v837 = vld [vmem:[%s830 + $0x24] sm:$0xf]
      %v838 = vld [vmem:[%s830 + $0x28] sm:$0xf]
      %v839 = vld [vmem:[%s830 + $0x30] sm:$0xf]
      %v840 = vld [vmem:[%s830 + $0x34] sm:$0xf]
      %v841 = vld [vmem:[%s830 + $0x3c] sm:$0xf]
      %v842 = vld [vmem:[%s830 + $0x40] sm:$0xf]
      %v843 = vld [vmem:[%s830 + $0x48] sm:$0xf]
      %v844 = vld [vmem:[%s830 + $0x4c] sm:$0xf]
      %v845 = vld [vmem:[%s830 + $0x54] sm:$0xf]
      %v846 = vld [vmem:[%s830 + $0x58] sm:$0xf]
      %v847 = vld [vmem:[%s830 + $0x60] sm:$0xf]
      %v848 = vld [vmem:[%s830 + $0x64] sm:$0xf]
      %v849 = vld [vmem:[%s830 + $0x6c] sm:$0xf]
      %v850 = vld [vmem:[%s830 + $0x70] sm:$0xf]
      %v851 = vld [vmem:[%s830 + $0x78] sm:$0xf]
      %v852 = vld [vmem:[%s830 + $0x7c] sm:$0xf]
      %v853 = vld [vmem:[%s830 + $0x84] sm:$0xf]
      %v854 = vld [vmem:[%s830 + $0x88] sm:$0xf]
      %v855 = vld [vmem:[%s830 + $0x90] sm:$0xf]
      %v856 = vld [vmem:[%s830 + $0x94] sm:$0xf]
      %v857 = vld [vmem:[%s830 + $0x9c] sm:$0xf]
      %v858 = vld [vmem:[%s830 + $0xa0] sm:$0xf]
      %v859 = vld [vmem:[%s830 + $0xa8] sm:$0xf]
      %v860 = vld [vmem:[%s830 + $0xac] sm:$0xf]
      %v861 = vld [vmem:[%s830 + $0xb4] sm:$0xf]
      %v862 = vld [vmem:[%s830 + $0xb8] sm:$0xf]
      %v863 = vld [vmem:[%s830 + $0x8] sm:$0x1]
      %v864 = vld [vmem:[%s830 + $0x14] sm:$0x1]
      %v865 = vld [vmem:[%s830 + $0x20] sm:$0x1]
      %v866 = vld [vmem:[%s830 + $0x2c] sm:$0x1]
      %v867 = vld [vmem:[%s830 + $0x38] sm:$0x1]
      %v868 = vld [vmem:[%s830 + $0x44] sm:$0x1]
      %v869 = vld [vmem:[%s830 + $0x50] sm:$0x1]
      %v870 = vld [vmem:[%s830 + $0x5c] sm:$0x1]
      %v871 = vld [vmem:[%s830 + $0x68] sm:$0x1]
      %v872 = vld [vmem:[%s830 + $0x74] sm:$0x1]
      %v873 = vld [vmem:[%s830 + $0x80] sm:$0x1]
      %v874 = vld [vmem:[%s830 + $0x8c] sm:$0x1]
      %v875 = vld [vmem:[%s830 + $0x98] sm:$0x1]
      %v876 = vld [vmem:[%s830 + $0xa4] sm:$0x1]
      %v877 = vld [vmem:[%s830 + $0xb0] sm:$0x1]
      %v878 = vld [vmem:[%s830 + $0xbc] sm:$0x1]
      %v880 = vshrl.u32 %v831, 16
      %v882 = vrot.slane %v880, 4
      %v883 = vshll.u32 %v831, 16
      %v885 = vrot.slane %v883, 5
      %v886 = vor.u32 %v882, %v885
      %v887 = vrot.slane %v886, 4
      %v889 = vshll.u32 %v832, 16
      %v891 = vrot.slane %v889, 5
      %v892 = vsel %vm263, %v887, %v891
      %v893 = vshrl.u32 %v832, 16
      %v895 = vrot.slane %v893, 4
      %v896 = vor.u32 %v895, %v891
      %v897 = vrot.slane %v896, 4
      %v899 = vshll.u32 %v863, 16
      %v901 = vrot.slane %v899, 5
      %v902 = vsel %vm263, %v897, %v901
      %v904 = vshrl.u32 %v833, 16
      %v906 = vrot.slane %v904, 4
      %v907 = vshll.u32 %v833, 16
      %v909 = vrot.slane %v907, 5
      %v910 = vor.u32 %v906, %v909
      %v911 = vrot.slane %v910, 4
      %v913 = vshll.u32 %v834, 16
      %v915 = vrot.slane %v913, 5
      %v916 = vsel %vm263, %v911, %v915
      %v917 = vshrl.u32 %v834, 16
      %v919 = vrot.slane %v917, 4
      %v920 = vor.u32 %v919, %v915
      %v921 = vrot.slane %v920, 4
      %v923 = vshll.u32 %v864, 16
      %v925 = vrot.slane %v923, 5
      %v926 = vsel %vm263, %v921, %v925
      %v928 = vshrl.u32 %v835, 16
      %v930 = vrot.slane %v928, 4
      %v931 = vshll.u32 %v835, 16
      %v933 = vrot.slane %v931, 5
      %v934 = vor.u32 %v930, %v933
      %v935 = vrot.slane %v934, 4
      %v937 = vshll.u32 %v836, 16
      %v939 = vrot.slane %v937, 5
      %v940 = vsel %vm263, %v935, %v939
      %v941 = vshrl.u32 %v836, 16
      %v943 = vrot.slane %v941, 4
      %v944 = vor.u32 %v943, %v939
      %v945 = vrot.slane %v944, 4
      %v947 = vshll.u32 %v865, 16
      %v949 = vrot.slane %v947, 5
      %v950 = vsel %vm263, %v945, %v949
      %v952 = vshrl.u32 %v837, 16
      %v954 = vrot.slane %v952, 4
      %v955 = vshll.u32 %v837, 16
      %v957 = vrot.slane %v955, 5
      %v958 = vor.u32 %v954, %v957
      %v959 = vrot.slane %v958, 4
      %v961 = vshll.u32 %v838, 16
      %v963 = vrot.slane %v961, 5
      %v964 = vsel %vm263, %v959, %v963
      %v965 = vshrl.u32 %v838, 16
      %v967 = vrot.slane %v965, 4
      %v968 = vor.u32 %v967, %v963
      %v969 = vrot.slane %v968, 4
      %v971 = vshll.u32 %v866, 16
      %v973 = vrot.slane %v971, 5
      %v974 = vsel %vm263, %v969, %v973
      %v976 = vshrl.u32 %v839, 16
      %v978 = vrot.slane %v976, 4
      %v979 = vshll.u32 %v839, 16
      %v981 = vrot.slane %v979, 5
      %v982 = vor.u32 %v978, %v981
      %v983 = vrot.slane %v982, 4
      %v985 = vshll.u32 %v840, 16
      %v987 = vrot.slane %v985, 5
      %v988 = vsel %vm263, %v983, %v987
      %v989 = vshrl.u32 %v840, 16
      %v991 = vrot.slane %v989, 4
      %v992 = vor.u32 %v991, %v987
      %v993 = vrot.slane %v992, 4
      %v995 = vshll.u32 %v867, 16
      %v997 = vrot.slane %v995, 5
      %v998 = vsel %vm263, %v993, %v997
      %v1000 = vshrl.u32 %v841, 16
      %v1002 = vrot.slane %v1000, 4
      %v1003 = vshll.u32 %v841, 16
      %v1005 = vrot.slane %v1003, 5
      %v1006 = vor.u32 %v1002, %v1005
      %v1007 = vrot.slane %v1006, 4
      %v1009 = vshll.u32 %v842, 16
      %v1011 = vrot.slane %v1009, 5
      %v1012 = vsel %vm263, %v1007, %v1011
      %v1013 = vshrl.u32 %v842, 16
      %v1015 = vrot.slane %v1013, 4
      %v1016 = vor.u32 %v1015, %v1011
      %v1017 = vrot.slane %v1016, 4
      %v1019 = vshll.u32 %v868, 16
      %v1021 = vrot.slane %v1019, 5
      %v1022 = vsel %vm263, %v1017, %v1021
      %v1024 = vshrl.u32 %v843, 16
      %v1026 = vrot.slane %v1024, 4
      %v1027 = vshll.u32 %v843, 16
      %v1029 = vrot.slane %v1027, 5
      %v1030 = vor.u32 %v1026, %v1029
      %v1031 = vrot.slane %v1030, 4
      %v1033 = vshll.u32 %v844, 16
      %v1035 = vrot.slane %v1033, 5
      %v1036 = vsel %vm263, %v1031, %v1035
      %v1037 = vshrl.u32 %v844, 16
      %v1039 = vrot.slane %v1037, 4
      %v1040 = vor.u32 %v1039, %v1035
      %v1041 = vrot.slane %v1040, 4
      %v1043 = vshll.u32 %v869, 16
      %v1045 = vrot.slane %v1043, 5
      %v1046 = vsel %vm263, %v1041, %v1045
      %v1048 = vshrl.u32 %v845, 16
      %v1050 = vrot.slane %v1048, 4
      %v1051 = vshll.u32 %v845, 16
      %v1053 = vrot.slane %v1051, 5
      %v1054 = vor.u32 %v1050, %v1053
      %v1055 = vrot.slane %v1054, 4
      %v1057 = vshll.u32 %v846, 16
      %v1059 = vrot.slane %v1057, 5
      %v1060 = vsel %vm263, %v1055, %v1059
      %v1061 = vshrl.u32 %v846, 16
      %v1063 = vrot.slane %v1061, 4
      %v1064 = vor.u32 %v1063, %v1059
      %v1065 = vrot.slane %v1064, 4
      %v1067 = vshll.u32 %v870, 16
      %v1069 = vrot.slane %v1067, 5
      %v1070 = vsel %vm263, %v1065, %v1069
      %v1072 = vshrl.u32 %v847, 16
      %v1074 = vrot.slane %v1072, 4
      %v1075 = vshll.u32 %v847, 16
      %v1077 = vrot.slane %v1075, 5
      %v1078 = vor.u32 %v1074, %v1077
      %v1079 = vrot.slane %v1078, 4
      %v1081 = vshll.u32 %v848, 16
      %v1083 = vrot.slane %v1081, 5
      %v1084 = vsel %vm263, %v1079, %v1083
      %v1085 = vshrl.u32 %v848, 16
      %v1087 = vrot.slane %v1085, 4
      %v1088 = vor.u32 %v1087, %v1083
      %v1089 = vrot.slane %v1088, 4
      %v1091 = vshll.u32 %v871, 16
      %v1093 = vrot.slane %v1091, 5
      %v1094 = vsel %vm263, %v1089, %v1093
      %v1096 = vshrl.u32 %v849, 16
      %v1098 = vrot.slane %v1096, 4
      %v1099 = vshll.u32 %v849, 16
      %v1101 = vrot.slane %v1099, 5
      %v1102 = vor.u32 %v1098, %v1101
      %v1103 = vrot.slane %v1102, 4
      %v1105 = vshll.u32 %v850, 16
      %v1107 = vrot.slane %v1105, 5
      %v1108 = vsel %vm263, %v1103, %v1107
      %v1109 = vshrl.u32 %v850, 16
      %v1111 = vrot.slane %v1109, 4
      %v1112 = vor.u32 %v1111, %v1107
      %v1113 = vrot.slane %v1112, 4
      %v1115 = vshll.u32 %v872, 16
      %v1117 = vrot.slane %v1115, 5
      %v1118 = vsel %vm263, %v1113, %v1117
      %v1120 = vshrl.u32 %v851, 16
      %v1122 = vrot.slane %v1120, 4
      %v1123 = vshll.u32 %v851, 16
      %v1125 = vrot.slane %v1123, 5
      %v1126 = vor.u32 %v1122, %v1125
      %v1127 = vrot.slane %v1126, 4
      %v1129 = vshll.u32 %v852, 16
      %v1131 = vrot.slane %v1129, 5
      %v1132 = vsel %vm263, %v1127, %v1131
      %v1133 = vshrl.u32 %v852, 16
      %v1135 = vrot.slane %v1133, 4
      %v1136 = vor.u32 %v1135, %v1131
      %v1137 = vrot.slane %v1136, 4
      %v1139 = vshll.u32 %v873, 16
      %v1141 = vrot.slane %v1139, 5
      %v1142 = vsel %vm263, %v1137, %v1141
      %v1144 = vshrl.u32 %v853, 16
      %v1146 = vrot.slane %v1144, 4
      %v1147 = vshll.u32 %v853, 16
      %v1149 = vrot.slane %v1147, 5
      %v1150 = vor.u32 %v1146, %v1149
      %v1151 = vrot.slane %v1150, 4
      %v1153 = vshll.u32 %v854, 16
      %v1155 = vrot.slane %v1153, 5
      %v1156 = vsel %vm263, %v1151, %v1155
      %v1157 = vshrl.u32 %v854, 16
      %v1159 = vrot.slane %v1157, 4
      %v1160 = vor.u32 %v1159, %v1155
      %v1161 = vrot.slane %v1160, 4
      %v1163 = vshll.u32 %v874, 16
      %v1165 = vrot.slane %v1163, 5
      %v1166 = vsel %vm263, %v1161, %v1165
      %v1168 = vshrl.u32 %v855, 16
      %v1170 = vrot.slane %v1168, 4
      %v1171 = vshll.u32 %v855, 16
      %v1173 = vrot.slane %v1171, 5
      %v1174 = vor.u32 %v1170, %v1173
      %v1175 = vrot.slane %v1174, 4
      %v1177 = vshll.u32 %v856, 16
      %v1179 = vrot.slane %v1177, 5
      %v1180 = vsel %vm263, %v1175, %v1179
      %v1181 = vshrl.u32 %v856, 16
      %v1183 = vrot.slane %v1181, 4
      %v1184 = vor.u32 %v1183, %v1179
      %v1185 = vrot.slane %v1184, 4
      %v1187 = vshll.u32 %v875, 16
      %v1189 = vrot.slane %v1187, 5
      %v1190 = vsel %vm263, %v1185, %v1189
      %v1192 = vshrl.u32 %v857, 16
      %v1194 = vrot.slane %v1192, 4
      %v1195 = vshll.u32 %v857, 16
      %v1197 = vrot.slane %v1195, 5
      %v1198 = vor.u32 %v1194, %v1197
      %v1199 = vrot.slane %v1198, 4
      %v1201 = vshll.u32 %v858, 16
      %v1203 = vrot.slane %v1201, 5
      %v1204 = vsel %vm263, %v1199, %v1203
      %v1205 = vshrl.u32 %v858, 16
      %v1207 = vrot.slane %v1205, 4
      %v1208 = vor.u32 %v1207, %v1203
      %v1209 = vrot.slane %v1208, 4
      %v1211 = vshll.u32 %v876, 16
      %v1213 = vrot.slane %v1211, 5
      %v1214 = vsel %vm263, %v1209, %v1213
      %v1216 = vshrl.u32 %v859, 16
      %v1218 = vrot.slane %v1216, 4
      %v1219 = vshll.u32 %v859, 16
      %v1221 = vrot.slane %v1219, 5
      %v1222 = vor.u32 %v1218, %v1221
      %v1223 = vrot.slane %v1222, 4
      %v1225 = vshll.u32 %v860, 16
      %v1227 = vrot.slane %v1225, 5
      %v1228 = vsel %vm263, %v1223, %v1227
      %v1229 = vshrl.u32 %v860, 16
      %v1231 = vrot.slane %v1229, 4
      %v1232 = vor.u32 %v1231, %v1227
      %v1233 = vrot.slane %v1232, 4
      %v1235 = vshll.u32 %v877, 16
      %v1237 = vrot.slane %v1235, 5
      %v1238 = vsel %vm263, %v1233, %v1237
      %v1240 = vshrl.u32 %v861, 16
      %v1242 = vrot.slane %v1240, 4
      %v1243 = vshll.u32 %v861, 16
      %v1245 = vrot.slane %v1243, 5
      %v1246 = vor.u32 %v1242, %v1245
      %v1247 = vrot.slane %v1246, 4
      %v1249 = vshll.u32 %v862, 16
      %v1251 = vrot.slane %v1249, 5
      %v1252 = vsel %vm263, %v1247, %v1251
      %v1253 = vshrl.u32 %v862, 16
      %v1255 = vrot.slane %v1253, 4
      %v1256 = vor.u32 %v1255, %v1251
      %v1257 = vrot.slane %v1256, 4
      %v1259 = vshll.u32 %v878, 16
      %v1261 = vrot.slane %v1259, 5
      %v1262 = vsel %vm263, %v1257, %v1261
      %v1263 = vld [vmem:[%s830] sm:$0xe]
      %v1264 = vld [vmem:[%s830 + $0xc] sm:$0xe]
      %v1265 = vld [vmem:[%s830 + $0x18] sm:$0xe]
      %v1266 = vld [vmem:[%s830 + $0x24] sm:$0xe]
      %v1267 = vld [vmem:[%s830 + $0x30] sm:$0xe]
      %v1268 = vld [vmem:[%s830 + $0x3c] sm:$0xe]
      %v1269 = vld [vmem:[%s830 + $0x48] sm:$0xe]
      %v1270 = vld [vmem:[%s830 + $0x54] sm:$0xe]
      %v1271 = vld [vmem:[%s830 + $0x60] sm:$0xe]
      %v1272 = vld [vmem:[%s830 + $0x6c] sm:$0xe]
      %v1273 = vld [vmem:[%s830 + $0x78] sm:$0xe]
      %v1274 = vld [vmem:[%s830 + $0x84] sm:$0xe]
      %v1275 = vld [vmem:[%s830 + $0x90] sm:$0xe]
      %v1276 = vld [vmem:[%s830 + $0x9c] sm:$0xe]
      %v1277 = vld [vmem:[%s830 + $0xa8] sm:$0xe]
      %v1278 = vld [vmem:[%s830 + $0xb4] sm:$0xe]
      %v1327 = vrot.slane %v1263, 5
      %v1328 = vrot.slane %v1327, 4
      %v1329 = vrot.slane %v832, 5
      %v1330 = vsel %vm714, %v1328, %v1329
      %v1331 = vrot.slane %v1329, 4
      %v1332 = vrot.slane %v863, 5
      %v1333 = vsel %vm714, %v1331, %v1332
      %v1334 = vrot.slane %v1264, 5
      %v1335 = vrot.slane %v1334, 4
      %v1336 = vrot.slane %v834, 5
      %v1337 = vsel %vm714, %v1335, %v1336
      %v1338 = vrot.slane %v1336, 4
      %v1339 = vrot.slane %v864, 5
      %v1340 = vsel %vm714, %v1338, %v1339
      %v1341 = vrot.slane %v1265, 5
      %v1342 = vrot.slane %v1341, 4
      %v1343 = vrot.slane %v836, 5
      %v1344 = vsel %vm714, %v1342, %v1343
      %v1345 = vrot.slane %v1343, 4
      %v1346 = vrot.slane %v865, 5
      %v1347 = vsel %vm714, %v1345, %v1346
      %v1348 = vrot.slane %v1266, 5
      %v1349 = vrot.slane %v1348, 4
      %v1350 = vrot.slane %v838, 5
      %v1351 = vsel %vm714, %v1349, %v1350
      %v1352 = vrot.slane %v1350, 4
      %v1353 = vrot.slane %v866, 5
      %v1354 = vsel %vm714, %v1352, %v1353
      %v1355 = vrot.slane %v1267, 5
      %v1356 = vrot.slane %v1355, 4
      %v1357 = vrot.slane %v840, 5
      %v1358 = vsel %vm714, %v1356, %v1357
      %v1359 = vrot.slane %v1357, 4
      %v1360 = vrot.slane %v867, 5
      %v1361 = vsel %vm714, %v1359, %v1360
      %v1362 = vrot.slane %v1268, 5
      %v1363 = vrot.slane %v1362, 4
      %v1364 = vrot.slane %v842, 5
      %v1365 = vsel %vm714, %v1363, %v1364
      %v1366 = vrot.slane %v1364, 4
      %v1367 = vrot.slane %v868, 5
      %v1368 = vsel %vm714, %v1366, %v1367
      %v1369 = vrot.slane %v1269, 5
      %v1370 = vrot.slane %v1369, 4
      %v1371 = vrot.slane %v844, 5
      %v1372 = vsel %vm714, %v1370, %v1371
      %v1373 = vrot.slane %v1371, 4
      %v1374 = vrot.slane %v869, 5
      %v1375 = vsel %vm714, %v1373, %v1374
      %v1376 = vrot.slane %v1270, 5
      %v1377 = vrot.slane %v1376, 4
      %v1378 = vrot.slane %v846, 5
      %v1379 = vsel %vm714, %v1377, %v1378
      %v1380 = vrot.slane %v1378, 4
      %v1381 = vrot.slane %v870, 5
      %v1382 = vsel %vm714, %v1380, %v1381
      %v1383 = vrot.slane %v1271, 5
      %v1384 = vrot.slane %v1383, 4
      %v1385 = vrot.slane %v848, 5
      %v1386 = vsel %vm714, %v1384, %v1385
      %v1387 = vrot.slane %v1385, 4
      %v1388 = vrot.slane %v871, 5
      %v1389 = vsel %vm714, %v1387, %v1388
      %v1390 = vrot.slane %v1272, 5
      %v1391 = vrot.slane %v1390, 4
      %v1392 = vrot.slane %v850, 5
      %v1393 = vsel %vm714, %v1391, %v1392
      %v1394 = vrot.slane %v1392, 4
      %v1395 = vrot.slane %v872, 5
      %v1396 = vsel %vm714, %v1394, %v1395
      %v1397 = vrot.slane %v1273, 5
      %v1398 = vrot.slane %v1397, 4
      %v1399 = vrot.slane %v852, 5
      %v1400 = vsel %vm714, %v1398, %v1399
      %v1401 = vrot.slane %v1399, 4
      %v1402 = vrot.slane %v873, 5
      %v1403 = vsel %vm714, %v1401, %v1402
      %v1404 = vrot.slane %v1274, 5
      %v1405 = vrot.slane %v1404, 4
      %v1406 = vrot.slane %v854, 5
      %v1407 = vsel %vm714, %v1405, %v1406
      %v1408 = vrot.slane %v1406, 4
      %v1409 = vrot.slane %v874, 5
      %v1410 = vsel %vm714, %v1408, %v1409
      %v1411 = vrot.slane %v1275, 5
      %v1412 = vrot.slane %v1411, 4
      %v1413 = vrot.slane %v856, 5
      %v1414 = vsel %vm714, %v1412, %v1413
      %v1415 = vrot.slane %v1413, 4
      %v1416 = vrot.slane %v875, 5
      %v1417 = vsel %vm714, %v1415, %v1416
      %v1418 = vrot.slane %v1276, 5
      %v1419 = vrot.slane %v1418, 4
      %v1420 = vrot.slane %v858, 5
      %v1421 = vsel %vm714, %v1419, %v1420
      %v1422 = vrot.slane %v1420, 4
      %v1423 = vrot.slane %v876, 5
      %v1424 = vsel %vm714, %v1422, %v1423
      %v1425 = vrot.slane %v1277, 5
      %v1426 = vrot.slane %v1425, 4
      %v1427 = vrot.slane %v860, 5
      %v1428 = vsel %vm714, %v1426, %v1427
      %v1429 = vrot.slane %v1427, 4
      %v1430 = vrot.slane %v877, 5
      %v1431 = vsel %vm714, %v1429, %v1430
      %v1432 = vrot.slane %v1278, 5
      %v1433 = vrot.slane %v1432, 4
      %v1434 = vrot.slane %v862, 5
      %v1435 = vsel %vm714, %v1433, %v1434
      %v1436 = vrot.slane %v1434, 4
      %v1437 = vrot.slane %v878, 5
      %v1438 = vsel %vm714, %v1436, %v1437
      %s1439 = sadd.s32 %s209, 2
      %s1440 = smul.u32 %s1439, 3
      %s1441 = smul.addr %s1440, 4
      %s1442 = scalar_lea.vmem %s192, %s1441
      %v1443 = vld [vmem:[%s1442] sm:$0xf]
      %v1444 = vld [vmem:[%s1442 + $0x4] sm:$0xf]
      %v1445 = vld [vmem:[%s1442 + $0xc] sm:$0xf]
      %v1446 = vld [vmem:[%s1442 + $0x10] sm:$0xf]
      %v1447 = vld [vmem:[%s1442 + $0x18] sm:$0xf]
      %v1448 = vld [vmem:[%s1442 + $0x1c] sm:$0xf]
      %v1449 = vld [vmem:[%s1442 + $0x24] sm:$0xf]
      %v1450 = vld [vmem:[%s1442 + $0x28] sm:$0xf]
      %v1451 = vld [vmem:[%s1442 + $0x30] sm:$0xf]
      %v1452 = vld [vmem:[%s1442 + $0x34] sm:$0xf]
      %v1453 = vld [vmem:[%s1442 + $0x3c] sm:$0xf]
      %v1454 = vld [vmem:[%s1442 + $0x40] sm:$0xf]
      %v1455 = vld [vmem:[%s1442 + $0x48] sm:$0xf]
      %v1456 = vld [vmem:[%s1442 + $0x4c] sm:$0xf]
      %v1457 = vld [vmem:[%s1442 + $0x54] sm:$0xf]
      %v1458 = vld [vmem:[%s1442 + $0x58] sm:$0xf]
      %v1459 = vld [vmem:[%s1442 + $0x60] sm:$0xf]
      %v1460 = vld [vmem:[%s1442 + $0x64] sm:$0xf]
      %v1461 = vld [vmem:[%s1442 + $0x6c] sm:$0xf]
      %v1462 = vld [vmem:[%s1442 + $0x70] sm:$0xf]
      %v1463 = vld [vmem:[%s1442 + $0x78] sm:$0xf]
      %v1464 = vld [vmem:[%s1442 + $0x7c] sm:$0xf]
      %v1465 = vld [vmem:[%s1442 + $0x84] sm:$0xf]
      %v1466 = vld [vmem:[%s1442 + $0x88] sm:$0xf]
      %v1467 = vld [vmem:[%s1442 + $0x90] sm:$0xf]
      %v1468 = vld [vmem:[%s1442 + $0x94] sm:$0xf]
      %v1469 = vld [vmem:[%s1442 + $0x9c] sm:$0xf]
      %v1470 = vld [vmem:[%s1442 + $0xa0] sm:$0xf]
      %v1471 = vld [vmem:[%s1442 + $0xa8] sm:$0xf]
      %v1472 = vld [vmem:[%s1442 + $0xac] sm:$0xf]
      %v1473 = vld [vmem:[%s1442 + $0xb4] sm:$0xf]
      %v1474 = vld [vmem:[%s1442 + $0xb8] sm:$0xf]
      %v1475 = vld [vmem:[%s1442 + $0x8] sm:$0x1]
      %v1476 = vld [vmem:[%s1442 + $0x14] sm:$0x1]
      %v1477 = vld [vmem:[%s1442 + $0x20] sm:$0x1]
      %v1478 = vld [vmem:[%s1442 + $0x2c] sm:$0x1]
      %v1479 = vld [vmem:[%s1442 + $0x38] sm:$0x1]
      %v1480 = vld [vmem:[%s1442 + $0x44] sm:$0x1]
      %v1481 = vld [vmem:[%s1442 + $0x50] sm:$0x1]
      %v1482 = vld [vmem:[%s1442 + $0x5c] sm:$0x1]
      %v1483 = vld [vmem:[%s1442 + $0x68] sm:$0x1]
      %v1484 = vld [vmem:[%s1442 + $0x74] sm:$0x1]
      %v1485 = vld [vmem:[%s1442 + $0x80] sm:$0x1]
      %v1486 = vld [vmem:[%s1442 + $0x8c] sm:$0x1]
      %v1487 = vld [vmem:[%s1442 + $0x98] sm:$0x1]
      %v1488 = vld [vmem:[%s1442 + $0xa4] sm:$0x1]
      %v1489 = vld [vmem:[%s1442 + $0xb0] sm:$0x1]
      %v1490 = vld [vmem:[%s1442 + $0xbc] sm:$0x1]
      %v1492 = vshrl.u32 %v1443, 16
      %v1494 = vrot.slane %v1492, 4
      %v1495 = vshll.u32 %v1443, 16
      %v1497 = vrot.slane %v1495, 5
      %v1498 = vor.u32 %v1494, %v1497
      %v1499 = vrot.slane %v1498, 4
      %v1501 = vshll.u32 %v1444, 16
      %v1503 = vrot.slane %v1501, 5
      %v1504 = vsel %vm263, %v1499, %v1503
      %v1505 = vshrl.u32 %v1444, 16
      %v1507 = vrot.slane %v1505, 4
      %v1508 = vor.u32 %v1507, %v1503
      %v1509 = vrot.slane %v1508, 4
      %v1511 = vshll.u32 %v1475, 16
      %v1513 = vrot.slane %v1511, 5
      %v1514 = vsel %vm263, %v1509, %v1513
      %v1516 = vshrl.u32 %v1445, 16
      %v1518 = vrot.slane %v1516, 4
      %v1519 = vshll.u32 %v1445, 16
      %v1521 = vrot.slane %v1519, 5
      %v1522 = vor.u32 %v1518, %v1521
      %v1523 = vrot.slane %v1522, 4
      %v1525 = vshll.u32 %v1446, 16
      %v1527 = vrot.slane %v1525, 5
      %v1528 = vsel %vm263, %v1523, %v1527
      %v1529 = vshrl.u32 %v1446, 16
      %v1531 = vrot.slane %v1529, 4
      %v1532 = vor.u32 %v1531, %v1527
      %v1533 = vrot.slane %v1532, 4
      %v1535 = vshll.u32 %v1476, 16
      %v1537 = vrot.slane %v1535, 5
      %v1538 = vsel %vm263, %v1533, %v1537
      %v1540 = vshrl.u32 %v1447, 16
      %v1542 = vrot.slane %v1540, 4
      %v1543 = vshll.u32 %v1447, 16
      %v1545 = vrot.slane %v1543, 5
      %v1546 = vor.u32 %v1542, %v1545
      %v1547 = vrot.slane %v1546, 4
      %v1549 = vshll.u32 %v1448, 16
      %v1551 = vrot.slane %v1549, 5
      %v1552 = vsel %vm263, %v1547, %v1551
      %v1553 = vshrl.u32 %v1448, 16
      %v1555 = vrot.slane %v1553, 4
      %v1556 = vor.u32 %v1555, %v1551
      %v1557 = vrot.slane %v1556, 4
      %v1559 = vshll.u32 %v1477, 16
      %v1561 = vrot.slane %v1559, 5
      %v1562 = vsel %vm263, %v1557, %v1561
      %v1564 = vshrl.u32 %v1449, 16
      %v1566 = vrot.slane %v1564, 4
      %v1567 = vshll.u32 %v1449, 16
      %v1569 = vrot.slane %v1567, 5
      %v1570 = vor.u32 %v1566, %v1569
      %v1571 = vrot.slane %v1570, 4
      %v1573 = vshll.u32 %v1450, 16
      %v1575 = vrot.slane %v1573, 5
      %v1576 = vsel %vm263, %v1571, %v1575
      %v1577 = vshrl.u32 %v1450, 16
      %v1579 = vrot.slane %v1577, 4
      %v1580 = vor.u32 %v1579, %v1575
      %v1581 = vrot.slane %v1580, 4
      %v1583 = vshll.u32 %v1478, 16
      %v1585 = vrot.slane %v1583, 5
      %v1586 = vsel %vm263, %v1581, %v1585
      %v1588 = vshrl.u32 %v1451, 16
      %v1590 = vrot.slane %v1588, 4
      %v1591 = vshll.u32 %v1451, 16
      %v1593 = vrot.slane %v1591, 5
      %v1594 = vor.u32 %v1590, %v1593
      %v1595 = vrot.slane %v1594, 4
      %v1597 = vshll.u32 %v1452, 16
      %v1599 = vrot.slane %v1597, 5
      %v1600 = vsel %vm263, %v1595, %v1599
      %v1601 = vshrl.u32 %v1452, 16
      %v1603 = vrot.slane %v1601, 4
      %v1604 = vor.u32 %v1603, %v1599
      %v1605 = vrot.slane %v1604, 4
      %v1607 = vshll.u32 %v1479, 16
      %v1609 = vrot.slane %v1607, 5
      %v1610 = vsel %vm263, %v1605, %v1609
      %v1612 = vshrl.u32 %v1453, 16
      %v1614 = vrot.slane %v1612, 4
      %v1615 = vshll.u32 %v1453, 16
      %v1617 = vrot.slane %v1615, 5
      %v1618 = vor.u32 %v1614, %v1617
      %v1619 = vrot.slane %v1618, 4
      %v1621 = vshll.u32 %v1454, 16
      %v1623 = vrot.slane %v1621, 5
      %v1624 = vsel %vm263, %v1619, %v1623
      %v1625 = vshrl.u32 %v1454, 16
      %v1627 = vrot.slane %v1625, 4
      %v1628 = vor.u32 %v1627, %v1623
      %v1629 = vrot.slane %v1628, 4
      %v1631 = vshll.u32 %v1480, 16
      %v1633 = vrot.slane %v1631, 5
      %v1634 = vsel %vm263, %v1629, %v1633
      %v1636 = vshrl.u32 %v1455, 16
      %v1638 = vrot.slane %v1636, 4
      %v1639 = vshll.u32 %v1455, 16
      %v1641 = vrot.slane %v1639, 5
      %v1642 = vor.u32 %v1638, %v1641
      %v1643 = vrot.slane %v1642, 4
      %v1645 = vshll.u32 %v1456, 16
      %v1647 = vrot.slane %v1645, 5
      %v1648 = vsel %vm263, %v1643, %v1647
      %v1649 = vshrl.u32 %v1456, 16
      %v1651 = vrot.slane %v1649, 4
      %v1652 = vor.u32 %v1651, %v1647
      %v1653 = vrot.slane %v1652, 4
      %v1655 = vshll.u32 %v1481, 16
      %v1657 = vrot.slane %v1655, 5
      %v1658 = vsel %vm263, %v1653, %v1657
      %v1660 = vshrl.u32 %v1457, 16
      %v1662 = vrot.slane %v1660, 4
      %v1663 = vshll.u32 %v1457, 16
      %v1665 = vrot.slane %v1663, 5
      %v1666 = vor.u32 %v1662, %v1665
      %v1667 = vrot.slane %v1666, 4
      %v1669 = vshll.u32 %v1458, 16
      %v1671 = vrot.slane %v1669, 5
      %v1672 = vsel %vm263, %v1667, %v1671
      %v1673 = vshrl.u32 %v1458, 16
      %v1675 = vrot.slane %v1673, 4
      %v1676 = vor.u32 %v1675, %v1671
      %v1677 = vrot.slane %v1676, 4
      %v1679 = vshll.u32 %v1482, 16
      %v1681 = vrot.slane %v1679, 5
      %v1682 = vsel %vm263, %v1677, %v1681
      %v1684 = vshrl.u32 %v1459, 16
      %v1686 = vrot.slane %v1684, 4
      %v1687 = vshll.u32 %v1459, 16
      %v1689 = vrot.slane %v1687, 5
      %v1690 = vor.u32 %v1686, %v1689
      %v1691 = vrot.slane %v1690, 4
      %v1693 = vshll.u32 %v1460, 16
      %v1695 = vrot.slane %v1693, 5
      %v1696 = vsel %vm263, %v1691, %v1695
      %v1697 = vshrl.u32 %v1460, 16
      %v1699 = vrot.slane %v1697, 4
      %v1700 = vor.u32 %v1699, %v1695
      %v1701 = vrot.slane %v1700, 4
      %v1703 = vshll.u32 %v1483, 16
      %v1705 = vrot.slane %v1703, 5
      %v1706 = vsel %vm263, %v1701, %v1705
      %v1708 = vshrl.u32 %v1461, 16
      %v1710 = vrot.slane %v1708, 4
      %v1711 = vshll.u32 %v1461, 16
      %v1713 = vrot.slane %v1711, 5
      %v1714 = vor.u32 %v1710, %v1713
      %v1715 = vrot.slane %v1714, 4
      %v1717 = vshll.u32 %v1462, 16
      %v1719 = vrot.slane %v1717, 5
      %v1720 = vsel %vm263, %v1715, %v1719
      %v1721 = vshrl.u32 %v1462, 16
      %v1723 = vrot.slane %v1721, 4
      %v1724 = vor.u32 %v1723, %v1719
      %v1725 = vrot.slane %v1724, 4
      %v1727 = vshll.u32 %v1484, 16
      %v1729 = vrot.slane %v1727, 5
      %v1730 = vsel %vm263, %v1725, %v1729
      %v1732 = vshrl.u32 %v1463, 16
      %v1734 = vrot.slane %v1732, 4
      %v1735 = vshll.u32 %v1463, 16
      %v1737 = vrot.slane %v1735, 5
      %v1738 = vor.u32 %v1734, %v1737
      %v1739 = vrot.slane %v1738, 4
      %v1741 = vshll.u32 %v1464, 16
      %v1743 = vrot.slane %v1741, 5
      %v1744 = vsel %vm263, %v1739, %v1743
      %v1745 = vshrl.u32 %v1464, 16
      %v1747 = vrot.slane %v1745, 4
      %v1748 = vor.u32 %v1747, %v1743
      %v1749 = vrot.slane %v1748, 4
      %v1751 = vshll.u32 %v1485, 16
      %v1753 = vrot.slane %v1751, 5
      %v1754 = vsel %vm263, %v1749, %v1753
      %v1756 = vshrl.u32 %v1465, 16
      %v1758 = vrot.slane %v1756, 4
      %v1759 = vshll.u32 %v1465, 16
      %v1761 = vrot.slane %v1759, 5
      %v1762 = vor.u32 %v1758, %v1761
      %v1763 = vrot.slane %v1762, 4
      %v1765 = vshll.u32 %v1466, 16
      %v1767 = vrot.slane %v1765, 5
      %v1768 = vsel %vm263, %v1763, %v1767
      %v1769 = vshrl.u32 %v1466, 16
      %v1771 = vrot.slane %v1769, 4
      %v1772 = vor.u32 %v1771, %v1767
      %v1773 = vrot.slane %v1772, 4
      %v1775 = vshll.u32 %v1486, 16
      %v1777 = vrot.slane %v1775, 5
      %v1778 = vsel %vm263, %v1773, %v1777
      %v1780 = vshrl.u32 %v1467, 16
      %v1782 = vrot.slane %v1780, 4
      %v1783 = vshll.u32 %v1467, 16
      %v1785 = vrot.slane %v1783, 5
      %v1786 = vor.u32 %v1782, %v1785
      %v1787 = vrot.slane %v1786, 4
      %v1789 = vshll.u32 %v1468, 16
      %v1791 = vrot.slane %v1789, 5
      %v1792 = vsel %vm263, %v1787, %v1791
      %v1793 = vshrl.u32 %v1468, 16
      %v1795 = vrot.slane %v1793, 4
      %v1796 = vor.u32 %v1795, %v1791
      %v1797 = vrot.slane %v1796, 4
      %v1799 = vshll.u32 %v1487, 16
      %v1801 = vrot.slane %v1799, 5
      %v1802 = vsel %vm263, %v1797, %v1801
      %v1804 = vshrl.u32 %v1469, 16
      %v1806 = vrot.slane %v1804, 4
      %v1807 = vshll.u32 %v1469, 16
      %v1809 = vrot.slane %v1807, 5
      %v1810 = vor.u32 %v1806, %v1809
      %v1811 = vrot.slane %v1810, 4
      %v1813 = vshll.u32 %v1470, 16
      %v1815 = vrot.slane %v1813, 5
      %v1816 = vsel %vm263, %v1811, %v1815
      %v1817 = vshrl.u32 %v1470, 16
      %v1819 = vrot.slane %v1817, 4
      %v1820 = vor.u32 %v1819, %v1815
      %v1821 = vrot.slane %v1820, 4
      %v1823 = vshll.u32 %v1488, 16
      %v1825 = vrot.slane %v1823, 5
      %v1826 = vsel %vm263, %v1821, %v1825
      %v1828 = vshrl.u32 %v1471, 16
      %v1830 = vrot.slane %v1828, 4
      %v1831 = vshll.u32 %v1471, 16
      %v1833 = vrot.slane %v1831, 5
      %v1834 = vor.u32 %v1830, %v1833
      %v1835 = vrot.slane %v1834, 4
      %v1837 = vshll.u32 %v1472, 16
      %v1839 = vrot.slane %v1837, 5
      %v1840 = vsel %vm263, %v1835, %v1839
      %v1841 = vshrl.u32 %v1472, 16
      %v1843 = vrot.slane %v1841, 4
      %v1844 = vor.u32 %v1843, %v1839
      %v1845 = vrot.slane %v1844, 4
      %v1847 = vshll.u32 %v1489, 16
      %v1849 = vrot.slane %v1847, 5
      %v1850 = vsel %vm263, %v1845, %v1849
      %v1852 = vshrl.u32 %v1473, 16
      %v1854 = vrot.slane %v1852, 4
      %v1855 = vshll.u32 %v1473, 16
      %v1857 = vrot.slane %v1855, 5
      %v1858 = vor.u32 %v1854, %v1857
      %v1859 = vrot.slane %v1858, 4
      %v1861 = vshll.u32 %v1474, 16
      %v1863 = vrot.slane %v1861, 5
      %v1864 = vsel %vm263, %v1859, %v1863
      %v1865 = vshrl.u32 %v1474, 16
      %v1867 = vrot.slane %v1865, 4
      %v1868 = vor.u32 %v1867, %v1863
      %v1869 = vrot.slane %v1868, 4
      %v1871 = vshll.u32 %v1490, 16
      %v1873 = vrot.slane %v1871, 5
      %v1874 = vsel %vm263, %v1869, %v1873
      %v1875 = vld [vmem:[%s1442] sm:$0xe]
      %v1876 = vld [vmem:[%s1442 + $0xc] sm:$0xe]
      %v1877 = vld [vmem:[%s1442 + $0x18] sm:$0xe]
      %v1878 = vld [vmem:[%s1442 + $0x24] sm:$0xe]
      %v1879 = vld [vmem:[%s1442 + $0x30] sm:$0xe]
      %v1880 = vld [vmem:[%s1442 + $0x3c] sm:$0xe]
      %v1881 = vld [vmem:[%s1442 + $0x48] sm:$0xe]
      %v1882 = vld [vmem:[%s1442 + $0x54] sm:$0xe]
      %v1883 = vld [vmem:[%s1442 + $0x60] sm:$0xe]
      %v1884 = vld [vmem:[%s1442 + $0x6c] sm:$0xe]
      %v1885 = vld [vmem:[%s1442 + $0x78] sm:$0xe]
      %v1886 = vld [vmem:[%s1442 + $0x84] sm:$0xe]
      %v1887 = vld [vmem:[%s1442 + $0x90] sm:$0xe]
      %v1888 = vld [vmem:[%s1442 + $0x9c] sm:$0xe]
      %v1889 = vld [vmem:[%s1442 + $0xa8] sm:$0xe]
      %v1890 = vld [vmem:[%s1442 + $0xb4] sm:$0xe]
      %v1939 = vrot.slane %v1875, 5
      %v1940 = vrot.slane %v1939, 4
      %v1941 = vrot.slane %v1444, 5
      %v1942 = vsel %vm714, %v1940, %v1941
      %v1943 = vrot.slane %v1941, 4
      %v1944 = vrot.slane %v1475, 5
      %v1945 = vsel %vm714, %v1943, %v1944
      %v1946 = vrot.slane %v1876, 5
      %v1947 = vrot.slane %v1946, 4
      %v1948 = vrot.slane %v1446, 5
      %v1949 = vsel %vm714, %v1947, %v1948
      %v1950 = vrot.slane %v1948, 4
      %v1951 = vrot.slane %v1476, 5
      %v1952 = vsel %vm714, %v1950, %v1951
      %v1953 = vrot.slane %v1877, 5
      %v1954 = vrot.slane %v1953, 4
      %v1955 = vrot.slane %v1448, 5
      %v1956 = vsel %vm714, %v1954, %v1955
      %v1957 = vrot.slane %v1955, 4
      %v1958 = vrot.slane %v1477, 5
      %v1959 = vsel %vm714, %v1957, %v1958
      %v1960 = vrot.slane %v1878, 5
      %v1961 = vrot.slane %v1960, 4
      %v1962 = vrot.slane %v1450, 5
      %v1963 = vsel %vm714, %v1961, %v1962
      %v1964 = vrot.slane %v1962, 4
      %v1965 = vrot.slane %v1478, 5
      %v1966 = vsel %vm714, %v1964, %v1965
      %v1967 = vrot.slane %v1879, 5
      %v1968 = vrot.slane %v1967, 4
      %v1969 = vrot.slane %v1452, 5
      %v1970 = vsel %vm714, %v1968, %v1969
      %v1971 = vrot.slane %v1969, 4
      %v1972 = vrot.slane %v1479, 5
      %v1973 = vsel %vm714, %v1971, %v1972
      %v1974 = vrot.slane %v1880, 5
      %v1975 = vrot.slane %v1974, 4
      %v1976 = vrot.slane %v1454, 5
      %v1977 = vsel %vm714, %v1975, %v1976
      %v1978 = vrot.slane %v1976, 4
      %v1979 = vrot.slane %v1480, 5
      %v1980 = vsel %vm714, %v1978, %v1979
      %v1981 = vrot.slane %v1881, 5
      %v1982 = vrot.slane %v1981, 4
      %v1983 = vrot.slane %v1456, 5
      %v1984 = vsel %vm714, %v1982, %v1983
      %v1985 = vrot.slane %v1983, 4
      %v1986 = vrot.slane %v1481, 5
      %v1987 = vsel %vm714, %v1985, %v1986
      %v1988 = vrot.slane %v1882, 5
      %v1989 = vrot.slane %v1988, 4
      %v1990 = vrot.slane %v1458, 5
      %v1991 = vsel %vm714, %v1989, %v1990
      %v1992 = vrot.slane %v1990, 4
      %v1993 = vrot.slane %v1482, 5
      %v1994 = vsel %vm714, %v1992, %v1993
      %v1995 = vrot.slane %v1883, 5
      %v1996 = vrot.slane %v1995, 4
      %v1997 = vrot.slane %v1460, 5
      %v1998 = vsel %vm714, %v1996, %v1997
      %v1999 = vrot.slane %v1997, 4
      %v2000 = vrot.slane %v1483, 5
      %v2001 = vsel %vm714, %v1999, %v2000
      %v2002 = vrot.slane %v1884, 5
      %v2003 = vrot.slane %v2002, 4
      %v2004 = vrot.slane %v1462, 5
      %v2005 = vsel %vm714, %v2003, %v2004
      %v2006 = vrot.slane %v2004, 4
      %v2007 = vrot.slane %v1484, 5
      %v2008 = vsel %vm714, %v2006, %v2007
      %v2009 = vrot.slane %v1885, 5
      %v2010 = vrot.slane %v2009, 4
      %v2011 = vrot.slane %v1464, 5
      %v2012 = vsel %vm714, %v2010, %v2011
      %v2013 = vrot.slane %v2011, 4
      %v2014 = vrot.slane %v1485, 5
      %v2015 = vsel %vm714, %v2013, %v2014
      %v2016 = vrot.slane %v1886, 5
      %v2017 = vrot.slane %v2016, 4
      %v2018 = vrot.slane %v1466, 5
      %v2019 = vsel %vm714, %v2017, %v2018
      %v2020 = vrot.slane %v2018, 4
      %v2021 = vrot.slane %v1486, 5
      %v2022 = vsel %vm714, %v2020, %v2021
      %v2023 = vrot.slane %v1887, 5
      %v2024 = vrot.slane %v2023, 4
      %v2025 = vrot.slane %v1468, 5
      %v2026 = vsel %vm714, %v2024, %v2025
      %v2027 = vrot.slane %v2025, 4
      %v2028 = vrot.slane %v1487, 5
      %v2029 = vsel %vm714, %v2027, %v2028
      %v2030 = vrot.slane %v1888, 5
      %v2031 = vrot.slane %v2030, 4
      %v2032 = vrot.slane %v1470, 5
      %v2033 = vsel %vm714, %v2031, %v2032
      %v2034 = vrot.slane %v2032, 4
      %v2035 = vrot.slane %v1488, 5
      %v2036 = vsel %vm714, %v2034, %v2035
      %v2037 = vrot.slane %v1889, 5
      %v2038 = vrot.slane %v2037, 4
      %v2039 = vrot.slane %v1472, 5
      %v2040 = vsel %vm714, %v2038, %v2039
      %v2041 = vrot.slane %v2039, 4
      %v2042 = vrot.slane %v1489, 5
      %v2043 = vsel %vm714, %v2041, %v2042
      %v2044 = vrot.slane %v1890, 5
      %v2045 = vrot.slane %v2044, 4
      %v2046 = vrot.slane %v1474, 5
      %v2047 = vsel %vm714, %v2045, %v2046
      %v2048 = vrot.slane %v2046, 4
      %v2049 = vrot.slane %v1490, 5
      %v2050 = vsel %vm714, %v2048, %v2049
      %v2067 = vunpack.c.l.b16 %v213
      %v2068 = vunpack.c.l.b16 %v214
      %v2069 = vunpack.c.l.b16 %v215
      %v2070 = vunpack.c.l.b16 %v216
      %v2071 = vunpack.c.l.b16 %v217
      %v2072 = vunpack.c.l.b16 %v218
      %v2073 = vunpack.c.l.b16 %v219
      %v2074 = vunpack.c.l.b16 %v220
      %v2075 = vunpack.c.l.b16 %v221
      %v2076 = vunpack.c.l.b16 %v222
      %v2077 = vunpack.c.l.b16 %v223
      %v2078 = vunpack.c.l.b16 %v224
      %v2079 = vunpack.c.l.b16 %v225
      %v2080 = vunpack.c.l.b16 %v226
      %v2081 = vunpack.c.l.b16 %v227
      %v2082 = vunpack.c.l.b16 %v228
      %v2083 = vunpack.c.l.b16 %v229
      %v2084 = vunpack.c.l.b16 %v230
      %v2085 = vunpack.c.l.b16 %v231
      %v2086 = vunpack.c.l.b16 %v232
      %v2087 = vunpack.c.l.b16 %v233
      %v2088 = vunpack.c.l.b16 %v234
      %v2089 = vunpack.c.l.b16 %v235
      %v2090 = vunpack.c.l.b16 %v236
      %v2091 = vunpack.c.l.b16 %v237
      %v2092 = vunpack.c.l.b16 %v238
      %v2093 = vunpack.c.l.b16 %v239
      %v2094 = vunpack.c.l.b16 %v240
      %v2095 = vunpack.c.l.b16 %v241
      %v2096 = vunpack.c.l.b16 %v242
      %v2097 = vunpack.c.l.b16 %v243
      %v2098 = vunpack.c.l.b16 %v244
      %v2099 = vpack.c.b16 %v2068, %v2067
      %v2100 = vpack.c.b16 %v2070, %v2069
      %v2101 = vpack.c.b16 %v2072, %v2071
      %v2102 = vpack.c.b16 %v2074, %v2073
      %v2103 = vpack.c.b16 %v2076, %v2075
      %v2104 = vpack.c.b16 %v2078, %v2077
      %v2105 = vpack.c.b16 %v2080, %v2079
      %v2106 = vpack.c.b16 %v2082, %v2081
      %v2107 = vpack.c.b16 %v2084, %v2083
      %v2108 = vpack.c.b16 %v2086, %v2085
      %v2109 = vpack.c.b16 %v2088, %v2087
      %v2110 = vpack.c.b16 %v2090, %v2089
      %v2111 = vpack.c.b16 %v2092, %v2091
      %v2112 = vpack.c.b16 %v2094, %v2093
      %v2113 = vpack.c.b16 %v2096, %v2095
      %v2114 = vpack.c.b16 %v2098, %v2097
      %v2131 = vunpack.c.l.b16 %v277
      %v2132 = vunpack.c.l.b16 %v287
      %v2133 = vunpack.c.l.b16 %v301
      %v2134 = vunpack.c.l.b16 %v311
      %v2135 = vunpack.c.l.b16 %v325
      %v2136 = vunpack.c.l.b16 %v335
      %v2137 = vunpack.c.l.b16 %v349
      %v2138 = vunpack.c.l.b16 %v359
      %v2139 = vunpack.c.l.b16 %v373
      %v2140 = vunpack.c.l.b16 %v383
      %v2141 = vunpack.c.l.b16 %v397
      %v2142 = vunpack.c.l.b16 %v407
      %v2143 = vunpack.c.l.b16 %v421
      %v2144 = vunpack.c.l.b16 %v431
      %v2145 = vunpack.c.l.b16 %v445
      %v2146 = vunpack.c.l.b16 %v455
      %v2147 = vunpack.c.l.b16 %v469
      %v2148 = vunpack.c.l.b16 %v479
      %v2149 = vunpack.c.l.b16 %v493
      %v2150 = vunpack.c.l.b16 %v503
      %v2151 = vunpack.c.l.b16 %v517
      %v2152 = vunpack.c.l.b16 %v527
      %v2153 = vunpack.c.l.b16 %v541
      %v2154 = vunpack.c.l.b16 %v551
      %v2155 = vunpack.c.l.b16 %v565
      %v2156 = vunpack.c.l.b16 %v575
      %v2157 = vunpack.c.l.b16 %v589
      %v2158 = vunpack.c.l.b16 %v599
      %v2159 = vunpack.c.l.b16 %v613
      %v2160 = vunpack.c.l.b16 %v623
      %v2161 = vunpack.c.l.b16 %v637
      %v2162 = vunpack.c.l.b16 %v647
      %v2163 = vpack.c.b16 %v2132, %v2131
      %v2164 = vpack.c.b16 %v2134, %v2133
      %v2165 = vpack.c.b16 %v2136, %v2135
      %v2166 = vpack.c.b16 %v2138, %v2137
      %v2167 = vpack.c.b16 %v2140, %v2139
      %v2168 = vpack.c.b16 %v2142, %v2141
      %v2169 = vpack.c.b16 %v2144, %v2143
      %v2170 = vpack.c.b16 %v2146, %v2145
      %v2171 = vpack.c.b16 %v2148, %v2147
      %v2172 = vpack.c.b16 %v2150, %v2149
      %v2173 = vpack.c.b16 %v2152, %v2151
      %v2174 = vpack.c.b16 %v2154, %v2153
      %v2175 = vpack.c.b16 %v2156, %v2155
      %v2176 = vpack.c.b16 %v2158, %v2157
      %v2177 = vpack.c.b16 %v2160, %v2159
      %v2178 = vpack.c.b16 %v2162, %v2161
      %v2195 = vunpack.c.l.b16 %v718
      %v2196 = vunpack.c.l.b16 %v721
      %v2197 = vunpack.c.l.b16 %v725
      %v2198 = vunpack.c.l.b16 %v728
      %v2199 = vunpack.c.l.b16 %v732
      %v2200 = vunpack.c.l.b16 %v735
      %v2201 = vunpack.c.l.b16 %v739
      %v2202 = vunpack.c.l.b16 %v742
      %v2203 = vunpack.c.l.b16 %v746
      %v2204 = vunpack.c.l.b16 %v749
      %v2205 = vunpack.c.l.b16 %v753
      %v2206 = vunpack.c.l.b16 %v756
      %v2207 = vunpack.c.l.b16 %v760
      %v2208 = vunpack.c.l.b16 %v763
      %v2209 = vunpack.c.l.b16 %v767
      %v2210 = vunpack.c.l.b16 %v770
      %v2211 = vunpack.c.l.b16 %v774
      %v2212 = vunpack.c.l.b16 %v777
      %v2213 = vunpack.c.l.b16 %v781
      %v2214 = vunpack.c.l.b16 %v784
      %v2215 = vunpack.c.l.b16 %v788
      %v2216 = vunpack.c.l.b16 %v791
      %v2217 = vunpack.c.l.b16 %v795
      %v2218 = vunpack.c.l.b16 %v798
      %v2219 = vunpack.c.l.b16 %v802
      %v2220 = vunpack.c.l.b16 %v805
      %v2221 = vunpack.c.l.b16 %v809
      %v2222 = vunpack.c.l.b16 %v812
      %v2223 = vunpack.c.l.b16 %v816
      %v2224 = vunpack.c.l.b16 %v819
      %v2225 = vunpack.c.l.b16 %v823
      %v2226 = vunpack.c.l.b16 %v826
      %v2227 = vpack.c.b16 %v2196, %v2195
      %v2228 = vpack.c.b16 %v2198, %v2197
      %v2229 = vpack.c.b16 %v2200, %v2199
      %v2230 = vpack.c.b16 %v2202, %v2201
      %v2231 = vpack.c.b16 %v2204, %v2203
      %v2232 = vpack.c.b16 %v2206, %v2205
      %v2233 = vpack.c.b16 %v2208, %v2207
      %v2234 = vpack.c.b16 %v2210, %v2209
      %v2235 = vpack.c.b16 %v2212, %v2211
      %v2236 = vpack.c.b16 %v2214, %v2213
      %v2237 = vpack.c.b16 %v2216, %v2215
      %v2238 = vpack.c.b16 %v2218, %v2217
      %v2239 = vpack.c.b16 %v2220, %v2219
      %v2240 = vpack.c.b16 %v2222, %v2221
      %v2241 = vpack.c.b16 %v2224, %v2223
      %v2242 = vpack.c.b16 %v2226, %v2225
      %v2275 = vunpack.c.l.b16 %v831
      %v2276 = vunpack.c.l.b16 %v832
      %v2277 = vunpack.c.l.b16 %v833
      %v2278 = vunpack.c.l.b16 %v834
      %v2279 = vunpack.c.l.b16 %v835
      %v2280 = vunpack.c.l.b16 %v836
      %v2281 = vunpack.c.l.b16 %v837
      %v2282 = vunpack.c.l.b16 %v838
      %v2283 = vunpack.c.l.b16 %v839
      %v2284 = vunpack.c.l.b16 %v840
      %v2285 = vunpack.c.l.b16 %v841
      %v2286 = vunpack.c.l.b16 %v842
      %v2287 = vunpack.c.l.b16 %v843
      %v2288 = vunpack.c.l.b16 %v844
      %v2289 = vunpack.c.l.b16 %v845
      %v2290 = vunpack.c.l.b16 %v846
      %v2291 = vunpack.c.l.b16 %v847
      %v2292 = vunpack.c.l.b16 %v848
      %v2293 = vunpack.c.l.b16 %v849
      %v2294 = vunpack.c.l.b16 %v850
      %v2295 = vunpack.c.l.b16 %v851
      %v2296 = vunpack.c.l.b16 %v852
      %v2297 = vunpack.c.l.b16 %v853
      %v2298 = vunpack.c.l.b16 %v854
      %v2299 = vunpack.c.l.b16 %v855
      %v2300 = vunpack.c.l.b16 %v856
      %v2301 = vunpack.c.l.b16 %v857
      %v2302 = vunpack.c.l.b16 %v858
      %v2303 = vunpack.c.l.b16 %v859
      %v2304 = vunpack.c.l.b16 %v860
      %v2305 = vunpack.c.l.b16 %v861
      %v2306 = vunpack.c.l.b16 %v862
      %v2307 = vpack.c.b16 %v2276, %v2275
      %v2308 = vpack.c.b16 %v2278, %v2277
      %v2309 = vpack.c.b16 %v2280, %v2279
      %v2310 = vpack.c.b16 %v2282, %v2281
      %v2311 = vpack.c.b16 %v2284, %v2283
      %v2312 = vpack.c.b16 %v2286, %v2285
      %v2313 = vpack.c.b16 %v2288, %v2287
      %v2314 = vpack.c.b16 %v2290, %v2289
      %v2315 = vpack.c.b16 %v2292, %v2291
      %v2316 = vpack.c.b16 %v2294, %v2293
      %v2317 = vpack.c.b16 %v2296, %v2295
      %v2318 = vpack.c.b16 %v2298, %v2297
      %v2319 = vpack.c.b16 %v2300, %v2299
      %v2320 = vpack.c.b16 %v2302, %v2301
      %v2321 = vpack.c.b16 %v2304, %v2303
      %v2322 = vpack.c.b16 %v2306, %v2305
      %v2339 = vunpack.c.l.b16 %v892
      %v2340 = vunpack.c.l.b16 %v902
      %v2341 = vunpack.c.l.b16 %v916
      %v2342 = vunpack.c.l.b16 %v926
      %v2343 = vunpack.c.l.b16 %v940
      %v2344 = vunpack.c.l.b16 %v950
      %v2345 = vunpack.c.l.b16 %v964
      %v2346 = vunpack.c.l.b16 %v974
      %v2347 = vunpack.c.l.b16 %v988
      %v2348 = vunpack.c.l.b16 %v998
      %v2349 = vunpack.c.l.b16 %v1012
      %v2350 = vunpack.c.l.b16 %v1022
      %v2351 = vunpack.c.l.b16 %v1036
      %v2352 = vunpack.c.l.b16 %v1046
      %v2353 = vunpack.c.l.b16 %v1060
      %v2354 = vunpack.c.l.b16 %v1070
      %v2355 = vunpack.c.l.b16 %v1084
      %v2356 = vunpack.c.l.b16 %v1094
      %v2357 = vunpack.c.l.b16 %v1108
      %v2358 = vunpack.c.l.b16 %v1118
      %v2359 = vunpack.c.l.b16 %v1132
      %v2360 = vunpack.c.l.b16 %v1142
      %v2361 = vunpack.c.l.b16 %v1156
      %v2362 = vunpack.c.l.b16 %v1166
      %v2363 = vunpack.c.l.b16 %v1180
      %v2364 = vunpack.c.l.b16 %v1190
      %v2365 = vunpack.c.l.b16 %v1204
      %v2366 = vunpack.c.l.b16 %v1214
      %v2367 = vunpack.c.l.b16 %v1228
      %v2368 = vunpack.c.l.b16 %v1238
      %v2369 = vunpack.c.l.b16 %v1252
      %v2370 = vunpack.c.l.b16 %v1262
      %v2371 = vpack.c.b16 %v2340, %v2339
      %v2372 = vpack.c.b16 %v2342, %v2341
      %v2373 = vpack.c.b16 %v2344, %v2343
      %v2374 = vpack.c.b16 %v2346, %v2345
      %v2375 = vpack.c.b16 %v2348, %v2347
      %v2376 = vpack.c.b16 %v2350, %v2349
      %v2377 = vpack.c.b16 %v2352, %v2351
      %v2378 = vpack.c.b16 %v2354, %v2353
      %v2379 = vpack.c.b16 %v2356, %v2355
      %v2380 = vpack.c.b16 %v2358, %v2357
      %v2381 = vpack.c.b16 %v2360, %v2359
      %v2382 = vpack.c.b16 %v2362, %v2361
      %v2383 = vpack.c.b16 %v2364, %v2363
      %v2384 = vpack.c.b16 %v2366, %v2365
      %v2385 = vpack.c.b16 %v2368, %v2367
      %v2386 = vpack.c.b16 %v2370, %v2369
      %v2403 = vunpack.c.l.b16 %v1330
      %v2404 = vunpack.c.l.b16 %v1333
      %v2405 = vunpack.c.l.b16 %v1337
      %v2406 = vunpack.c.l.b16 %v1340
      %v2407 = vunpack.c.l.b16 %v1344
      %v2408 = vunpack.c.l.b16 %v1347
      %v2409 = vunpack.c.l.b16 %v1351
      %v2410 = vunpack.c.l.b16 %v1354
      %v2411 = vunpack.c.l.b16 %v1358
      %v2412 = vunpack.c.l.b16 %v1361
      %v2413 = vunpack.c.l.b16 %v1365
      %v2414 = vunpack.c.l.b16 %v1368
      %v2415 = vunpack.c.l.b16 %v1372
      %v2416 = vunpack.c.l.b16 %v1375
      %v2417 = vunpack.c.l.b16 %v1379
      %v2418 = vunpack.c.l.b16 %v1382
      %v2419 = vunpack.c.l.b16 %v1386
      %v2420 = vunpack.c.l.b16 %v1389
      %v2421 = vunpack.c.l.b16 %v1393
      %v2422 = vunpack.c.l.b16 %v1396
      %v2423 = vunpack.c.l.b16 %v1400
      %v2424 = vunpack.c.l.b16 %v1403
      %v2425 = vunpack.c.l.b16 %v1407
      %v2426 = vunpack.c.l.b16 %v1410
      %v2427 = vunpack.c.l.b16 %v1414
      %v2428 = vunpack.c.l.b16 %v1417
      %v2429 = vunpack.c.l.b16 %v1421
      %v2430 = vunpack.c.l.b16 %v1424
      %v2431 = vunpack.c.l.b16 %v1428
      %v2432 = vunpack.c.l.b16 %v1431
      %v2433 = vunpack.c.l.b16 %v1435
      %v2434 = vunpack.c.l.b16 %v1438
      %v2435 = vpack.c.b16 %v2404, %v2403
      %v2436 = vpack.c.b16 %v2406, %v2405
      %v2437 = vpack.c.b16 %v2408, %v2407
      %v2438 = vpack.c.b16 %v2410, %v2409
      %v2439 = vpack.c.b16 %v2412, %v2411
      %v2440 = vpack.c.b16 %v2414, %v2413
      %v2441 = vpack.c.b16 %v2416, %v2415
      %v2442 = vpack.c.b16 %v2418, %v2417
      %v2443 = vpack.c.b16 %v2420, %v2419
      %v2444 = vpack.c.b16 %v2422, %v2421
      %v2445 = vpack.c.b16 %v2424, %v2423
      %v2446 = vpack.c.b16 %v2426, %v2425
      %v2447 = vpack.c.b16 %v2428, %v2427
      %v2448 = vpack.c.b16 %v2430, %v2429
      %v2449 = vpack.c.b16 %v2432, %v2431
      %v2450 = vpack.c.b16 %v2434, %v2433
      %v2483 = vunpack.c.l.b16 %v1443
      %v2484 = vunpack.c.l.b16 %v1444
      %v2485 = vunpack.c.l.b16 %v1445
      %v2486 = vunpack.c.l.b16 %v1446
      %v2487 = vunpack.c.l.b16 %v1447
      %v2488 = vunpack.c.l.b16 %v1448
      %v2489 = vunpack.c.l.b16 %v1449
      %v2490 = vunpack.c.l.b16 %v1450
      %v2491 = vunpack.c.l.b16 %v1451
      %v2492 = vunpack.c.l.b16 %v1452
      %v2493 = vunpack.c.l.b16 %v1453
      %v2494 = vunpack.c.l.b16 %v1454
      %v2495 = vunpack.c.l.b16 %v1455
      %v2496 = vunpack.c.l.b16 %v1456
      %v2497 = vunpack.c.l.b16 %v1457
      %v2498 = vunpack.c.l.b16 %v1458
      %v2499 = vunpack.c.l.b16 %v1459
      %v2500 = vunpack.c.l.b16 %v1460
      %v2501 = vunpack.c.l.b16 %v1461
      %v2502 = vunpack.c.l.b16 %v1462
      %v2503 = vunpack.c.l.b16 %v1463
      %v2504 = vunpack.c.l.b16 %v1464
      %v2505 = vunpack.c.l.b16 %v1465
      %v2506 = vunpack.c.l.b16 %v1466
      %v2507 = vunpack.c.l.b16 %v1467
      %v2508 = vunpack.c.l.b16 %v1468
      %v2509 = vunpack.c.l.b16 %v1469
      %v2510 = vunpack.c.l.b16 %v1470
      %v2511 = vunpack.c.l.b16 %v1471
      %v2512 = vunpack.c.l.b16 %v1472
      %v2513 = vunpack.c.l.b16 %v1473
      %v2514 = vunpack.c.l.b16 %v1474
      %v2515 = vpack.c.b16 %v2484, %v2483
      %v2516 = vpack.c.b16 %v2486, %v2485
      %v2517 = vpack.c.b16 %v2488, %v2487
      %v2518 = vpack.c.b16 %v2490, %v2489
      %v2519 = vpack.c.b16 %v2492, %v2491
      %v2520 = vpack.c.b16 %v2494, %v2493
      %v2521 = vpack.c.b16 %v2496, %v2495
      %v2522 = vpack.c.b16 %v2498, %v2497
      %v2523 = vpack.c.b16 %v2500, %v2499
      %v2524 = vpack.c.b16 %v2502, %v2501
      %v2525 = vpack.c.b16 %v2504, %v2503
      %v2526 = vpack.c.b16 %v2506, %v2505
      %v2527 = vpack.c.b16 %v2508, %v2507
      %v2528 = vpack.c.b16 %v2510, %v2509
      %v2529 = vpack.c.b16 %v2512, %v2511
      %v2530 = vpack.c.b16 %v2514, %v2513
      %v2547 = vunpack.c.l.b16 %v1504
      %v2548 = vunpack.c.l.b16 %v1514
      %v2549 = vunpack.c.l.b16 %v1528
      %v2550 = vunpack.c.l.b16 %v1538
      %v2551 = vunpack.c.l.b16 %v1552
      %v2552 = vunpack.c.l.b16 %v1562
      %v2553 = vunpack.c.l.b16 %v1576
      %v2554 = vunpack.c.l.b16 %v1586
      %v2555 = vunpack.c.l.b16 %v1600
      %v2556 = vunpack.c.l.b16 %v1610
      %v2557 = vunpack.c.l.b16 %v1624
      %v2558 = vunpack.c.l.b16 %v1634
      %v2559 = vunpack.c.l.b16 %v1648
      %v2560 = vunpack.c.l.b16 %v1658
      %v2561 = vunpack.c.l.b16 %v1672
      %v2562 = vunpack.c.l.b16 %v1682
      %v2563 = vunpack.c.l.b16 %v1696
      %v2564 = vunpack.c.l.b16 %v1706
      %v2565 = vunpack.c.l.b16 %v1720
      %v2566 = vunpack.c.l.b16 %v1730
      %v2567 = vunpack.c.l.b16 %v1744
      %v2568 = vunpack.c.l.b16 %v1754
      %v2569 = vunpack.c.l.b16 %v1768
      %v2570 = vunpack.c.l.b16 %v1778
      %v2571 = vunpack.c.l.b16 %v1792
      %v2572 = vunpack.c.l.b16 %v1802
      %v2573 = vunpack.c.l.b16 %v1816
      %v2574 = vunpack.c.l.b16 %v1826
      %v2575 = vunpack.c.l.b16 %v1840
      %v2576 = vunpack.c.l.b16 %v1850
      %v2577 = vunpack.c.l.b16 %v1864
      %v2578 = vunpack.c.l.b16 %v1874
      %v2579 = vpack.c.b16 %v2548, %v2547
      %v2580 = vpack.c.b16 %v2550, %v2549
      %v2581 = vpack.c.b16 %v2552, %v2551
      %v2582 = vpack.c.b16 %v2554, %v2553
      %v2583 = vpack.c.b16 %v2556, %v2555
      %v2584 = vpack.c.b16 %v2558, %v2557
      %v2585 = vpack.c.b16 %v2560, %v2559
      %v2586 = vpack.c.b16 %v2562, %v2561
      %v2587 = vpack.c.b16 %v2564, %v2563
      %v2588 = vpack.c.b16 %v2566, %v2565
      %v2589 = vpack.c.b16 %v2568, %v2567
      %v2590 = vpack.c.b16 %v2570, %v2569
      %v2591 = vpack.c.b16 %v2572, %v2571
      %v2592 = vpack.c.b16 %v2574, %v2573
      %v2593 = vpack.c.b16 %v2576, %v2575
      %v2594 = vpack.c.b16 %v2578, %v2577
      %v2611 = vunpack.c.l.b16 %v1942
      %v2612 = vunpack.c.l.b16 %v1945
      %v2613 = vunpack.c.l.b16 %v1949
      %v2614 = vunpack.c.l.b16 %v1952
      %v2615 = vunpack.c.l.b16 %v1956
      %v2616 = vunpack.c.l.b16 %v1959
      %v2617 = vunpack.c.l.b16 %v1963
      %v2618 = vunpack.c.l.b16 %v1966
      %v2619 = vunpack.c.l.b16 %v1970
      %v2620 = vunpack.c.l.b16 %v1973
      %v2621 = vunpack.c.l.b16 %v1977
      %v2622 = vunpack.c.l.b16 %v1980
      %v2623 = vunpack.c.l.b16 %v1984
      %v2624 = vunpack.c.l.b16 %v1987
      %v2625 = vunpack.c.l.b16 %v1991
      %v2626 = vunpack.c.l.b16 %v1994
      %v2627 = vunpack.c.l.b16 %v1998
      %v2628 = vunpack.c.l.b16 %v2001
      %v2629 = vunpack.c.l.b16 %v2005
      %v2630 = vunpack.c.l.b16 %v2008
      %v2631 = vunpack.c.l.b16 %v2012
      %v2632 = vunpack.c.l.b16 %v2015
      %v2633 = vunpack.c.l.b16 %v2019
      %v2634 = vunpack.c.l.b16 %v2022
      %v2635 = vunpack.c.l.b16 %v2026
      %v2636 = vunpack.c.l.b16 %v2029
      %v2637 = vunpack.c.l.b16 %v2033
      %v2638 = vunpack.c.l.b16 %v2036
      %v2639 = vunpack.c.l.b16 %v2040
      %v2640 = vunpack.c.l.b16 %v2043
      %v2641 = vunpack.c.l.b16 %v2047
      %v2642 = vunpack.c.l.b16 %v2050
      %v2643 = vpack.c.b16 %v2612, %v2611
      %v2644 = vpack.c.b16 %v2614, %v2613
      %v2645 = vpack.c.b16 %v2616, %v2615
      %v2646 = vpack.c.b16 %v2618, %v2617
      %v2647 = vpack.c.b16 %v2620, %v2619
      %v2648 = vpack.c.b16 %v2622, %v2621
      %v2649 = vpack.c.b16 %v2624, %v2623
      %v2650 = vpack.c.b16 %v2626, %v2625
      %v2651 = vpack.c.b16 %v2628, %v2627
      %v2652 = vpack.c.b16 %v2630, %v2629
      %v2653 = vpack.c.b16 %v2632, %v2631
      %v2654 = vpack.c.b16 %v2634, %v2633
      %v2655 = vpack.c.b16 %v2636, %v2635
      %v2656 = vpack.c.b16 %v2638, %v2637
      %v2657 = vpack.c.b16 %v2640, %v2639
      %v2658 = vpack.c.b16 %v2642, %v2641
      %v2675 = vld [vmem:[%s1] sm:$0xf]
      %v2676 = vld [vmem:[%s1 + $0x4] sm:$0xf]
      %v2677 = vld [vmem:[%s1 + $0x8] sm:$0xf]
      %v2678 = vld [vmem:[%s1 + $0xc] sm:$0xf]
      %v2679 = vld [vmem:[%s1 + $0x10] sm:$0xf]
      %v2680 = vld [vmem:[%s1 + $0x14] sm:$0xf]
      %v2681 = vld [vmem:[%s1 + $0x18] sm:$0xf]
      %v2682 = vld [vmem:[%s1 + $0x1c] sm:$0xf]
      %v2683 = vld [vmem:[%s1 + $0x20] sm:$0xf]
      %v2684 = vld [vmem:[%s1 + $0x24] sm:$0xf]
      %v2685 = vld [vmem:[%s1 + $0x28] sm:$0xf]
      %v2686 = vld [vmem:[%s1 + $0x2c] sm:$0xf]
      %v2687 = vld [vmem:[%s1 + $0x30] sm:$0xf]
      %v2688 = vld [vmem:[%s1 + $0x34] sm:$0xf]
      %v2689 = vld [vmem:[%s1 + $0x38] sm:$0xf]
      %v2690 = vld [vmem:[%s1 + $0x3c] sm:$0xf]
      %v2691 = vld [vmem:[%s1 + $0x40] sm:$0xf]
      %v2692 = vld [vmem:[%s1 + $0x44] sm:$0xf]
      %v2693 = vld [vmem:[%s1 + $0x48] sm:$0xf]
      %v2694 = vld [vmem:[%s1 + $0x4c] sm:$0xf]
      %v2695 = vld [vmem:[%s1 + $0x50] sm:$0xf]
      %v2696 = vld [vmem:[%s1 + $0x54] sm:$0xf]
      %v2697 = vld [vmem:[%s1 + $0x58] sm:$0xf]
      %v2698 = vld [vmem:[%s1 + $0x5c] sm:$0xf]
      %v2699 = vld [vmem:[%s1 + $0x60] sm:$0xf]
      %v2700 = vld [vmem:[%s1 + $0x64] sm:$0xf]
      %v2701 = vld [vmem:[%s1 + $0x68] sm:$0xf]
      %v2702 = vld [vmem:[%s1 + $0x6c] sm:$0xf]
      %v2703 = vld [vmem:[%s1 + $0x70] sm:$0xf]
      %v2704 = vld [vmem:[%s1 + $0x74] sm:$0xf]
      %v2705 = vld [vmem:[%s1 + $0x78] sm:$0xf]
      %v2706 = vld [vmem:[%s1 + $0x7c] sm:$0xf]
      %v2707 = vld [vmem:[%s1 + $0x80] sm:$0xf]
      %v2708 = vld [vmem:[%s1 + $0x84] sm:$0xf]
      %v2709 = vld [vmem:[%s1 + $0x88] sm:$0xf]
      %v2710 = vld [vmem:[%s1 + $0x8c] sm:$0xf]
      %v2711 = vld [vmem:[%s1 + $0x90] sm:$0xf]
      %v2712 = vld [vmem:[%s1 + $0x94] sm:$0xf]
      %v2713 = vld [vmem:[%s1 + $0x98] sm:$0xf]
      %v2714 = vld [vmem:[%s1 + $0x9c] sm:$0xf]
      %v2715 = vld [vmem:[%s1 + $0xa0] sm:$0xf]
      %v2716 = vld [vmem:[%s1 + $0xa4] sm:$0xf]
      %v2717 = vld [vmem:[%s1 + $0xa8] sm:$0xf]
      %v2718 = vld [vmem:[%s1 + $0xac] sm:$0xf]
      %v2719 = vld [vmem:[%s1 + $0xb0] sm:$0xf]
      %v2720 = vld [vmem:[%s1 + $0xb4] sm:$0xf]
      %v2721 = vld [vmem:[%s1 + $0xb8] sm:$0xf]
      %v2722 = vld [vmem:[%s1 + $0xbc] sm:$0xf]
      %v2723 = vld [vmem:[%s1 + $0xc0] sm:$0xf]
      %v2724 = vld [vmem:[%s1 + $0xc4] sm:$0xf]
      %v2725 = vld [vmem:[%s1 + $0xc8] sm:$0xf]
      %v2726 = vld [vmem:[%s1 + $0xcc] sm:$0xf]
      %v2727 = vld [vmem:[%s1 + $0xd0] sm:$0xf]
      %v2728 = vld [vmem:[%s1 + $0xd4] sm:$0xf]
      %v2729 = vld [vmem:[%s1 + $0xd8] sm:$0xf]
      %v2730 = vld [vmem:[%s1 + $0xdc] sm:$0xf]
      %v2731 = vld [vmem:[%s1 + $0xe0] sm:$0xf]
      %v2732 = vld [vmem:[%s1 + $0xe4] sm:$0xf]
      %v2733 = vld [vmem:[%s1 + $0xe8] sm:$0xf]
      %v2734 = vld [vmem:[%s1 + $0xec] sm:$0xf]
      %v2735 = vld [vmem:[%s1 + $0xf0] sm:$0xf]
      %v2736 = vld [vmem:[%s1 + $0xf4] sm:$0xf]
      %v2737 = vld [vmem:[%s1 + $0xf8] sm:$0xf]
      %v2738 = vld [vmem:[%s1 + $0xfc] sm:$0xf]
      %v2739 = vld [vmem:[%s1 + $0x100] sm:$0xf]
      %v2740 = vld [vmem:[%s1 + $0x104] sm:$0xf]
      %v2741 = vld [vmem:[%s1 + $0x108] sm:$0xf]
      %v2742 = vld [vmem:[%s1 + $0x10c] sm:$0xf]
      %v2743 = vld [vmem:[%s1 + $0x110] sm:$0xf]
      %v2744 = vld [vmem:[%s1 + $0x114] sm:$0xf]
      %v2745 = vld [vmem:[%s1 + $0x118] sm:$0xf]
      %v2746 = vld [vmem:[%s1 + $0x11c] sm:$0xf]
      %v2747 = vld [vmem:[%s1 + $0x120] sm:$0xf]
      %v2748 = vld [vmem:[%s1 + $0x124] sm:$0xf]
      %v2749 = vld [vmem:[%s1 + $0x128] sm:$0xf]
      %v2750 = vld [vmem:[%s1 + $0x12c] sm:$0xf]
      %v2751 = vld [vmem:[%s1 + $0x130] sm:$0xf]
      %v2752 = vld [vmem:[%s1 + $0x134] sm:$0xf]
      %v2753 = vld [vmem:[%s1 + $0x138] sm:$0xf]
      %v2754 = vld [vmem:[%s1 + $0x13c] sm:$0xf]
      %v2755 = vld [vmem:[%s1 + $0x140] sm:$0xf]
      %v2756 = vld [vmem:[%s1 + $0x144] sm:$0xf]
      %v2757 = vld [vmem:[%s1 + $0x148] sm:$0xf]
      %v2758 = vld [vmem:[%s1 + $0x14c] sm:$0xf]
      %v2759 = vld [vmem:[%s1 + $0x150] sm:$0xf]
      %v2760 = vld [vmem:[%s1 + $0x154] sm:$0xf]
      %v2761 = vld [vmem:[%s1 + $0x158] sm:$0xf]
      %v2762 = vld [vmem:[%s1 + $0x15c] sm:$0xf]
      %v2763 = vld [vmem:[%s1 + $0x160] sm:$0xf]
      %v2764 = vld [vmem:[%s1 + $0x164] sm:$0xf]
      %v2765 = vld [vmem:[%s1 + $0x168] sm:$0xf]
      %v2766 = vld [vmem:[%s1 + $0x16c] sm:$0xf]
      %v2767 = vld [vmem:[%s1 + $0x170] sm:$0xf]
      %v2768 = vld [vmem:[%s1 + $0x174] sm:$0xf]
      %v2769 = vld [vmem:[%s1 + $0x178] sm:$0xf]
      %v2770 = vld [vmem:[%s1 + $0x17c] sm:$0xf]
      %v2771 = vld [vmem:[%s1 + $0x180] sm:$0xf]
      %v2772 = vld [vmem:[%s1 + $0x184] sm:$0xf]
      %v2773 = vld [vmem:[%s1 + $0x188] sm:$0xf]
      %v2774 = vld [vmem:[%s1 + $0x18c] sm:$0xf]
      %v2775 = vld [vmem:[%s1 + $0x190] sm:$0xf]
      %v2776 = vld [vmem:[%s1 + $0x194] sm:$0xf]
      %v2777 = vld [vmem:[%s1 + $0x198] sm:$0xf]
      %v2778 = vld [vmem:[%s1 + $0x19c] sm:$0xf]
      %v2779 = vld [vmem:[%s1 + $0x1a0] sm:$0xf]
      %v2780 = vld [vmem:[%s1 + $0x1a4] sm:$0xf]
      %v2781 = vld [vmem:[%s1 + $0x1a8] sm:$0xf]
      %v2782 = vld [vmem:[%s1 + $0x1ac] sm:$0xf]
      %v2783 = vld [vmem:[%s1 + $0x1b0] sm:$0xf]
      %v2784 = vld [vmem:[%s1 + $0x1b4] sm:$0xf]
      %v2785 = vld [vmem:[%s1 + $0x1b8] sm:$0xf]
      %v2786 = vld [vmem:[%s1 + $0x1bc] sm:$0xf]
      %v2787 = vld [vmem:[%s1 + $0x1c0] sm:$0xf]
      %v2788 = vld [vmem:[%s1 + $0x1c4] sm:$0xf]
      %v2789 = vld [vmem:[%s1 + $0x1c8] sm:$0xf]
      %v2790 = vld [vmem:[%s1 + $0x1cc] sm:$0xf]
      %v2791 = vld [vmem:[%s1 + $0x1d0] sm:$0xf]
      %v2792 = vld [vmem:[%s1 + $0x1d4] sm:$0xf]
      %v2793 = vld [vmem:[%s1 + $0x1d8] sm:$0xf]
      %v2794 = vld [vmem:[%s1 + $0x1dc] sm:$0xf]
      %v2795 = vld [vmem:[%s1 + $0x1e0] sm:$0xf]
      %v2796 = vld [vmem:[%s1 + $0x1e4] sm:$0xf]
      %v2797 = vld [vmem:[%s1 + $0x1e8] sm:$0xf]
      %v2798 = vld [vmem:[%s1 + $0x1ec] sm:$0xf]
      %v2799 = vld [vmem:[%s1 + $0x1f0] sm:$0xf]
      %v2800 = vld [vmem:[%s1 + $0x1f4] sm:$0xf]
      %v2801 = vld [vmem:[%s1 + $0x1f8] sm:$0xf]
      %v2802 = vld [vmem:[%s1 + $0x1fc] sm:$0xf]
      %v2803 = vld [vmem:[%s1 + $0x200] sm:$0xf]
      %v2804 = vld [vmem:[%s1 + $0x204] sm:$0xf]
      %v2805 = vld [vmem:[%s1 + $0x208] sm:$0xf]
      %v2806 = vld [vmem:[%s1 + $0x20c] sm:$0xf]
      %v2807 = vld [vmem:[%s1 + $0x210] sm:$0xf]
      %v2808 = vld [vmem:[%s1 + $0x214] sm:$0xf]
      %v2809 = vld [vmem:[%s1 + $0x218] sm:$0xf]
      %v2810 = vld [vmem:[%s1 + $0x21c] sm:$0xf]
      %v2811 = vld [vmem:[%s1 + $0x220] sm:$0xf]
      %v2812 = vld [vmem:[%s1 + $0x224] sm:$0xf]
      %v2813 = vld [vmem:[%s1 + $0x228] sm:$0xf]
      %v2814 = vld [vmem:[%s1 + $0x22c] sm:$0xf]
      %v2815 = vld [vmem:[%s1 + $0x230] sm:$0xf]
      %v2816 = vld [vmem:[%s1 + $0x234] sm:$0xf]
      %v2817 = vld [vmem:[%s1 + $0x238] sm:$0xf]
      %v2818 = vld [vmem:[%s1 + $0x23c] sm:$0xf]
      %v2963 = vunpack.c.l.b16 %v2675
      %v2964 = vunpack.c.l.b16 %v2676
      %v2965 = vunpack.c.l.b16 %v2677
      %v2966 = vunpack.c.l.b16 %v2678
      %v2967 = vunpack.c.l.b16 %v2679
      %v2968 = vunpack.c.l.b16 %v2680
      %v2969 = vunpack.c.l.b16 %v2681
      %v2970 = vunpack.c.l.b16 %v2682
      %v2971 = vunpack.c.l.b16 %v2683
      %v2972 = vunpack.c.l.b16 %v2684
      %v2973 = vunpack.c.l.b16 %v2685
      %v2974 = vunpack.c.l.b16 %v2686
      %v2975 = vunpack.c.l.b16 %v2687
      %v2976 = vunpack.c.l.b16 %v2688
      %v2977 = vunpack.c.l.b16 %v2689
      %v2978 = vunpack.c.l.b16 %v2690
      %v2979 = vunpack.c.l.b16 %v2691
      %v2980 = vunpack.c.l.b16 %v2692
      %v2981 = vunpack.c.l.b16 %v2693
      %v2982 = vunpack.c.l.b16 %v2694
      %v2983 = vunpack.c.l.b16 %v2695
      %v2984 = vunpack.c.l.b16 %v2696
      %v2985 = vunpack.c.l.b16 %v2697
      %v2986 = vunpack.c.l.b16 %v2698
      %v2987 = vunpack.c.l.b16 %v2699
      %v2988 = vunpack.c.l.b16 %v2700
      %v2989 = vunpack.c.l.b16 %v2701
      %v2990 = vunpack.c.l.b16 %v2702
      %v2991 = vunpack.c.l.b16 %v2703
      %v2992 = vunpack.c.l.b16 %v2704
      %v2993 = vunpack.c.l.b16 %v2705
      %v2994 = vunpack.c.l.b16 %v2706
      %v2995 = vunpack.c.l.b16 %v2707
      %v2996 = vunpack.c.l.b16 %v2708
      %v2997 = vunpack.c.l.b16 %v2709
      %v2998 = vunpack.c.l.b16 %v2710
      %v2999 = vunpack.c.l.b16 %v2711
      %v3000 = vunpack.c.l.b16 %v2712
      %v3001 = vunpack.c.l.b16 %v2713
      %v3002 = vunpack.c.l.b16 %v2714
      %v3003 = vunpack.c.l.b16 %v2715
      %v3004 = vunpack.c.l.b16 %v2716
      %v3005 = vunpack.c.l.b16 %v2717
      %v3006 = vunpack.c.l.b16 %v2718
      %v3007 = vunpack.c.l.b16 %v2719
      %v3008 = vunpack.c.l.b16 %v2720
      %v3009 = vunpack.c.l.b16 %v2721
      %v3010 = vunpack.c.l.b16 %v2722
      %v3011 = vunpack.c.l.b16 %v2723
      %v3012 = vunpack.c.l.b16 %v2724
      %v3013 = vunpack.c.l.b16 %v2725
      %v3014 = vunpack.c.l.b16 %v2726
      %v3015 = vunpack.c.l.b16 %v2727
      %v3016 = vunpack.c.l.b16 %v2728
      %v3017 = vunpack.c.l.b16 %v2729
      %v3018 = vunpack.c.l.b16 %v2730
      %v3019 = vunpack.c.l.b16 %v2731
      %v3020 = vunpack.c.l.b16 %v2732
      %v3021 = vunpack.c.l.b16 %v2733
      %v3022 = vunpack.c.l.b16 %v2734
      %v3023 = vunpack.c.l.b16 %v2735
      %v3024 = vunpack.c.l.b16 %v2736
      %v3025 = vunpack.c.l.b16 %v2737
      %v3026 = vunpack.c.l.b16 %v2738
      %v3027 = vunpack.c.l.b16 %v2739
      %v3028 = vunpack.c.l.b16 %v2740
      %v3029 = vunpack.c.l.b16 %v2741
      %v3030 = vunpack.c.l.b16 %v2742
      %v3031 = vunpack.c.l.b16 %v2743
      %v3032 = vunpack.c.l.b16 %v2744
      %v3033 = vunpack.c.l.b16 %v2745
      %v3034 = vunpack.c.l.b16 %v2746
      %v3035 = vunpack.c.l.b16 %v2747
      %v3036 = vunpack.c.l.b16 %v2748
      %v3037 = vunpack.c.l.b16 %v2749
      %v3038 = vunpack.c.l.b16 %v2750
      %v3039 = vunpack.c.l.b16 %v2751
      %v3040 = vunpack.c.l.b16 %v2752
      %v3041 = vunpack.c.l.b16 %v2753
      %v3042 = vunpack.c.l.b16 %v2754
      %v3043 = vunpack.c.l.b16 %v2755
      %v3044 = vunpack.c.l.b16 %v2756
      %v3045 = vunpack.c.l.b16 %v2757
      %v3046 = vunpack.c.l.b16 %v2758
      %v3047 = vunpack.c.l.b16 %v2759
      %v3048 = vunpack.c.l.b16 %v2760
      %v3049 = vunpack.c.l.b16 %v2761
      %v3050 = vunpack.c.l.b16 %v2762
      %v3051 = vunpack.c.l.b16 %v2763
      %v3052 = vunpack.c.l.b16 %v2764
      %v3053 = vunpack.c.l.b16 %v2765
      %v3054 = vunpack.c.l.b16 %v2766
      %v3055 = vunpack.c.l.b16 %v2767
      %v3056 = vunpack.c.l.b16 %v2768
      %v3057 = vunpack.c.l.b16 %v2769
      %v3058 = vunpack.c.l.b16 %v2770
      %v3059 = vunpack.c.l.b16 %v2771
      %v3060 = vunpack.c.l.b16 %v2772
      %v3061 = vunpack.c.l.b16 %v2773
      %v3062 = vunpack.c.l.b16 %v2774
      %v3063 = vunpack.c.l.b16 %v2775
      %v3064 = vunpack.c.l.b16 %v2776
      %v3065 = vunpack.c.l.b16 %v2777
      %v3066 = vunpack.c.l.b16 %v2778
      %v3067 = vunpack.c.l.b16 %v2779
      %v3068 = vunpack.c.l.b16 %v2780
      %v3069 = vunpack.c.l.b16 %v2781
      %v3070 = vunpack.c.l.b16 %v2782
      %v3071 = vunpack.c.l.b16 %v2783
      %v3072 = vunpack.c.l.b16 %v2784
      %v3073 = vunpack.c.l.b16 %v2785
      %v3074 = vunpack.c.l.b16 %v2786
      %v3075 = vunpack.c.l.b16 %v2787
      %v3076 = vunpack.c.l.b16 %v2788
      %v3077 = vunpack.c.l.b16 %v2789
      %v3078 = vunpack.c.l.b16 %v2790
      %v3079 = vunpack.c.l.b16 %v2791
      %v3080 = vunpack.c.l.b16 %v2792
      %v3081 = vunpack.c.l.b16 %v2793
      %v3082 = vunpack.c.l.b16 %v2794
      %v3083 = vunpack.c.l.b16 %v2795
      %v3084 = vunpack.c.l.b16 %v2796
      %v3085 = vunpack.c.l.b16 %v2797
      %v3086 = vunpack.c.l.b16 %v2798
      %v3087 = vunpack.c.l.b16 %v2799
      %v3088 = vunpack.c.l.b16 %v2800
      %v3089 = vunpack.c.l.b16 %v2801
      %v3090 = vunpack.c.l.b16 %v2802
      %v3091 = vunpack.c.l.b16 %v2803
      %v3092 = vunpack.c.l.b16 %v2804
      %v3093 = vunpack.c.l.b16 %v2805
      %v3094 = vunpack.c.l.b16 %v2806
      %v3095 = vunpack.c.l.b16 %v2807
      %v3096 = vunpack.c.l.b16 %v2808
      %v3097 = vunpack.c.l.b16 %v2809
      %v3098 = vunpack.c.l.b16 %v2810
      %v3099 = vunpack.c.l.b16 %v2811
      %v3100 = vunpack.c.l.b16 %v2812
      %v3101 = vunpack.c.l.b16 %v2813
      %v3102 = vunpack.c.l.b16 %v2814
      %v3103 = vunpack.c.l.b16 %v2815
      %v3104 = vunpack.c.l.b16 %v2816
      %v3105 = vunpack.c.l.b16 %v2817
      %v3106 = vunpack.c.l.b16 %v2818
      %v3107 = vpack.c.b16 %v2964, %v2963
      %v3108 = vpack.c.b16 %v2966, %v2965
      %v3109 = vpack.c.b16 %v2968, %v2967
      %v3110 = vpack.c.b16 %v2970, %v2969
      %v3111 = vpack.c.b16 %v2972, %v2971
      %v3112 = vpack.c.b16 %v2974, %v2973
      %v3113 = vpack.c.b16 %v2976, %v2975
      %v3114 = vpack.c.b16 %v2978, %v2977
      %v3115 = vpack.c.b16 %v2980, %v2979
      %v3116 = vpack.c.b16 %v2982, %v2981
      %v3117 = vpack.c.b16 %v2984, %v2983
      %v3118 = vpack.c.b16 %v2986, %v2985
      %v3119 = vpack.c.b16 %v2988, %v2987
      %v3120 = vpack.c.b16 %v2990, %v2989
      %v3121 = vpack.c.b16 %v2992, %v2991
      %v3122 = vpack.c.b16 %v2994, %v2993
      %v3123 = vpack.c.b16 %v2996, %v2995
      %v3124 = vpack.c.b16 %v2998, %v2997
      %v3125 = vpack.c.b16 %v3000, %v2999
      %v3126 = vpack.c.b16 %v3002, %v3001
      %v3127 = vpack.c.b16 %v3004, %v3003
      %v3128 = vpack.c.b16 %v3006, %v3005
      %v3129 = vpack.c.b16 %v3008, %v3007
      %v3130 = vpack.c.b16 %v3010, %v3009
      %v3131 = vpack.c.b16 %v3012, %v3011
      %v3132 = vpack.c.b16 %v3014, %v3013
      %v3133 = vpack.c.b16 %v3016, %v3015
      %v3134 = vpack.c.b16 %v3018, %v3017
      %v3135 = vpack.c.b16 %v3020, %v3019
      %v3136 = vpack.c.b16 %v3022, %v3021
      %v3137 = vpack.c.b16 %v3024, %v3023
      %v3138 = vpack.c.b16 %v3026, %v3025
      %v3139 = vpack.c.b16 %v3028, %v3027
      %v3140 = vpack.c.b16 %v3030, %v3029
      %v3141 = vpack.c.b16 %v3032, %v3031
      %v3142 = vpack.c.b16 %v3034, %v3033
      %v3143 = vpack.c.b16 %v3036, %v3035
      %v3144 = vpack.c.b16 %v3038, %v3037
      %v3145 = vpack.c.b16 %v3040, %v3039
      %v3146 = vpack.c.b16 %v3042, %v3041
      %v3147 = vpack.c.b16 %v3044, %v3043
      %v3148 = vpack.c.b16 %v3046, %v3045
      %v3149 = vpack.c.b16 %v3048, %v3047
      %v3150 = vpack.c.b16 %v3050, %v3049
      %v3151 = vpack.c.b16 %v3052, %v3051
      %v3152 = vpack.c.b16 %v3054, %v3053
      %v3153 = vpack.c.b16 %v3056, %v3055
      %v3154 = vpack.c.b16 %v3058, %v3057
      %v3155 = vpack.c.b16 %v3060, %v3059
      %v3156 = vpack.c.b16 %v3062, %v3061
      %v3157 = vpack.c.b16 %v3064, %v3063
      %v3158 = vpack.c.b16 %v3066, %v3065
      %v3159 = vpack.c.b16 %v3068, %v3067
      %v3160 = vpack.c.b16 %v3070, %v3069
      %v3161 = vpack.c.b16 %v3072, %v3071
      %v3162 = vpack.c.b16 %v3074, %v3073
      %v3163 = vpack.c.b16 %v3076, %v3075
      %v3164 = vpack.c.b16 %v3078, %v3077
      %v3165 = vpack.c.b16 %v3080, %v3079
      %v3166 = vpack.c.b16 %v3082, %v3081
      %v3167 = vpack.c.b16 %v3084, %v3083
      %v3168 = vpack.c.b16 %v3086, %v3085
      %v3169 = vpack.c.b16 %v3088, %v3087
      %v3170 = vpack.c.b16 %v3090, %v3089
      %v3171 = vpack.c.b16 %v3092, %v3091
      %v3172 = vpack.c.b16 %v3094, %v3093
      %v3173 = vpack.c.b16 %v3096, %v3095
      %v3174 = vpack.c.b16 %v3098, %v3097
      %v3175 = vpack.c.b16 %v3100, %v3099
      %v3176 = vpack.c.b16 %v3102, %v3101
      %v3177 = vpack.c.b16 %v3104, %v3103
      %v3178 = vpack.c.b16 %v3106, %v3105
      %3251 = vmatprep.subr.bf16.mxu0 0
      %3252 = vmatpush1.bf16.msra.mxu0 %v3114
      %3253 = vmatprep.subr.bf16.mxu0 0
      %3254 = vmatpush1.bf16.msra.mxu0 %v3113
      %3255 = vmatprep.subr.bf16.mxu0 0
      %3256 = vmatpush1.bf16.msra.mxu0 %v3112
      %3257 = vmatprep.subr.bf16.mxu0 0
      %3258 = vmatpush1.bf16.msra.mxu0 %v3111
      %3259 = vmatprep.subr.bf16.mxu0 0
      %3260 = vmatpush1.bf16.msra.mxu0 %v3110
      %3261 = vmatprep.subr.bf16.mxu0 0
      %3262 = vmatpush1.bf16.msra.mxu0 %v3109
      %3263 = vmatprep.subr.bf16.mxu0 0
      %3264 = vmatpush1.bf16.msra.mxu0 %v3108
      %3265 = vmatprep.subr.bf16.mxu0 0
      %3266 = vmatpush1.bf16.msra.mxu0 %v3107
      %3267 = vmatprep.subr.bf16.mxu0 0
      %3268 = vmatpush2.bf16.msra.mxu0 %v3122
      %3269 = vmatprep.subr.bf16.mxu0 0
      %3270 = vmatpush2.bf16.msra.mxu0 %v3121
      %3271 = vmatprep.subr.bf16.mxu0 0
      %3272 = vmatpush2.bf16.msra.mxu0 %v3120
      %3273 = vmatprep.subr.bf16.mxu0 0
      %3274 = vmatpush2.bf16.msra.mxu0 %v3119
      %3275 = vmatprep.subr.bf16.mxu0 0
      %3276 = vmatpush2.bf16.msra.mxu0 %v3118
      %3277 = vmatprep.subr.bf16.mxu0 0
      %3278 = vmatpush2.bf16.msra.mxu0 %v3117
      %3279 = vmatprep.subr.bf16.mxu0 0
      %3280 = vmatpush2.bf16.msra.mxu0 %v3116
      %3281 = vmatprep.subr.bf16.mxu0 0
      %3282 = vmatpush2.bf16.msra.mxu0 %v3115
      %3283 = vmatprep.mubr.bf16.mxu0 %v2163
      %3284 = vmatmul.mubr.bf16.gmra.mxu0 %v2099
      %v3285 = vpop.f32.mrf.mxu0
      %v3286 = vadd.f32 0.0, %v3285
      %v3287 = vpop.f32.mrf.mxu0
      %v3288 = vpop.f32.mrf.mxu0
      %v3289 = vadd.f32 0.0, %v3288
      %v3290 = vpop.f32.mrf.mxu0
      %3291 = vmatprep.mubr.bf16.mxu0 %v2164
      %3292 = vmatmul.mubr.bf16.gmra.mxu0 %v2100
      %v3293 = vpop.f32.mrf.mxu0
      %v3294 = vadd.f32 0.0, %v3293
      %v3295 = vpop.f32.mrf.mxu0
      %v3296 = vpop.f32.mrf.mxu0
      %v3297 = vadd.f32 0.0, %v3296
      %v3298 = vpop.f32.mrf.mxu0
      %3299 = vmatprep.mubr.bf16.mxu0 %v2165
      %3300 = vmatmul.mubr.bf16.gmra.mxu0 %v2101
      %v3301 = vpop.f32.mrf.mxu0
      %v3302 = vadd.f32 0.0, %v3301
      %v3303 = vpop.f32.mrf.mxu0
      %v3304 = vpop.f32.mrf.mxu0
      %v3305 = vadd.f32 0.0, %v3304
      %v3306 = vpop.f32.mrf.mxu0
      %3307 = vmatprep.mubr.bf16.mxu0 %v2166
      %3308 = vmatmul.mubr.bf16.gmra.mxu0 %v2102
      %v3309 = vpop.f32.mrf.mxu0
      %v3310 = vadd.f32 0.0, %v3309
      %v3311 = vpop.f32.mrf.mxu0
      %v3312 = vpop.f32.mrf.mxu0
      %v3313 = vadd.f32 0.0, %v3312
      %v3314 = vpop.f32.mrf.mxu0
      %3315 = vmatprep.mubr.bf16.mxu0 %v2167
      %3316 = vmatmul.mubr.bf16.gmra.mxu0 %v2103
      %v3317 = vpop.f32.mrf.mxu0
      %v3318 = vadd.f32 0.0, %v3317
      %v3319 = vpop.f32.mrf.mxu0
      %v3320 = vpop.f32.mrf.mxu0
      %v3321 = vadd.f32 0.0, %v3320
      %v3322 = vpop.f32.mrf.mxu0
      %3323 = vmatprep.mubr.bf16.mxu0 %v2168
      %3324 = vmatmul.mubr.bf16.gmra.mxu0 %v2104
      %v3325 = vpop.f32.mrf.mxu0
      %v3326 = vadd.f32 0.0, %v3325
      %v3327 = vpop.f32.mrf.mxu0
      %v3328 = vpop.f32.mrf.mxu0
      %v3329 = vadd.f32 0.0, %v3328
      %v3330 = vpop.f32.mrf.mxu0
      %3331 = vmatprep.mubr.bf16.mxu0 %v2169
      %3332 = vmatmul.mubr.bf16.gmra.mxu0 %v2105
      %v3333 = vpop.f32.mrf.mxu0
      %v3334 = vadd.f32 0.0, %v3333
      %v3335 = vpop.f32.mrf.mxu0
      %v3336 = vpop.f32.mrf.mxu0
      %v3337 = vadd.f32 0.0, %v3336
      %v3338 = vpop.f32.mrf.mxu0
      %3339 = vmatprep.mubr.bf16.mxu0 %v2170
      %3340 = vmatmul.mubr.bf16.gmra.mxu0 %v2106
      %v3341 = vpop.f32.mrf.mxu0
      %v3342 = vadd.f32 0.0, %v3341
      %v3343 = vpop.f32.mrf.mxu0
      %v3344 = vpop.f32.mrf.mxu0
      %v3345 = vadd.f32 0.0, %v3344
      %v3346 = vpop.f32.mrf.mxu0
      %3347 = vmatprep.mubr.bf16.mxu0 %v2171
      %3348 = vmatmul.mubr.bf16.gmra.mxu0 %v2107
      %v3349 = vpop.f32.mrf.mxu0
      %v3350 = vadd.f32 0.0, %v3349
      %v3351 = vpop.f32.mrf.mxu0
      %v3352 = vpop.f32.mrf.mxu0
      %v3353 = vadd.f32 0.0, %v3352
      %v3354 = vpop.f32.mrf.mxu0
      %3355 = vmatprep.mubr.bf16.mxu0 %v2172
      %3356 = vmatmul.mubr.bf16.gmra.mxu0 %v2108
      %v3357 = vpop.f32.mrf.mxu0
      %v3358 = vadd.f32 0.0, %v3357
      %v3359 = vpop.f32.mrf.mxu0
      %v3360 = vpop.f32.mrf.mxu0
      %v3361 = vadd.f32 0.0, %v3360
      %v3362 = vpop.f32.mrf.mxu0
      %3363 = vmatprep.mubr.bf16.mxu0 %v2173
      %3364 = vmatmul.mubr.bf16.gmra.mxu0 %v2109
      %v3365 = vpop.f32.mrf.mxu0
      %v3366 = vadd.f32 0.0, %v3365
      %v3367 = vpop.f32.mrf.mxu0
      %v3368 = vpop.f32.mrf.mxu0
      %v3369 = vadd.f32 0.0, %v3368
      %v3370 = vpop.f32.mrf.mxu0
      %3371 = vmatprep.mubr.bf16.mxu0 %v2174
      %3372 = vmatmul.mubr.bf16.gmra.mxu0 %v2110
      %v3373 = vpop.f32.mrf.mxu0
      %v3374 = vadd.f32 0.0, %v3373
      %v3375 = vpop.f32.mrf.mxu0
      %v3376 = vpop.f32.mrf.mxu0
      %v3377 = vadd.f32 0.0, %v3376
      %v3378 = vpop.f32.mrf.mxu0
      %3379 = vmatprep.mubr.bf16.mxu0 %v2175
      %3380 = vmatmul.mubr.bf16.gmra.mxu0 %v2111
      %v3381 = vpop.f32.mrf.mxu0
      %v3382 = vadd.f32 0.0, %v3381
      %v3383 = vpop.f32.mrf.mxu0
      %v3384 = vpop.f32.mrf.mxu0
      %v3385 = vadd.f32 0.0, %v3384
      %v3386 = vpop.f32.mrf.mxu0
      %3387 = vmatprep.mubr.bf16.mxu0 %v2176
      %3388 = vmatmul.mubr.bf16.gmra.mxu0 %v2112
      %v3389 = vpop.f32.mrf.mxu0
      %v3390 = vadd.f32 0.0, %v3389
      %v3391 = vpop.f32.mrf.mxu0
      %v3392 = vpop.f32.mrf.mxu0
      %v3393 = vadd.f32 0.0, %v3392
      %v3394 = vpop.f32.mrf.mxu0
      %3395 = vmatprep.mubr.bf16.mxu0 %v2177
      %3396 = vmatmul.mubr.bf16.gmra.mxu0 %v2113
      %v3397 = vpop.f32.mrf.mxu0
      %v3398 = vadd.f32 0.0, %v3397
      %v3399 = vpop.f32.mrf.mxu0
      %v3400 = vpop.f32.mrf.mxu0
      %v3401 = vadd.f32 0.0, %v3400
      %v3402 = vpop.f32.mrf.mxu0
      %3403 = vmatprep.mubr.bf16.mxu0 %v2178
      %3404 = vmatmul.mubr.bf16.gmra.mxu0 %v2114
      %v3405 = vpop.f32.mrf.mxu0
      %v3406 = vadd.f32 0.0, %v3405
      %v3407 = vpop.f32.mrf.mxu0
      %v3408 = vpop.f32.mrf.mxu0
      %v3409 = vadd.f32 0.0, %v3408
      %v3410 = vpop.f32.mrf.mxu0
      %3411 = vdwg.mxu0
      %3412 = vmatprep.subr.bf16.mxu0 0
      %3413 = vmatpush1.bf16.msra.mxu0 %v3130
      %3414 = vmatprep.subr.bf16.mxu0 0
      %3415 = vmatpush1.bf16.msra.mxu0 %v3129
      %3416 = vmatprep.subr.bf16.mxu0 0
      %3417 = vmatpush1.bf16.msra.mxu0 %v3128
      %3418 = vmatprep.subr.bf16.mxu0 0
      %3419 = vmatpush1.bf16.msra.mxu0 %v3127
      %3420 = vmatprep.subr.bf16.mxu0 0
      %3421 = vmatpush1.bf16.msra.mxu0 %v3126
      %3422 = vmatprep.subr.bf16.mxu0 0
      %3423 = vmatpush1.bf16.msra.mxu0 %v3125
      %3424 = vmatprep.subr.bf16.mxu0 0
      %3425 = vmatpush1.bf16.msra.mxu0 %v3124
      %3426 = vmatprep.subr.bf16.mxu0 0
      %3427 = vmatpush1.bf16.msra.mxu0 %v3123
      %3428 = vmatprep.subr.bf16.mxu0 0
      %3429 = vmatpush2.bf16.msra.mxu0 %v3138
      %3430 = vmatprep.subr.bf16.mxu0 0
      %3431 = vmatpush2.bf16.msra.mxu0 %v3137
      %3432 = vmatprep.subr.bf16.mxu0 0
      %3433 = vmatpush2.bf16.msra.mxu0 %v3136
      %3434 = vmatprep.subr.bf16.mxu0 0
      %3435 = vmatpush2.bf16.msra.mxu0 %v3135
      %3436 = vmatprep.subr.bf16.mxu0 0
      %3437 = vmatpush2.bf16.msra.mxu0 %v3134
      %3438 = vmatprep.subr.bf16.mxu0 0
      %3439 = vmatpush2.bf16.msra.mxu0 %v3133
      %3440 = vmatprep.subr.bf16.mxu0 0
      %3441 = vmatpush2.bf16.msra.mxu0 %v3132
      %3442 = vmatprep.subr.bf16.mxu0 0
      %3443 = vmatpush2.bf16.msra.mxu0 %v3131
      %3444 = vmatprep.mubr.bf16.mxu0 %v2307
      %3445 = vmatmul.mubr.bf16.gmra.mxu0 %v2227
      %v3446 = vpop.f32.mrf.mxu0
      %v3447 = vadd.f32 %v3286, %v3446
      %v3448 = vpop.f32.mrf.mxu0
      %v3449 = vpop.f32.mrf.mxu0
      %v3450 = vadd.f32 %v3289, %v3449
      %v3451 = vpop.f32.mrf.mxu0
      %3452 = vmatprep.mubr.bf16.mxu0 %v2308
      %3453 = vmatmul.mubr.bf16.gmra.mxu0 %v2228
      %v3454 = vpop.f32.mrf.mxu0
      %v3455 = vadd.f32 %v3294, %v3454
      %v3456 = vpop.f32.mrf.mxu0
      %v3457 = vpop.f32.mrf.mxu0
      %v3458 = vadd.f32 %v3297, %v3457
      %v3459 = vpop.f32.mrf.mxu0
      %3460 = vmatprep.mubr.bf16.mxu0 %v2309
      %3461 = vmatmul.mubr.bf16.gmra.mxu0 %v2229
      %v3462 = vpop.f32.mrf.mxu0
      %v3463 = vadd.f32 %v3302, %v3462
      %v3464 = vpop.f32.mrf.mxu0
      %v3465 = vpop.f32.mrf.mxu0
      %v3466 = vadd.f32 %v3305, %v3465
      %v3467 = vpop.f32.mrf.mxu0
      %3468 = vmatprep.mubr.bf16.mxu0 %v2310
      %3469 = vmatmul.mubr.bf16.gmra.mxu0 %v2230
      %v3470 = vpop.f32.mrf.mxu0
      %v3471 = vadd.f32 %v3310, %v3470
      %v3472 = vpop.f32.mrf.mxu0
      %v3473 = vpop.f32.mrf.mxu0
      %v3474 = vadd.f32 %v3313, %v3473
      %v3475 = vpop.f32.mrf.mxu0
      %3476 = vmatprep.mubr.bf16.mxu0 %v2311
      %3477 = vmatmul.mubr.bf16.gmra.mxu0 %v2231
      %v3478 = vpop.f32.mrf.mxu0
      %v3479 = vadd.f32 %v3318, %v3478
      %v3480 = vpop.f32.mrf.mxu0
      %v3481 = vpop.f32.mrf.mxu0
      %v3482 = vadd.f32 %v3321, %v3481
      %v3483 = vpop.f32.mrf.mxu0
      %3484 = vmatprep.mubr.bf16.mxu0 %v2312
      %3485 = vmatmul.mubr.bf16.gmra.mxu0 %v2232
      %v3486 = vpop.f32.mrf.mxu0
      %v3487 = vadd.f32 %v3326, %v3486
      %v3488 = vpop.f32.mrf.mxu0
      %v3489 = vpop.f32.mrf.mxu0
      %v3490 = vadd.f32 %v3329, %v3489
      %v3491 = vpop.f32.mrf.mxu0
      %3492 = vmatprep.mubr.bf16.mxu0 %v2313
      %3493 = vmatmul.mubr.bf16.gmra.mxu0 %v2233
      %v3494 = vpop.f32.mrf.mxu0
      %v3495 = vadd.f32 %v3334, %v3494
      %v3496 = vpop.f32.mrf.mxu0
      %v3497 = vpop.f32.mrf.mxu0
      %v3498 = vadd.f32 %v3337, %v3497
      %v3499 = vpop.f32.mrf.mxu0
      %3500 = vmatprep.mubr.bf16.mxu0 %v2314
      %3501 = vmatmul.mubr.bf16.gmra.mxu0 %v2234
      %v3502 = vpop.f32.mrf.mxu0
      %v3503 = vadd.f32 %v3342, %v3502
      %v3504 = vpop.f32.mrf.mxu0
      %v3505 = vpop.f32.mrf.mxu0
      %v3506 = vadd.f32 %v3345, %v3505
      %v3507 = vpop.f32.mrf.mxu0
      %3508 = vmatprep.mubr.bf16.mxu0 %v2315
      %3509 = vmatmul.mubr.bf16.gmra.mxu0 %v2235
      %v3510 = vpop.f32.mrf.mxu0
      %v3511 = vadd.f32 %v3350, %v3510
      %v3512 = vpop.f32.mrf.mxu0
      %v3513 = vpop.f32.mrf.mxu0
      %v3514 = vadd.f32 %v3353, %v3513
      %v3515 = vpop.f32.mrf.mxu0
      %3516 = vmatprep.mubr.bf16.mxu0 %v2316
      %3517 = vmatmul.mubr.bf16.gmra.mxu0 %v2236
      %v3518 = vpop.f32.mrf.mxu0
      %v3519 = vadd.f32 %v3358, %v3518
      %v3520 = vpop.f32.mrf.mxu0
      %v3521 = vpop.f32.mrf.mxu0
      %v3522 = vadd.f32 %v3361, %v3521
      %v3523 = vpop.f32.mrf.mxu0
      %3524 = vmatprep.mubr.bf16.mxu0 %v2317
      %3525 = vmatmul.mubr.bf16.gmra.mxu0 %v2237
      %v3526 = vpop.f32.mrf.mxu0
      %v3527 = vadd.f32 %v3366, %v3526
      %v3528 = vpop.f32.mrf.mxu0
      %v3529 = vpop.f32.mrf.mxu0
      %v3530 = vadd.f32 %v3369, %v3529
      %v3531 = vpop.f32.mrf.mxu0
      %3532 = vmatprep.mubr.bf16.mxu0 %v2318
      %3533 = vmatmul.mubr.bf16.gmra.mxu0 %v2238
      %v3534 = vpop.f32.mrf.mxu0
      %v3535 = vadd.f32 %v3374, %v3534
      %v3536 = vpop.f32.mrf.mxu0
      %v3537 = vpop.f32.mrf.mxu0
      %v3538 = vadd.f32 %v3377, %v3537
      %v3539 = vpop.f32.mrf.mxu0
      %3540 = vmatprep.mubr.bf16.mxu0 %v2319
      %3541 = vmatmul.mubr.bf16.gmra.mxu0 %v2239
      %v3542 = vpop.f32.mrf.mxu0
      %v3543 = vadd.f32 %v3382, %v3542
      %v3544 = vpop.f32.mrf.mxu0
      %v3545 = vpop.f32.mrf.mxu0
      %v3546 = vadd.f32 %v3385, %v3545
      %v3547 = vpop.f32.mrf.mxu0
      %3548 = vmatprep.mubr.bf16.mxu0 %v2320
      %3549 = vmatmul.mubr.bf16.gmra.mxu0 %v2240
      %v3550 = vpop.f32.mrf.mxu0
      %v3551 = vadd.f32 %v3390, %v3550
      %v3552 = vpop.f32.mrf.mxu0
      %v3553 = vpop.f32.mrf.mxu0
      %v3554 = vadd.f32 %v3393, %v3553
      %v3555 = vpop.f32.mrf.mxu0
      %3556 = vmatprep.mubr.bf16.mxu0 %v2321
      %3557 = vmatmul.mubr.bf16.gmra.mxu0 %v2241
      %v3558 = vpop.f32.mrf.mxu0
      %v3559 = vadd.f32 %v3398, %v3558
      %v3560 = vpop.f32.mrf.mxu0
      %v3561 = vpop.f32.mrf.mxu0
      %v3562 = vadd.f32 %v3401, %v3561
      %v3563 = vpop.f32.mrf.mxu0
      %3564 = vmatprep.mubr.bf16.mxu0 %v2322
      %3565 = vmatmul.mubr.bf16.gmra.mxu0 %v2242
      %v3566 = vpop.f32.mrf.mxu0
      %v3567 = vadd.f32 %v3406, %v3566
      %v3568 = vpop.f32.mrf.mxu0
      %v3569 = vpop.f32.mrf.mxu0
      %v3570 = vadd.f32 %v3409, %v3569
      %v3571 = vpop.f32.mrf.mxu0
      %3572 = vdwg.mxu0
      %3573 = vmatprep.subr.bf16.mxu0 0
      %3574 = vmatpush1.bf16.msra.mxu0 %v3146
      %3575 = vmatprep.subr.bf16.mxu0 0
      %3576 = vmatpush1.bf16.msra.mxu0 %v3145
      %3577 = vmatprep.subr.bf16.mxu0 0
      %3578 = vmatpush1.bf16.msra.mxu0 %v3144
      %3579 = vmatprep.subr.bf16.mxu0 0
      %3580 = vmatpush1.bf16.msra.mxu0 %v3143
      %3581 = vmatprep.subr.bf16.mxu0 0
      %3582 = vmatpush1.bf16.msra.mxu0 %v3142
      %3583 = vmatprep.subr.bf16.mxu0 0
      %3584 = vmatpush1.bf16.msra.mxu0 %v3141
      %3585 = vmatprep.subr.bf16.mxu0 0
      %3586 = vmatpush1.bf16.msra.mxu0 %v3140
      %3587 = vmatprep.subr.bf16.mxu0 0
      %3588 = vmatpush1.bf16.msra.mxu0 %v3139
      %3589 = vmatprep.subr.bf16.mxu0 0
      %3590 = vmatpush2.bf16.msra.mxu0 %v3154
      %3591 = vmatprep.subr.bf16.mxu0 0
      %3592 = vmatpush2.bf16.msra.mxu0 %v3153
      %3593 = vmatprep.subr.bf16.mxu0 0
      %3594 = vmatpush2.bf16.msra.mxu0 %v3152
      %3595 = vmatprep.subr.bf16.mxu0 0
      %3596 = vmatpush2.bf16.msra.mxu0 %v3151
      %3597 = vmatprep.subr.bf16.mxu0 0
      %3598 = vmatpush2.bf16.msra.mxu0 %v3150
      %3599 = vmatprep.subr.bf16.mxu0 0
      %3600 = vmatpush2.bf16.msra.mxu0 %v3149
      %3601 = vmatprep.subr.bf16.mxu0 0
      %3602 = vmatpush2.bf16.msra.mxu0 %v3148
      %3603 = vmatprep.subr.bf16.mxu0 0
      %3604 = vmatpush2.bf16.msra.mxu0 %v3147
      %3605 = vmatprep.mubr.bf16.mxu0 %v2435
      %3606 = vmatmul.mubr.bf16.gmra.mxu0 %v2371
      %v3607 = vpop.f32.mrf.mxu0
      %v3608 = vadd.f32 %v3447, %v3607
      %v3609 = vpop.f32.mrf.mxu0
      %v3610 = vpop.f32.mrf.mxu0
      %v3611 = vadd.f32 %v3450, %v3610
      %v3612 = vpop.f32.mrf.mxu0
      %3613 = vmatprep.mubr.bf16.mxu0 %v2436
      %3614 = vmatmul.mubr.bf16.gmra.mxu0 %v2372
      %v3615 = vpop.f32.mrf.mxu0
      %v3616 = vadd.f32 %v3455, %v3615
      %v3617 = vpop.f32.mrf.mxu0
      %v3618 = vpop.f32.mrf.mxu0
      %v3619 = vadd.f32 %v3458, %v3618
      %v3620 = vpop.f32.mrf.mxu0
      %3621 = vmatprep.mubr.bf16.mxu0 %v2437
      %3622 = vmatmul.mubr.bf16.gmra.mxu0 %v2373
      %v3623 = vpop.f32.mrf.mxu0
      %v3624 = vadd.f32 %v3463, %v3623
      %v3625 = vpop.f32.mrf.mxu0
      %v3626 = vpop.f32.mrf.mxu0
      %v3627 = vadd.f32 %v3466, %v3626
      %v3628 = vpop.f32.mrf.mxu0
      %3629 = vmatprep.mubr.bf16.mxu0 %v2438
      %3630 = vmatmul.mubr.bf16.gmra.mxu0 %v2374
      %v3631 = vpop.f32.mrf.mxu0
      %v3632 = vadd.f32 %v3471, %v3631
      %v3633 = vpop.f32.mrf.mxu0
      %v3634 = vpop.f32.mrf.mxu0
      %v3635 = vadd.f32 %v3474, %v3634
      %v3636 = vpop.f32.mrf.mxu0
      %3637 = vmatprep.mubr.bf16.mxu0 %v2439
      %3638 = vmatmul.mubr.bf16.gmra.mxu0 %v2375
      %v3639 = vpop.f32.mrf.mxu0
      %v3640 = vadd.f32 %v3479, %v3639
      %v3641 = vpop.f32.mrf.mxu0
      %v3642 = vpop.f32.mrf.mxu0
      %v3643 = vadd.f32 %v3482, %v3642
      %v3644 = vpop.f32.mrf.mxu0
      %3645 = vmatprep.mubr.bf16.mxu0 %v2440
      %3646 = vmatmul.mubr.bf16.gmra.mxu0 %v2376
      %v3647 = vpop.f32.mrf.mxu0
      %v3648 = vadd.f32 %v3487, %v3647
      %v3649 = vpop.f32.mrf.mxu0
      %v3650 = vpop.f32.mrf.mxu0
      %v3651 = vadd.f32 %v3490, %v3650
      %v3652 = vpop.f32.mrf.mxu0
      %3653 = vmatprep.mubr.bf16.mxu0 %v2441
      %3654 = vmatmul.mubr.bf16.gmra.mxu0 %v2377
      %v3655 = vpop.f32.mrf.mxu0
      %v3656 = vadd.f32 %v3495, %v3655
      %v3657 = vpop.f32.mrf.mxu0
      %v3658 = vpop.f32.mrf.mxu0
      %v3659 = vadd.f32 %v3498, %v3658
      %v3660 = vpop.f32.mrf.mxu0
      %3661 = vmatprep.mubr.bf16.mxu0 %v2442
      %3662 = vmatmul.mubr.bf16.gmra.mxu0 %v2378
      %v3663 = vpop.f32.mrf.mxu0
      %v3664 = vadd.f32 %v3503, %v3663
      %v3665 = vpop.f32.mrf.mxu0
      %v3666 = vpop.f32.mrf.mxu0
      %v3667 = vadd.f32 %v3506, %v3666
      %v3668 = vpop.f32.mrf.mxu0
      %3669 = vmatprep.mubr.bf16.mxu0 %v2443
      %3670 = vmatmul.mubr.bf16.gmra.mxu0 %v2379
      %v3671 = vpop.f32.mrf.mxu0
      %v3672 = vadd.f32 %v3511, %v3671
      %v3673 = vpop.f32.mrf.mxu0
      %v3674 = vpop.f32.mrf.mxu0
      %v3675 = vadd.f32 %v3514, %v3674
      %v3676 = vpop.f32.mrf.mxu0
      %3677 = vmatprep.mubr.bf16.mxu0 %v2444
      %3678 = vmatmul.mubr.bf16.gmra.mxu0 %v2380
      %v3679 = vpop.f32.mrf.mxu0
      %v3680 = vadd.f32 %v3519, %v3679
      %v3681 = vpop.f32.mrf.mxu0
      %v3682 = vpop.f32.mrf.mxu0
      %v3683 = vadd.f32 %v3522, %v3682
      %v3684 = vpop.f32.mrf.mxu0
      %3685 = vmatprep.mubr.bf16.mxu0 %v2445
      %3686 = vmatmul.mubr.bf16.gmra.mxu0 %v2381
      %v3687 = vpop.f32.mrf.mxu0
      %v3688 = vadd.f32 %v3527, %v3687
      %v3689 = vpop.f32.mrf.mxu0
      %v3690 = vpop.f32.mrf.mxu0
      %v3691 = vadd.f32 %v3530, %v3690
      %v3692 = vpop.f32.mrf.mxu0
      %3693 = vmatprep.mubr.bf16.mxu0 %v2446
      %3694 = vmatmul.mubr.bf16.gmra.mxu0 %v2382
      %v3695 = vpop.f32.mrf.mxu0
      %v3696 = vadd.f32 %v3535, %v3695
      %v3697 = vpop.f32.mrf.mxu0
      %v3698 = vpop.f32.mrf.mxu0
      %v3699 = vadd.f32 %v3538, %v3698
      %v3700 = vpop.f32.mrf.mxu0
      %3701 = vmatprep.mubr.bf16.mxu0 %v2447
      %3702 = vmatmul.mubr.bf16.gmra.mxu0 %v2383
      %v3703 = vpop.f32.mrf.mxu0
      %v3704 = vadd.f32 %v3543, %v3703
      %v3705 = vpop.f32.mrf.mxu0
      %v3706 = vpop.f32.mrf.mxu0
      %v3707 = vadd.f32 %v3546, %v3706
      %v3708 = vpop.f32.mrf.mxu0
      %3709 = vmatprep.mubr.bf16.mxu0 %v2448
      %3710 = vmatmul.mubr.bf16.gmra.mxu0 %v2384
      %v3711 = vpop.f32.mrf.mxu0
      %v3712 = vadd.f32 %v3551, %v3711
      %v3713 = vpop.f32.mrf.mxu0
      %v3714 = vpop.f32.mrf.mxu0
      %v3715 = vadd.f32 %v3554, %v3714
      %v3716 = vpop.f32.mrf.mxu0
      %3717 = vmatprep.mubr.bf16.mxu0 %v2449
      %3718 = vmatmul.mubr.bf16.gmra.mxu0 %v2385
      %v3719 = vpop.f32.mrf.mxu0
      %v3720 = vadd.f32 %v3559, %v3719
      %v3721 = vpop.f32.mrf.mxu0
      %v3722 = vpop.f32.mrf.mxu0
      %v3723 = vadd.f32 %v3562, %v3722
      %v3724 = vpop.f32.mrf.mxu0
      %3725 = vmatprep.mubr.bf16.mxu0 %v2450
      %3726 = vmatmul.mubr.bf16.gmra.mxu0 %v2386
      %v3727 = vpop.f32.mrf.mxu0
      %v3728 = vadd.f32 %v3567, %v3727
      %v3729 = vpop.f32.mrf.mxu0
      %v3730 = vpop.f32.mrf.mxu0
      %v3731 = vadd.f32 %v3570, %v3730
      %v3732 = vpop.f32.mrf.mxu0
      %3733 = vdwg.mxu0
      %3734 = vmatprep.subr.bf16.mxu0 0
      %3735 = vmatpush1.bf16.msra.mxu0 %v3162
      %3736 = vmatprep.subr.bf16.mxu0 0
      %3737 = vmatpush1.bf16.msra.mxu0 %v3161
      %3738 = vmatprep.subr.bf16.mxu0 0
      %3739 = vmatpush1.bf16.msra.mxu0 %v3160
      %3740 = vmatprep.subr.bf16.mxu0 0
      %3741 = vmatpush1.bf16.msra.mxu0 %v3159
      %3742 = vmatprep.subr.bf16.mxu0 0
      %3743 = vmatpush1.bf16.msra.mxu0 %v3158
      %3744 = vmatprep.subr.bf16.mxu0 0
      %3745 = vmatpush1.bf16.msra.mxu0 %v3157
      %3746 = vmatprep.subr.bf16.mxu0 0
      %3747 = vmatpush1.bf16.msra.mxu0 %v3156
      %3748 = vmatprep.subr.bf16.mxu0 0
      %3749 = vmatpush1.bf16.msra.mxu0 %v3155
      %3750 = vmatprep.subr.bf16.mxu0 0
      %3751 = vmatpush2.bf16.msra.mxu0 %v3170
      %3752 = vmatprep.subr.bf16.mxu0 0
      %3753 = vmatpush2.bf16.msra.mxu0 %v3169
      %3754 = vmatprep.subr.bf16.mxu0 0
      %3755 = vmatpush2.bf16.msra.mxu0 %v3168
      %3756 = vmatprep.subr.bf16.mxu0 0
      %3757 = vmatpush2.bf16.msra.mxu0 %v3167
      %3758 = vmatprep.subr.bf16.mxu0 0
      %3759 = vmatpush2.bf16.msra.mxu0 %v3166
      %3760 = vmatprep.subr.bf16.mxu0 0
      %3761 = vmatpush2.bf16.msra.mxu0 %v3165
      %3762 = vmatprep.subr.bf16.mxu0 0
      %3763 = vmatpush2.bf16.msra.mxu0 %v3164
      %3764 = vmatprep.subr.bf16.mxu0 0
      %3765 = vmatpush2.bf16.msra.mxu0 %v3163
      %3766 = vmatprep.mubr.bf16.mxu0 %v2579
      %3767 = vmatmul.mubr.bf16.gmra.mxu0 %v2515
      %v3768 = vpop.f32.mrf.mxu0
      %v3769 = vadd.f32 %v3608, %v3768
      %v3770 = vpop.f32.mrf.mxu0
      %v3771 = vpop.f32.mrf.mxu0
      %v3772 = vadd.f32 %v3611, %v3771
      %v3773 = vpop.f32.mrf.mxu0
      %3774 = vmatprep.mubr.bf16.mxu0 %v2580
      %3775 = vmatmul.mubr.bf16.gmra.mxu0 %v2516
      %v3776 = vpop.f32.mrf.mxu0
      %v3777 = vadd.f32 %v3616, %v3776
      %v3778 = vpop.f32.mrf.mxu0
      %v3779 = vpop.f32.mrf.mxu0
      %v3780 = vadd.f32 %v3619, %v3779
      %v3781 = vpop.f32.mrf.mxu0
      %3782 = vmatprep.mubr.bf16.mxu0 %v2581
      %3783 = vmatmul.mubr.bf16.gmra.mxu0 %v2517
      %v3784 = vpop.f32.mrf.mxu0
      %v3785 = vadd.f32 %v3624, %v3784
      %v3786 = vpop.f32.mrf.mxu0
      %v3787 = vpop.f32.mrf.mxu0
      %v3788 = vadd.f32 %v3627, %v3787
      %v3789 = vpop.f32.mrf.mxu0
      %3790 = vmatprep.mubr.bf16.mxu0 %v2582
      %3791 = vmatmul.mubr.bf16.gmra.mxu0 %v2518
      %v3792 = vpop.f32.mrf.mxu0
      %v3793 = vadd.f32 %v3632, %v3792
      %v3794 = vpop.f32.mrf.mxu0
      %v3795 = vpop.f32.mrf.mxu0
      %v3796 = vadd.f32 %v3635, %v3795
      %v3797 = vpop.f32.mrf.mxu0
      %3798 = vmatprep.mubr.bf16.mxu0 %v2583
      %3799 = vmatmul.mubr.bf16.gmra.mxu0 %v2519
      %v3800 = vpop.f32.mrf.mxu0
      %v3801 = vadd.f32 %v3640, %v3800
      %v3802 = vpop.f32.mrf.mxu0
      %v3803 = vpop.f32.mrf.mxu0
      %v3804 = vadd.f32 %v3643, %v3803
      %v3805 = vpop.f32.mrf.mxu0
      %3806 = vmatprep.mubr.bf16.mxu0 %v2584
      %3807 = vmatmul.mubr.bf16.gmra.mxu0 %v2520
      %v3808 = vpop.f32.mrf.mxu0
      %v3809 = vadd.f32 %v3648, %v3808
      %v3810 = vpop.f32.mrf.mxu0
      %v3811 = vpop.f32.mrf.mxu0
      %v3812 = vadd.f32 %v3651, %v3811
      %v3813 = vpop.f32.mrf.mxu0
      %3814 = vmatprep.mubr.bf16.mxu0 %v2585
      %3815 = vmatmul.mubr.bf16.gmra.mxu0 %v2521
      %v3816 = vpop.f32.mrf.mxu0
      %v3817 = vadd.f32 %v3656, %v3816
      %v3818 = vpop.f32.mrf.mxu0
      %v3819 = vpop.f32.mrf.mxu0
      %v3820 = vadd.f32 %v3659, %v3819
      %v3821 = vpop.f32.mrf.mxu0
      %3822 = vmatprep.mubr.bf16.mxu0 %v2586
      %3823 = vmatmul.mubr.bf16.gmra.mxu0 %v2522
      %v3824 = vpop.f32.mrf.mxu0
      %v3825 = vadd.f32 %v3664, %v3824
      %v3826 = vpop.f32.mrf.mxu0
      %v3827 = vpop.f32.mrf.mxu0
      %v3828 = vadd.f32 %v3667, %v3827
      %v3829 = vpop.f32.mrf.mxu0
      %3830 = vmatprep.mubr.bf16.mxu0 %v2587
      %3831 = vmatmul.mubr.bf16.gmra.mxu0 %v2523
      %v3832 = vpop.f32.mrf.mxu0
      %v3833 = vadd.f32 %v3672, %v3832
      %v3834 = vpop.f32.mrf.mxu0
      %v3835 = vpop.f32.mrf.mxu0
      %v3836 = vadd.f32 %v3675, %v3835
      %v3837 = vpop.f32.mrf.mxu0
      %3838 = vmatprep.mubr.bf16.mxu0 %v2588
      %3839 = vmatmul.mubr.bf16.gmra.mxu0 %v2524
      %v3840 = vpop.f32.mrf.mxu0
      %v3841 = vadd.f32 %v3680, %v3840
      %v3842 = vpop.f32.mrf.mxu0
      %v3843 = vpop.f32.mrf.mxu0
      %v3844 = vadd.f32 %v3683, %v3843
      %v3845 = vpop.f32.mrf.mxu0
      %3846 = vmatprep.mubr.bf16.mxu0 %v2589
      %3847 = vmatmul.mubr.bf16.gmra.mxu0 %v2525
      %v3848 = vpop.f32.mrf.mxu0
      %v3849 = vadd.f32 %v3688, %v3848
      %v3850 = vpop.f32.mrf.mxu0
      %v3851 = vpop.f32.mrf.mxu0
      %v3852 = vadd.f32 %v3691, %v3851
      %v3853 = vpop.f32.mrf.mxu0
      %3854 = vmatprep.mubr.bf16.mxu0 %v2590
      %3855 = vmatmul.mubr.bf16.gmra.mxu0 %v2526
      %v3856 = vpop.f32.mrf.mxu0
      %v3857 = vadd.f32 %v3696, %v3856
      %v3858 = vpop.f32.mrf.mxu0
      %v3859 = vpop.f32.mrf.mxu0
      %v3860 = vadd.f32 %v3699, %v3859
      %v3861 = vpop.f32.mrf.mxu0
      %3862 = vmatprep.mubr.bf16.mxu0 %v2591
      %3863 = vmatmul.mubr.bf16.gmra.mxu0 %v2527
      %v3864 = vpop.f32.mrf.mxu0
      %v3865 = vadd.f32 %v3704, %v3864
      %v3866 = vpop.f32.mrf.mxu0
      %v3867 = vpop.f32.mrf.mxu0
      %v3868 = vadd.f32 %v3707, %v3867
      %v3869 = vpop.f32.mrf.mxu0
      %3870 = vmatprep.mubr.bf16.mxu0 %v2592
      %3871 = vmatmul.mubr.bf16.gmra.mxu0 %v2528
      %v3872 = vpop.f32.mrf.mxu0
      %v3873 = vadd.f32 %v3712, %v3872
      %v3874 = vpop.f32.mrf.mxu0
      %v3875 = vpop.f32.mrf.mxu0
      %v3876 = vadd.f32 %v3715, %v3875
      %v3877 = vpop.f32.mrf.mxu0
      %3878 = vmatprep.mubr.bf16.mxu0 %v2593
      %3879 = vmatmul.mubr.bf16.gmra.mxu0 %v2529
      %v3880 = vpop.f32.mrf.mxu0
      %v3881 = vadd.f32 %v3720, %v3880
      %v3882 = vpop.f32.mrf.mxu0
      %v3883 = vpop.f32.mrf.mxu0
      %v3884 = vadd.f32 %v3723, %v3883
      %v3885 = vpop.f32.mrf.mxu0
      %3886 = vmatprep.mubr.bf16.mxu0 %v2594
      %3887 = vmatmul.mubr.bf16.gmra.mxu0 %v2530
      %v3888 = vpop.f32.mrf.mxu0
      %v3889 = vadd.f32 %v3728, %v3888
      %v3890 = vpop.f32.mrf.mxu0
      %v3891 = vpop.f32.mrf.mxu0
      %v3892 = vadd.f32 %v3731, %v3891
      %v3893 = vpop.f32.mrf.mxu0
      %3894 = vdwg.mxu0
      %3895 = vmatprep.subr.bf16.mxu0 0
      %3896 = vmatpush1.bf16.msra.mxu0 %v3178
      %3897 = vmatprep.subr.bf16.mxu0 0
      %3898 = vmatpush1.bf16.msra.mxu0 %v3177
      %3899 = vmatprep.subr.bf16.mxu0 0
      %3900 = vmatpush1.bf16.msra.mxu0 %v3176
      %3901 = vmatprep.subr.bf16.mxu0 0
      %3902 = vmatpush1.bf16.msra.mxu0 %v3175
      %3903 = vmatprep.subr.bf16.mxu0 0
      %3904 = vmatpush1.bf16.msra.mxu0 %v3174
      %3905 = vmatprep.subr.bf16.mxu0 0
      %3906 = vmatpush1.bf16.msra.mxu0 %v3173
      %3907 = vmatprep.subr.bf16.mxu0 0
      %3908 = vmatpush1.bf16.msra.mxu0 %v3172
      %3909 = vmatprep.subr.bf16.mxu0 0
      %3910 = vmatpush1.bf16.msra.mxu0 %v3171
      %3911 = vmatprep.subr.bf16.mxu0 0
      %3912 = vmatpush2.bf16.msra.mxu0 0
      %3913 = vmatprep.subr.bf16.mxu0 0
      %3914 = vmatpush2.bf16.msra.mxu0 0
      %3915 = vmatprep.subr.bf16.mxu0 0
      %3916 = vmatpush2.bf16.msra.mxu0 0
      %3917 = vmatprep.subr.bf16.mxu0 0
      %3918 = vmatpush2.bf16.msra.mxu0 0
      %3919 = vmatprep.subr.bf16.mxu0 0
      %3920 = vmatpush2.bf16.msra.mxu0 0
      %3921 = vmatprep.subr.bf16.mxu0 0
      %3922 = vmatpush2.bf16.msra.mxu0 0
      %3923 = vmatprep.subr.bf16.mxu0 0
      %3924 = vmatpush2.bf16.msra.mxu0 0
      %3925 = vmatprep.subr.bf16.mxu0 0
      %3926 = vmatpush2.bf16.msra.mxu0 0
      %3927 = vmatprep.mubr.bf16.mxu0 0
      %3928 = vmatmul.mubr.bf16.gmra.mxu0 %v2643
      %v3929 = vpop.f32.mrf.mxu0
      %v3930 = vadd.f32 %v3769, %v3929
      %v3931 = vpop.f32.mrf.mxu0
      %v3932 = vpop.f32.mrf.mxu0
      %v3933 = vadd.f32 %v3772, %v3932
      %v3934 = vpop.f32.mrf.mxu0
      %3935 = vmatprep.mubr.bf16.mxu0 0
      %3936 = vmatmul.mubr.bf16.gmra.mxu0 %v2644
      %v3937 = vpop.f32.mrf.mxu0
      %v3938 = vadd.f32 %v3777, %v3937
      %v3939 = vpop.f32.mrf.mxu0
      %v3940 = vpop.f32.mrf.mxu0
      %v3941 = vadd.f32 %v3780, %v3940
      %v3942 = vpop.f32.mrf.mxu0
      %3943 = vmatprep.mubr.bf16.mxu0 0
      %3944 = vmatmul.mubr.bf16.gmra.mxu0 %v2645
      %v3945 = vpop.f32.mrf.mxu0
      %v3946 = vadd.f32 %v3785, %v3945
      %v3947 = vpop.f32.mrf.mxu0
      %v3948 = vpop.f32.mrf.mxu0
      %v3949 = vadd.f32 %v3788, %v3948
      %v3950 = vpop.f32.mrf.mxu0
      %3951 = vmatprep.mubr.bf16.mxu0 0
      %3952 = vmatmul.mubr.bf16.gmra.mxu0 %v2646
      %v3953 = vpop.f32.mrf.mxu0
      %v3954 = vadd.f32 %v3793, %v3953
      %v3955 = vpop.f32.mrf.mxu0
      %v3956 = vpop.f32.mrf.mxu0
      %v3957 = vadd.f32 %v3796, %v3956
      %v3958 = vpop.f32.mrf.mxu0
      %3959 = vmatprep.mubr.bf16.mxu0 0
      %3960 = vmatmul.mubr.bf16.gmra.mxu0 %v2647
      %v3961 = vpop.f32.mrf.mxu0
      %v3962 = vadd.f32 %v3801, %v3961
      %v3963 = vpop.f32.mrf.mxu0
      %v3964 = vpop.f32.mrf.mxu0
      %v3965 = vadd.f32 %v3804, %v3964
      %v3966 = vpop.f32.mrf.mxu0
      %3967 = vmatprep.mubr.bf16.mxu0 0
      %3968 = vmatmul.mubr.bf16.gmra.mxu0 %v2648
      %v3969 = vpop.f32.mrf.mxu0
      %v3970 = vadd.f32 %v3809, %v3969
      %v3971 = vpop.f32.mrf.mxu0
      %v3972 = vpop.f32.mrf.mxu0
      %v3973 = vadd.f32 %v3812, %v3972
      %v3974 = vpop.f32.mrf.mxu0
      %3975 = vmatprep.mubr.bf16.mxu0 0
      %3976 = vmatmul.mubr.bf16.gmra.mxu0 %v2649
      %v3977 = vpop.f32.mrf.mxu0
      %v3978 = vadd.f32 %v3817, %v3977
      %v3979 = vpop.f32.mrf.mxu0
      %v3980 = vpop.f32.mrf.mxu0
      %v3981 = vadd.f32 %v3820, %v3980
      %v3982 = vpop.f32.mrf.mxu0
      %3983 = vmatprep.mubr.bf16.mxu0 0
      %3984 = vmatmul.mubr.bf16.gmra.mxu0 %v2650
      %v3985 = vpop.f32.mrf.mxu0
      %v3986 = vadd.f32 %v3825, %v3985
      %v3987 = vpop.f32.mrf.mxu0
      %v3988 = vpop.f32.mrf.mxu0
      %v3989 = vadd.f32 %v3828, %v3988
      %v3990 = vpop.f32.mrf.mxu0
      %3991 = vmatprep.mubr.bf16.mxu0 0
      %3992 = vmatmul.mubr.bf16.gmra.mxu0 %v2651
      %v3993 = vpop.f32.mrf.mxu0
      %v3994 = vadd.f32 %v3833, %v3993
      %v3995 = vpop.f32.mrf.mxu0
      %v3996 = vpop.f32.mrf.mxu0
      %v3997 = vadd.f32 %v3836, %v3996
      %v3998 = vpop.f32.mrf.mxu0
      %3999 = vmatprep.mubr.bf16.mxu0 0
      %4000 = vmatmul.mubr.bf16.gmra.mxu0 %v2652
      %v4001 = vpop.f32.mrf.mxu0
      %v4002 = vadd.f32 %v3841, %v4001
      %v4003 = vpop.f32.mrf.mxu0
      %v4004 = vpop.f32.mrf.mxu0
      %v4005 = vadd.f32 %v3844, %v4004
      %v4006 = vpop.f32.mrf.mxu0
      %4007 = vmatprep.mubr.bf16.mxu0 0
      %4008 = vmatmul.mubr.bf16.gmra.mxu0 %v2653
      %v4009 = vpop.f32.mrf.mxu0
      %v4010 = vadd.f32 %v3849, %v4009
      %v4011 = vpop.f32.mrf.mxu0
      %v4012 = vpop.f32.mrf.mxu0
      %v4013 = vadd.f32 %v3852, %v4012
      %v4014 = vpop.f32.mrf.mxu0
      %4015 = vmatprep.mubr.bf16.mxu0 0
      %4016 = vmatmul.mubr.bf16.gmra.mxu0 %v2654
      %v4017 = vpop.f32.mrf.mxu0
      %v4018 = vadd.f32 %v3857, %v4017
      %v4019 = vpop.f32.mrf.mxu0
      %v4020 = vpop.f32.mrf.mxu0
      %v4021 = vadd.f32 %v3860, %v4020
      %v4022 = vpop.f32.mrf.mxu0
      %4023 = vmatprep.mubr.bf16.mxu0 0
      %4024 = vmatmul.mubr.bf16.gmra.mxu0 %v2655
      %v4025 = vpop.f32.mrf.mxu0
      %v4026 = vadd.f32 %v3865, %v4025
      %v4027 = vpop.f32.mrf.mxu0
      %v4028 = vpop.f32.mrf.mxu0
      %v4029 = vadd.f32 %v3868, %v4028
      %v4030 = vpop.f32.mrf.mxu0
      %4031 = vmatprep.mubr.bf16.mxu0 0
      %4032 = vmatmul.mubr.bf16.gmra.mxu0 %v2656
      %v4033 = vpop.f32.mrf.mxu0
      %v4034 = vadd.f32 %v3873, %v4033
      %v4035 = vpop.f32.mrf.mxu0
      %v4036 = vpop.f32.mrf.mxu0
      %v4037 = vadd.f32 %v3876, %v4036
      %v4038 = vpop.f32.mrf.mxu0
      %4039 = vmatprep.mubr.bf16.mxu0 0
      %4040 = vmatmul.mubr.bf16.gmra.mxu0 %v2657
      %v4041 = vpop.f32.mrf.mxu0
      %v4042 = vadd.f32 %v3881, %v4041
      %v4043 = vpop.f32.mrf.mxu0
      %v4044 = vpop.f32.mrf.mxu0
      %v4045 = vadd.f32 %v3884, %v4044
      %v4046 = vpop.f32.mrf.mxu0
      %4047 = vmatprep.mubr.bf16.mxu0 0
      %4048 = vmatmul.mubr.bf16.gmra.mxu0 %v2658
      %v4049 = vpop.f32.mrf.mxu0
      %v4050 = vadd.f32 %v3889, %v4049
      %v4051 = vpop.f32.mrf.mxu0
      %v4052 = vpop.f32.mrf.mxu0
      %v4053 = vadd.f32 %v3892, %v4052
      %v4054 = vpop.f32.mrf.mxu0
      %4055 = vdwg.mxu0
      %v4056 = vpack.c.bf16 %v3933, %v3930
      %v4057 = vpack.c.bf16 %v3941, %v3938
      %v4058 = vpack.c.bf16 %v3949, %v3946
      %v4059 = vpack.c.bf16 %v3957, %v3954
      %v4060 = vpack.c.bf16 %v3965, %v3962
      %v4061 = vpack.c.bf16 %v3973, %v3970
      %v4062 = vpack.c.bf16 %v3981, %v3978
      %v4063 = vpack.c.bf16 %v3989, %v3986
      %v4064 = vpack.c.bf16 %v3997, %v3994
      %v4065 = vpack.c.bf16 %v4005, %v4002
      %v4066 = vpack.c.bf16 %v4013, %v4010
      %v4067 = vpack.c.bf16 %v4021, %v4018
      %v4068 = vpack.c.bf16 %v4029, %v4026
      %v4069 = vpack.c.bf16 %v4037, %v4034
      %v4070 = vpack.c.bf16 %v4045, %v4042
      %v4071 = vpack.c.bf16 %v4053, %v4050
      %v4088 = vunpack.c.l.b16 %v4056
      %v4089 = vunpack.c.h.b16 %v4056
      %v4090 = vunpack.c.l.b16 %v4057
      %v4091 = vunpack.c.h.b16 %v4057
      %v4092 = vunpack.c.l.b16 %v4058
      %v4093 = vunpack.c.h.b16 %v4058
      %v4094 = vunpack.c.l.b16 %v4059
      %v4095 = vunpack.c.h.b16 %v4059
      %v4096 = vunpack.c.l.b16 %v4060
      %v4097 = vunpack.c.h.b16 %v4060
      %v4098 = vunpack.c.l.b16 %v4061
      %v4099 = vunpack.c.h.b16 %v4061
      %v4100 = vunpack.c.l.b16 %v4062
      %v4101 = vunpack.c.h.b16 %v4062
      %v4102 = vunpack.c.l.b16 %v4063
      %v4103 = vunpack.c.h.b16 %v4063
      %v4104 = vunpack.c.l.b16 %v4064
      %v4105 = vunpack.c.h.b16 %v4064
      %v4106 = vunpack.c.l.b16 %v4065
      %v4107 = vunpack.c.h.b16 %v4065
      %v4108 = vunpack.c.l.b16 %v4066
      %v4109 = vunpack.c.h.b16 %v4066
      %v4110 = vunpack.c.l.b16 %v4067
      %v4111 = vunpack.c.h.b16 %v4067
      %v4112 = vunpack.c.l.b16 %v4068
      %v4113 = vunpack.c.h.b16 %v4068
      %v4114 = vunpack.c.l.b16 %v4069
      %v4115 = vunpack.c.h.b16 %v4069
      %v4116 = vunpack.c.l.b16 %v4070
      %v4117 = vunpack.c.h.b16 %v4070
      %v4118 = vunpack.c.l.b16 %v4071
      %v4119 = vunpack.c.h.b16 %v4071
      %v4120 = vpack.c.b16 %v4088, %v4088
      %v4121 = vpack.c.b16 %v4089, %v4089
      %v4122 = vpack.c.b16 %v4090, %v4090
      %v4123 = vpack.c.b16 %v4091, %v4091
      %v4124 = vpack.c.b16 %v4092, %v4092
      %v4125 = vpack.c.b16 %v4093, %v4093
      %v4126 = vpack.c.b16 %v4094, %v4094
      %v4127 = vpack.c.b16 %v4095, %v4095
      %v4128 = vpack.c.b16 %v4096, %v4096
      %v4129 = vpack.c.b16 %v4097, %v4097
      %v4130 = vpack.c.b16 %v4098, %v4098
      %v4131 = vpack.c.b16 %v4099, %v4099
      %v4132 = vpack.c.b16 %v4100, %v4100
      %v4133 = vpack.c.b16 %v4101, %v4101
      %v4134 = vpack.c.b16 %v4102, %v4102
      %v4135 = vpack.c.b16 %v4103, %v4103
      %v4136 = vpack.c.b16 %v4104, %v4104
      %v4137 = vpack.c.b16 %v4105, %v4105
      %v4138 = vpack.c.b16 %v4106, %v4106
      %v4139 = vpack.c.b16 %v4107, %v4107
      %v4140 = vpack.c.b16 %v4108, %v4108
      %v4141 = vpack.c.b16 %v4109, %v4109
      %v4142 = vpack.c.b16 %v4110, %v4110
      %v4143 = vpack.c.b16 %v4111, %v4111
      %v4144 = vpack.c.b16 %v4112, %v4112
      %v4145 = vpack.c.b16 %v4113, %v4113
      %v4146 = vpack.c.b16 %v4114, %v4114
      %v4147 = vpack.c.b16 %v4115, %v4115
      %v4148 = vpack.c.b16 %v4116, %v4116
      %v4149 = vpack.c.b16 %v4117, %v4117
      %v4150 = vpack.c.b16 %v4118, %v4118
      %v4151 = vpack.c.b16 %v4119, %v4119
      %4184 = vst [vmem:[%s198] sm:$0xf] %v4120
      %4185 = vst [vmem:[%s198 + $0x4] sm:$0xf] %v4121
      %4186 = vst [vmem:[%s198 + $0x8] sm:$0xf] %v4122
      %4187 = vst [vmem:[%s198 + $0xc] sm:$0xf] %v4123
      %4188 = vst [vmem:[%s198 + $0x10] sm:$0xf] %v4124
      %4189 = vst [vmem:[%s198 + $0x14] sm:$0xf] %v4125
      %4190 = vst [vmem:[%s198 + $0x18] sm:$0xf] %v4126
      %4191 = vst [vmem:[%s198 + $0x1c] sm:$0xf] %v4127
      %4192 = vst [vmem:[%s198 + $0x20] sm:$0xf] %v4128
      %4193 = vst [vmem:[%s198 + $0x24] sm:$0xf] %v4129
      %4194 = vst [vmem:[%s198 + $0x28] sm:$0xf] %v4130
      %4195 = vst [vmem:[%s198 + $0x2c] sm:$0xf] %v4131
      %4196 = vst [vmem:[%s198 + $0x30] sm:$0xf] %v4132
      %4197 = vst [vmem:[%s198 + $0x34] sm:$0xf] %v4133
      %4198 = vst [vmem:[%s198 + $0x38] sm:$0xf] %v4134
      %4199 = vst [vmem:[%s198 + $0x3c] sm:$0xf] %v4135
      %4200 = vst [vmem:[%s198 + $0x40] sm:$0xf] %v4136
      %4201 = vst [vmem:[%s198 + $0x44] sm:$0xf] %v4137
      %4202 = vst [vmem:[%s198 + $0x48] sm:$0xf] %v4138
      %4203 = vst [vmem:[%s198 + $0x4c] sm:$0xf] %v4139
      %4204 = vst [vmem:[%s198 + $0x50] sm:$0xf] %v4140
      %4205 = vst [vmem:[%s198 + $0x54] sm:$0xf] %v4141
      %4206 = vst [vmem:[%s198 + $0x58] sm:$0xf] %v4142
      %4207 = vst [vmem:[%s198 + $0x5c] sm:$0xf] %v4143
      %4208 = vst [vmem:[%s198 + $0x60] sm:$0xf] %v4144
      %4209 = vst [vmem:[%s198 + $0x64] sm:$0xf] %v4145
      %4210 = vst [vmem:[%s198 + $0x68] sm:$0xf] %v4146
      %4211 = vst [vmem:[%s198 + $0x6c] sm:$0xf] %v4147
      %4212 = vst [vmem:[%s198 + $0x70] sm:$0xf] %v4148
      %4213 = vst [vmem:[%s198 + $0x74] sm:$0xf] %v4149
      %4214 = vst [vmem:[%s198 + $0x78] sm:$0xf] %v4150
      %4215 = vst [vmem:[%s198 + $0x7c] sm:$0xf] %v4151
      %v4216 = vadd.f32 %v3930, %v3933
      %v4217 = vadd.f32 %v4216, %v3938
      %v4218 = vadd.f32 %v4217, %v3941
      %v4219 = vadd.f32 %v4218, %v3946
      %v4220 = vadd.f32 %v4219, %v3949
      %v4221 = vadd.f32 %v4220, %v3954
      %v4222 = vadd.f32 %v4221, %v3957
      %v4223 = vadd.f32 %v4222, %v3962
      %v4224 = vadd.f32 %v4223, %v3965
      %v4225 = vadd.f32 %v4224, %v3970
      %v4226 = vadd.f32 %v4225, %v3973
      %v4227 = vadd.f32 %v4226, %v3978
      %v4228 = vadd.f32 %v4227, %v3981
      %v4229 = vadd.f32 %v4228, %v3986
      %v4230 = vadd.f32 %v4229, %v3989
      %v4231 = vadd.f32 %v4230, %v3994
      %v4232 = vadd.f32 %v4231, %v3997
      %v4233 = vadd.f32 %v4232, %v4002
      %v4234 = vadd.f32 %v4233, %v4005
      %v4235 = vadd.f32 %v4234, %v4010
      %v4236 = vadd.f32 %v4235, %v4013
      %v4237 = vadd.f32 %v4236, %v4018
      %v4238 = vadd.f32 %v4237, %v4021
      %v4239 = vadd.f32 %v4238, %v4026
      %v4240 = vadd.f32 %v4239, %v4029
      %v4241 = vadd.f32 %v4240, %v4034
      %v4242 = vadd.f32 %v4241, %v4037
      %v4243 = vadd.f32 %v4242, %v4042
      %v4244 = vadd.f32 %v4243, %v4045
      %v4245 = vadd.f32 %v4244, %v4050
      %v4246 = vadd.f32 %v4245, %v4053
      %v4247 = vrot.slane %v4246, 4
      %v4248 = vadd.f32 %v4246, %v4247
      %v4249 = vrot.slane %v4248, 2
      %v4250 = vadd.f32 %v4248, %v4249
      %v4251 = vrot.slane %v4250, 1
      %v4252 = vadd.f32 %v4250, %v4251
      %v4253 = vmul.f32 %v4252, 0.00390625
      %v4254 = vsub.f32 %v3930, %v4253
      %v4255 = vsub.f32 %v3933, %v4253
      %v4256 = vsub.f32 %v3938, %v4253
      %v4257 = vsub.f32 %v3941, %v4253
      %v4258 = vsub.f32 %v3946, %v4253
      %v4259 = vsub.f32 %v3949, %v4253
      %v4260 = vsub.f32 %v3954, %v4253
      %v4261 = vsub.f32 %v3957, %v4253
      %v4262 = vsub.f32 %v3962, %v4253
      %v4263 = vsub.f32 %v3965, %v4253
      %v4264 = vsub.f32 %v3970, %v4253
      %v4265 = vsub.f32 %v3973, %v4253
      %v4266 = vsub.f32 %v3978, %v4253
      %v4267 = vsub.f32 %v3981, %v4253
      %v4268 = vsub.f32 %v3986, %v4253
      %v4269 = vsub.f32 %v3989, %v4253
      %v4270 = vsub.f32 %v3994, %v4253
      %v4271 = vsub.f32 %v3997, %v4253
      %v4272 = vsub.f32 %v4002, %v4253
      %v4273 = vsub.f32 %v4005, %v4253
      %v4274 = vsub.f32 %v4010, %v4253
      %v4275 = vsub.f32 %v4013, %v4253
      %v4276 = vsub.f32 %v4018, %v4253
      %v4277 = vsub.f32 %v4021, %v4253
      %v4278 = vsub.f32 %v4026, %v4253
      %v4279 = vsub.f32 %v4029, %v4253
      %v4280 = vsub.f32 %v4034, %v4253
      %v4281 = vsub.f32 %v4037, %v4253
      %v4282 = vsub.f32 %v4042, %v4253
      %v4283 = vsub.f32 %v4045, %v4253
      %v4284 = vsub.f32 %v4050, %v4253
      %v4285 = vsub.f32 %v4053, %v4253
      %v4286 = vmul.f32 %v4254, %v4254
      %v4287 = vmul.f32 %v4255, %v4255
      %v4288 = vmul.f32 %v4256, %v4256
      %v4289 = vmul.f32 %v4257, %v4257
      %v4290 = vmul.f32 %v4258, %v4258
      %v4291 = vmul.f32 %v4259, %v4259
      %v4292 = vmul.f32 %v4260, %v4260
      %v4293 = vmul.f32 %v4261, %v4261
      %v4294 = vmul.f32 %v4262, %v4262
      %v4295 = vmul.f32 %v4263, %v4263
      %v4296 = vmul.f32 %v4264, %v4264
      %v4297 = vmul.f32 %v4265, %v4265
      %v4298 = vmul.f32 %v4266, %v4266
      %v4299 = vmul.f32 %v4267, %v4267
      %v4300 = vmul.f32 %v4268, %v4268
      %v4301 = vmul.f32 %v4269, %v4269
      %v4302 = vmul.f32 %v4270, %v4270
      %v4303 = vmul.f32 %v4271, %v4271
      %v4304 = vmul.f32 %v4272, %v4272
      %v4305 = vmul.f32 %v4273, %v4273
      %v4306 = vmul.f32 %v4274, %v4274
      %v4307 = vmul.f32 %v4275, %v4275
      %v4308 = vmul.f32 %v4276, %v4276
      %v4309 = vmul.f32 %v4277, %v4277
      %v4310 = vmul.f32 %v4278, %v4278
      %v4311 = vmul.f32 %v4279, %v4279
      %v4312 = vmul.f32 %v4280, %v4280
      %v4313 = vmul.f32 %v4281, %v4281
      %v4314 = vmul.f32 %v4282, %v4282
      %v4315 = vmul.f32 %v4283, %v4283
      %v4316 = vmul.f32 %v4284, %v4284
      %v4317 = vmul.f32 %v4285, %v4285
      %v4318 = vadd.f32 %v4286, %v4287
      %v4319 = vadd.f32 %v4318, %v4288
      %v4320 = vadd.f32 %v4319, %v4289
      %v4321 = vadd.f32 %v4320, %v4290
      %v4322 = vadd.f32 %v4321, %v4291
      %v4323 = vadd.f32 %v4322, %v4292
      %v4324 = vadd.f32 %v4323, %v4293
      %v4325 = vadd.f32 %v4324, %v4294
      %v4326 = vadd.f32 %v4325, %v4295
      %v4327 = vadd.f32 %v4326, %v4296
      %v4328 = vadd.f32 %v4327, %v4297
      %v4329 = vadd.f32 %v4328, %v4298
      %v4330 = vadd.f32 %v4329, %v4299
      %v4331 = vadd.f32 %v4330, %v4300
      %v4332 = vadd.f32 %v4331, %v4301
      %v4333 = vadd.f32 %v4332, %v4302
      %v4334 = vadd.f32 %v4333, %v4303
      %v4335 = vadd.f32 %v4334, %v4304
      %v4336 = vadd.f32 %v4335, %v4305
      %v4337 = vadd.f32 %v4336, %v4306
      %v4338 = vadd.f32 %v4337, %v4307
      %v4339 = vadd.f32 %v4338, %v4308
      %v4340 = vadd.f32 %v4339, %v4309
      %v4341 = vadd.f32 %v4340, %v4310
      %v4342 = vadd.f32 %v4341, %v4311
      %v4343 = vadd.f32 %v4342, %v4312
      %v4344 = vadd.f32 %v4343, %v4313
      %v4345 = vadd.f32 %v4344, %v4314
      %v4346 = vadd.f32 %v4345, %v4315
      %v4347 = vadd.f32 %v4346, %v4316
      %v4348 = vadd.f32 %v4347, %v4317
      %v4349 = vrot.slane %v4348, 4
      %v4350 = vadd.f32 %v4348, %v4349
      %v4351 = vrot.slane %v4350, 2
      %v4352 = vadd.f32 %v4350, %v4351
      %v4353 = vrot.slane %v4352, 1
      %v4354 = vadd.f32 %v4352, %v4353
      %4355 = vst [vmem:[%s207] sm:$0x1] %v4252
      %4356 = vst [vmem:[%s207 + $0x1] sm:$0x1] %v4354
      %s4357 = sadd.s32 %s19, %s20
      %s4358 = smul.u32 32, %s4357
      %p4359 = scmp.lt.s32.totalorder %s4358, 63
      %s4360 = scalar_select %p4359, %s4358, 63
      %s4361 = smul.addr %s4360, 4
      %s4362 = scalar_lea.vmem %s2, %s4361
      %p4363 = scmp.lt.s32.totalorder %s19, 1
      %s4364 = scalar_select %p4363, %s19, 1
      %p4365 = scmp.lt.s32.totalorder %s20, 0
      %s4366 = scalar_select %p4365, %s20, 0
      %s4367 = sadd.s32 %s4366, %s4364
      %s4368 = smul.addr %s4367, 2
      %s4369 = scalar_lea.vmem %s3, %s4368
      // Predicated region
      $region29: #{_residual_block_forward.4} parent=27 // pred_check
        %p4370 = pneg %p94
      $region30: #{_residual_block_forward.4} parent=27 // pred_check_branch
        %4372 = sbr.rel (%p4370) target = $region32
      $region31: #{_residual_block_forward.4} parent=27 // pred_region
        %s4373 = sadd.s32 %s19, %s20
        %s4374 = smul.u32 32, %s4373
      $region32: #{_residual_block_forward.4} parent=27 // pred_fallthru
        _
      // Predicated region
      $region33: #{_residual_block_forward.4} parent=27 // pred_check
        %p4375 = pneg %p122
      $region34: #{_residual_block_forward.4} parent=27 // pred_check_branch
        %4377 = sbr.rel (%p4375) target = $region36
      $region35: #{_residual_block_forward.4} parent=27 // pred_region
        _
      $region36: #{_residual_block_forward.4} parent=27 // pred_fallthru
        _
    $region28: #{_residual_block_forward.4} parent=5 // pred_fallthru
      _
    %p4378 = scmp.le.s32.totalorder 2, %s10
    // Predicated region
    $region37: #{_residual_block_forward.4} parent=5 // pred_check
      %p4379 = pneg %p4378
    $region38: #{_residual_block_forward.4} parent=5 // pred_check_branch
      %4381 = sbr.rel (%p4379) target = $region40
    $region39: #{_residual_block_forward.4} parent=5 // pred_region
      %s4382 = ssub.s32 %s10, 2
      // Predicated region
      $region41: #{_residual_block_forward.4} parent=39 // pred_check
        %p4383 = pneg %p100
      $region42: #{_residual_block_forward.4} parent=39 // pred_check_branch
        %4385 = sbr.rel (%p4383) target = $region44
      $region43: #{_residual_block_forward.4} parent=39 // pred_region
        %s4386 = sadd.s32 %s21, %s22
        %s4387 = smul.u32 32, %s4386
        %p4388 = scmp.lt.s32.totalorder %s4387, 63
        %s4389 = scalar_select %p4388, %s4387, 63
        %s4390 = smul.addr %s4389, 4
        %s4391 = scalar_lea.vmem %s2, %s4390
      $region44: #{_residual_block_forward.4} parent=39 // pred_fallthru
        _
      // Predicated region
      $region45: #{_residual_block_forward.4} parent=39 // pred_check
        %p4392 = pneg %p128
      $region46: #{_residual_block_forward.4} parent=39 // pred_check_branch
        %4394 = sbr.rel (%p4392) target = $region48
      $region47: #{_residual_block_forward.4} parent=39 // pred_region
        %p4395 = scmp.lt.s32.totalorder %s21, 1
        %s4396 = scalar_select %p4395, %s21, 1
        %p4397 = scmp.lt.s32.totalorder %s22, 0
        %s4398 = scalar_select %p4397, %s22, 0
        %s4399 = sadd.s32 %s4398, %s4396
        %s4400 = smul.addr %s4399, 2
        %s4401 = scalar_lea.vmem %s3, %s4400
      $region48: #{_residual_block_forward.4} parent=39 // pred_fallthru
        _
    $region40: #{_residual_block_forward.4} parent=5 // pred_fallthru
      _
  $region6: #{_residual_block_forward.4} parent=0 // loop_footer
    %s14 = sadd.s32 1, %s10
  $region7: #{_residual_block_forward.4} parent=0 // loop_footer_branch
    %9 = sbr.rel target = $region3
  $region8: #{_residual_block_forward.4} parent=0 // loop_exit
    _

</llo_original>
